<compile_context>
chip_gen: v5e
topology: v5e:2x2
jax: 0.10.0
libtpu: 0.0.40
codegen_flags: <defaults>
</compile_context>

<pallas_src>
import jax
import jax.numpy as jnp
from jax.experimental import pallas as pl
from jax.experimental.pallas import tpu as pltpu


# ----------------------------------------------------------------------------
# Kernel: full MRAE forward (all bands batched into the row dimension)
# ----------------------------------------------------------------------------
def mrae_kernel(
    x_ref, eps_ref,
    enc_wih_f_ref, enc_whh_f_ref, enc_bih_f_ref, enc_bhh_f_ref,
    enc_wih_b_ref, enc_whh_b_ref, enc_bih_b_ref, enc_bhh_b_ref,
    lin_w_ref, lin_b_ref,
    dec_whh_ref, dec_bih_ref, dec_bhh_ref,
    out_w_ref, out_b_ref,
    mix_w_ref, mix_b_ref,
    blk_out_ref, hid_ref, ic_ref, kl_ref, mix_ref,
):
    x = x_ref[...]                      # (T, M, I),  M = NB*B, row = nb*B + b
    T, M, I = x.shape
    H = enc_whh_f_ref.shape[0]
    D = dec_whh_ref.shape[0]
    NB = mix_w_ref.shape[0]
    B = M // NB

    # ---- loop-invariant parameter prep (hoisted out of the T loops) --------
    wih_f = enc_wih_f_ref[...]          # (I, 3H)
    whh_f = enc_whh_f_ref[...]          # (H, 3H)
    wih_b = enc_wih_b_ref[...]
    whh_b = enc_whh_b_ref[...]

    bih_f = enc_bih_f_ref[...]
    bhh_f = enc_bhh_f_ref[...]
    bih_b = enc_bih_b_ref[...]
    bhh_b = enc_bhh_b_ref[...]
    # r,z gates only ever see b_ih + b_hh summed; n gate keeps them split.
    b_rz_f = bih_f[:, :2 * H] + bhh_f[:, :2 * H]
    bih_n_f = bih_f[:, 2 * H:]
    bhh_n_f = bhh_f[:, 2 * H:]
    b_rz_b = bih_b[:, :2 * H] + bhh_b[:, :2 * H]
    bih_n_b = bih_b[:, 2 * H:]
    bhh_n_b = bhh_b[:, 2 * H:]

    def enc_step(x_t, h, wih, whh, b_rz, bih_n, bhh_n):
        gx = jnp.dot(x_t, wih, preferred_element_type=jnp.float32)   # (M, 3H)
        gh = jnp.dot(h, whh, preferred_element_type=jnp.float32)     # (M, 3H)
        rz = jax.nn.sigmoid(gx[:, :2 * H] + gh[:, :2 * H] + b_rz)
        r = rz[:, :H]
        z = rz[:, H:]
        n = jnp.tanh(gx[:, 2 * H:] + bih_n + r * (gh[:, 2 * H:] + bhh_n))
        return (1.0 - z) * n + z * h

    # ---- bidirectional GRU encoder (static unroll over short seq_len) ------
    # TODO(synk): for large T convert to lax.fori_loop with a small unroll.
    h_f = jnp.zeros((M, H), jnp.float32)
    for t in range(T):
        h_f = enc_step(x[t], h_f, wih_f, whh_f, b_rz_f, bih_n_f, bhh_n_f)

    h_b = jnp.zeros((M, H), jnp.float32)
    for t in range(T - 1, -1, -1):
        h_b = enc_step(x[t], h_b, wih_b, whh_b, b_rz_b, bih_n_b, bhh_n_b)

    # rnn_n.permute(1,0,2).reshape(B,-1) == concat([h_fwd, h_bwd], -1).
    # Avoid the lane concat by splitting the Linear weight rows instead.
    lin_w = lin_w_ref[...]                                   # (2H, 2D)
    param_out = (jnp.dot(h_f, lin_w[:H, :], preferred_element_type=jnp.float32)
                 + jnp.dot(h_b, lin_w[H:, :], preferred_element_type=jnp.float32)
                 + lin_b_ref[...])                           # (M, 2D)
    mean = param_out[:, :D]
    logvar = param_out[:, D:]

    # kl_div_normals(0, mean, 0, logvar) elementwise; mean(0,1) done in glue.
    inv_var = jnp.exp(-logvar)
    kl_ref[...] = 0.5 * (logvar + inv_var + (mean * mean) * inv_var + 1.0)

    # reparameterization trick
    dec_ic = jnp.exp(0.5 * logvar) * eps_ref[...] + mean     # (M, D)
    ic_ref[...] = dec_ic

    # ---- decoder GRU with all-zero input ------------------------------------
    dec_whh = dec_whh_ref[...]                               # (D, 3D)
    dec_bih = dec_bih_ref[...]                               # (1, 3D)
    dec_bhh = dec_bhh_ref[...]                               # (1, 3D)
    b_rz_d = dec_bih[:, :2 * D] + dec_bhh[:, :2 * D]         # hoisted
    bih_n_d = dec_bih[:, 2 * D:]
    bhh_n_d = dec_bhh[:, 2 * D:]

    h = dec_ic
    for t in range(T):
        gh = jnp.dot(h, dec_whh, preferred_element_type=jnp.float32)  # (M, 3D)
        rz = jax.nn.sigmoid(gh[:, :2 * D] + b_rz_d)
        r = rz[:, :D]
        z = rz[:, D:]
        n = jnp.tanh(bih_n_d + r * (gh[:, 2 * D:] + bhh_n_d))
        h = (1.0 - z) * n + z * h
        hid_ref[t, :, :] = h          # per-step store (no Python stack)

    hid_all = hid_ref[...]                                   # (T, M, D)

    # block_out linear: one big (T*M, D) @ (D, I) matmul
    blk = (jnp.dot(hid_all.reshape(T * M, D), out_w_ref[...],
                   preferred_element_type=jnp.float32)
           + out_b_ref[...])                                 # (T*M, I)
    blk_out_ref[...] = blk.reshape(T, M, I)

    # block_hidden_mix as an in-kernel band reduction.
    # mix_w_ref[nb] == torch-flatten columns d*NB + nb  (i.e. mix_w[nb::NB, :]).
    acc = jnp.zeros((T * B, I), jnp.float32)
    for nb in range(NB):
        hid_band = hid_all[:, nb * B:(nb + 1) * B, :].reshape(T * B, D)
        acc = acc + jnp.dot(hid_band, mix_w_ref[nb],
                            preferred_element_type=jnp.float32)
    mix_ref[...] = (acc + mix_b_ref[...]).reshape(T, B, I)


# ----------------------------------------------------------------------------
# Wrapper
# ----------------------------------------------------------------------------
def mrae_forward(x, params, eps):
    """x: (B, T, I, NB) float32, eps: (NB, B, D) float32."""
    B, T, I, NB = x.shape
    H = params["enc_whh_f"].shape[0]
    D = params["dec_whh"].shape[0]
    M = NB * B

    # Kernel layouts (band folded into the row/batch dimension, row = nb*B + b)
    x_k = jnp.transpose(x, (1, 3, 0, 2)).reshape(T, M, I)    # (T, M, I)
    eps_k = eps.reshape(M, D)                                # (M, D)
    # torch: block_hidden (B,T,D,NB).reshape -> flat col k = d*NB + nb, so the
    # per-band weight slice is the strided gather mix_w[nb::NB, :].
    mix_w_bands = jnp.transpose(params["mix_w"].reshape(D, NB, I),
                                (1, 0, 2))                   # (NB, D, I)

    vmem = pl.BlockSpec(memory_space=pltpu.MemorySpace.VMEM)
    n_inputs = 19

    out_shapes = (
        jax.ShapeDtypeStruct((T, M, I), jnp.float32),   # block_output
        jax.ShapeDtypeStruct((T, M, D), jnp.float32),   # decoder hidden
        jax.ShapeDtypeStruct((M, D), jnp.float32),      # decoder ic
        jax.ShapeDtypeStruct((M, D), jnp.float32),      # per-element kl
        jax.ShapeDtypeStruct((T, B, I), jnp.float32),   # block_hidden_mix out
    )

    blk_k, hid_k, ic_k, kl_k, mix_k = pl.pallas_call(
        mrae_kernel,
        out_shape=out_shapes,
        in_specs=[vmem] * n_inputs,
        out_specs=tuple([vmem] * len(out_shapes)),
    )(
        x_k, eps_k,
        params["enc_wih_f"], params["enc_whh_f"],
        params["enc_bih_f"], params["enc_bhh_f"],
        params["enc_wih_b"], params["enc_whh_b"],
        params["enc_bih_b"], params["enc_bhh_b"],
        params["lin_w"], params["lin_b"],
        params["dec_whh"], params["dec_bih"], params["dec_bhh"],
        params["out_w"], params["out_b"],
        mix_w_bands, params["mix_b"],
    )

    # back to the torch stacking convention (stack(..., dim=-1))
    block_output = jnp.transpose(blk_k.reshape(T, NB, B, I), (2, 0, 3, 1))  # (B,T,I,NB)
    block_hidden = jnp.transpose(hid_k.reshape(T, NB, B, D), (2, 0, 3, 1))  # (B,T,D,NB)
    decoder_ic = jnp.transpose(ic_k.reshape(NB, B, D), (1, 2, 0))           # (B,D,NB)
    kl_div = jnp.mean(kl_k.reshape(NB, B, D), axis=(1, 2))                  # (NB,)

    # TODO(synk): hidden_weight_l2_norm() body unknown; sum-of-squares used.
    dec_l2 = jnp.sum(params["dec_whh"] ** 2)
    decoder_l2 = jnp.broadcast_to(dec_l2, (NB,))             # params shared

    if NB > 1:
        output = jnp.transpose(mix_k, (1, 0, 2))             # (B, T, I)
    else:
        output = block_output[..., 0]

    return {
        "output": output,
        "block_output": block_output,
        "hidden": block_hidden,
        "decoder_ic": decoder_ic,
        "decoder_ic_kl_div": kl_div,
        "decoder_l2": decoder_l2,
    }


# ----------------------------------------------------------------------------
# Deterministic parameter init (synthetic; no checkpoint)
# ----------------------------------------------------------------------------
def init_params(key, I, H, D, NB):
    keys = jax.random.split(key, 20)

    def unif(k, shape, scale):
        return jax.random.uniform(k, shape, jnp.float32, -scale, scale)

    sH = 1.0 / jnp.sqrt(H)
    sD = 1.0 / jnp.sqrt(D)
    s2H = 1.0 / jnp.sqrt(2.0 * H)
    sND = 1.0 / jnp.sqrt(NB * D)

    return {
        # encoder GRU, forward direction (weights stored transposed: x @ W)
        "enc_wih_f": unif(keys[0], (I, 3 * H), sH),
        "enc_whh_f": unif(keys[1], (H, 3 * H), sH),
        "enc_bih_f": unif(keys[2], (1, 3 * H), sH),
        "enc_bhh_f": unif(keys[3], (1, 3 * H), sH),
        # encoder GRU, reverse direction
        "enc_wih_b": unif(keys[4], (I, 3 * H), sH),
        "enc_whh_b": unif(keys[5], (H, 3 * H), sH),
        "enc_bih_b": unif(keys[6], (1, 3 * H), sH),
        "enc_bhh_b": unif(keys[7], (1, 3 * H), sH),
        # encoder linear_out: 2H -> 2D  (used because 2H != 2D here)
        "lin_w": unif(keys[8], (2 * H, 2 * D), s2H),
        "lin_b": unif(keys[9], (1, 2 * D), s2H),
        # decoder GRU cell (input is always zero so W_ih is omitted)
        "dec_whh": unif(keys[10], (D, 3 * D), sD),
        "dec_bih": unif(keys[11], (1, 3 * D), sD),
        "dec_bhh": unif(keys[12], (1, 3 * D), sD),
        # block_out: D -> I
        "out_w": unif(keys[13], (D, I), sD),
        "out_b": unif(keys[14], (1, I), sD),
        # block_hidden_mix: NB*D -> I  (row k = d*NB + nb, torch flatten order)
        "mix_w": unif(keys[15], (NB * D, I), sND),
        "mix_b": unif(keys[16], (1, I), sND),
    }


if __name__ == "__main__":
    B, T, I, H, D, NB = 2, 8, 4, 8, 16, 2   # batch, seq, input, enc, dec, bands

    key = jax.random.PRNGKey(0)
    k_x, k_eps, k_p = jax.random.split(key, 3)

    x = jax.random.normal(k_x, (B, T, I, NB), jnp.float32)
    # deterministic stand-in for torch.randn in sample_gaussian (one per band)
    eps = jax.random.normal(k_eps, (NB, B, D), jnp.float32)
    params = init_params(k_p, I, H, D, NB)

    out = mrae_forward(x, params, eps)
    out = jax.tree_util.tree_map(jax.block_until_ready, out)

    assert out["output"].shape == (B, T, I)
    assert out["block_output"].shape == (B, T, I, NB)
    assert out["hidden"].shape == (B, T, D, NB)
    assert out["decoder_ic"].shape == (B, D, NB)
    assert out["decoder_ic_kl_div"].shape == (NB,)
    assert out["decoder_l2"].shape == (NB,)
    print("KERNEL_OK")
</pallas_src>

<mosaic_0001>
module attributes {stable_mosaic.version = 11 : i64} {
  func.func @mrae_kernel(%arg0: memref<8x4x4xf32, #tpu.memory_space<vmem>>, %arg1: memref<4x16xf32, #tpu.memory_space<vmem>>, %arg2: memref<4x24xf32, #tpu.memory_space<vmem>>, %arg3: memref<8x24xf32, #tpu.memory_space<vmem>>, %arg4: memref<1x24xf32, #tpu.memory_space<vmem>>, %arg5: memref<1x24xf32, #tpu.memory_space<vmem>>, %arg6: memref<4x24xf32, #tpu.memory_space<vmem>>, %arg7: memref<8x24xf32, #tpu.memory_space<vmem>>, %arg8: memref<1x24xf32, #tpu.memory_space<vmem>>, %arg9: memref<1x24xf32, #tpu.memory_space<vmem>>, %arg10: memref<16x32xf32, #tpu.memory_space<vmem>>, %arg11: memref<1x32xf32, #tpu.memory_space<vmem>>, %arg12: memref<16x48xf32, #tpu.memory_space<vmem>>, %arg13: memref<1x48xf32, #tpu.memory_space<vmem>>, %arg14: memref<1x48xf32, #tpu.memory_space<vmem>>, %arg15: memref<16x4xf32, #tpu.memory_space<vmem>>, %arg16: memref<1x4xf32, #tpu.memory_space<vmem>>, %arg17: memref<2x16x4xf32, #tpu.memory_space<vmem>>, %arg18: memref<1x4xf32, #tpu.memory_space<vmem>>, %arg19: memref<8x4x4xf32, #tpu.memory_space<vmem>>, %arg20: memref<8x4x16xf32, #tpu.memory_space<vmem>>, %arg21: memref<4x16xf32, #tpu.memory_space<vmem>>, %arg22: memref<4x16xf32, #tpu.memory_space<vmem>>, %arg23: memref<8x2x4xf32, #tpu.memory_space<vmem>>) attributes {dimension_semantics = [], scalar_prefetch = 0 : i64, scratch_operands = 0 : i64, tpu.core_type = #tpu.core_type<tc>} {
    %c0 = arith.constant 0 : index
    %c0_0 = arith.constant 0 : index
    %c0_1 = arith.constant 0 : index
    %0 = vector.load %arg0[%c0, %c0_0, %c0_1] : memref<8x4x4xf32, #tpu.memory_space<vmem>>, vector<8x4x4xf32>
    %c0_2 = arith.constant 0 : index
    %c0_3 = arith.constant 0 : index
    %1 = vector.load %arg2[%c0_2, %c0_3] : memref<4x24xf32, #tpu.memory_space<vmem>>, vector<4x24xf32>
    %c0_4 = arith.constant 0 : index
    %c0_5 = arith.constant 0 : index
    %2 = vector.load %arg3[%c0_4, %c0_5] : memref<8x24xf32, #tpu.memory_space<vmem>>, vector<8x24xf32>
    %c0_6 = arith.constant 0 : index
    %c0_7 = arith.constant 0 : index
    %3 = vector.load %arg6[%c0_6, %c0_7] : memref<4x24xf32, #tpu.memory_space<vmem>>, vector<4x24xf32>
    %c0_8 = arith.constant 0 : index
    %c0_9 = arith.constant 0 : index
    %4 = vector.load %arg7[%c0_8, %c0_9] : memref<8x24xf32, #tpu.memory_space<vmem>>, vector<8x24xf32>
    %c0_10 = arith.constant 0 : index
    %c0_11 = arith.constant 0 : index
    %5 = vector.load %arg4[%c0_10, %c0_11] : memref<1x24xf32, #tpu.memory_space<vmem>>, vector<1x24xf32>
    %c0_12 = arith.constant 0 : index
    %c0_13 = arith.constant 0 : index
    %6 = vector.load %arg5[%c0_12, %c0_13] : memref<1x24xf32, #tpu.memory_space<vmem>>, vector<1x24xf32>
    %c0_14 = arith.constant 0 : index
    %c0_15 = arith.constant 0 : index
    %7 = vector.load %arg8[%c0_14, %c0_15] : memref<1x24xf32, #tpu.memory_space<vmem>>, vector<1x24xf32>
    %c0_16 = arith.constant 0 : index
    %c0_17 = arith.constant 0 : index
    %8 = vector.load %arg9[%c0_16, %c0_17] : memref<1x24xf32, #tpu.memory_space<vmem>>, vector<1x24xf32>
    %9 = vector.extract_strided_slice %5 {offsets = [0, 0], sizes = [1, 16], strides = [1, 1]} : vector<1x24xf32> to vector<1x16xf32>
    %10 = vector.extract_strided_slice %6 {offsets = [0, 0], sizes = [1, 16], strides = [1, 1]} : vector<1x24xf32> to vector<1x16xf32>
    %11 = arith.addf %9, %10 : vector<1x16xf32>
    %12 = vector.extract_strided_slice %5 {offsets = [0, 16], sizes = [1, 8], strides = [1, 1]} : vector<1x24xf32> to vector<1x8xf32>
    %13 = vector.extract_strided_slice %6 {offsets = [0, 16], sizes = [1, 8], strides = [1, 1]} : vector<1x24xf32> to vector<1x8xf32>
    %14 = vector.extract_strided_slice %7 {offsets = [0, 0], sizes = [1, 16], strides = [1, 1]} : vector<1x24xf32> to vector<1x16xf32>
    %15 = vector.extract_strided_slice %8 {offsets = [0, 0], sizes = [1, 16], strides = [1, 1]} : vector<1x24xf32> to vector<1x16xf32>
    %16 = arith.addf %14, %15 : vector<1x16xf32>
    %17 = vector.extract_strided_slice %7 {offsets = [0, 16], sizes = [1, 8], strides = [1, 1]} : vector<1x24xf32> to vector<1x8xf32>
    %18 = vector.extract_strided_slice %8 {offsets = [0, 16], sizes = [1, 8], strides = [1, 1]} : vector<1x24xf32> to vector<1x8xf32>
    %cst = arith.constant 0.000000e+00 : f32
    %19 = vector.broadcast %cst : f32 to vector<4x8xf32>
    %20 = vector.extract_strided_slice %0 {offsets = [0, 0, 0], sizes = [1, 4, 4], strides = [1, 1, 1]} : vector<8x4x4xf32> to vector<1x4x4xf32>
    %21 = vector.shape_cast %20 : vector<1x4x4xf32> to vector<4x4xf32>
    %cst_18 = arith.constant dense<0.000000e+00> : vector<4x24xf32>
    %22 = tpu.matmul %21, %1, %cst_18 {dimension_numbers = #tpu.dot_dimension_numbers<[1], [0], [0], [1], [0, 0, 1, 1], [], []>} : vector<4x4xf32>, vector<4x24xf32>, vector<4x24xf32> -> vector<4x24xf32>
    %cst_19 = arith.constant dense<0.000000e+00> : vector<4x24xf32>
    %23 = tpu.matmul %19, %2, %cst_19 {dimension_numbers = #tpu.dot_dimension_numbers<[1], [0], [0], [1], [0, 0, 1, 1], [], []>} : vector<4x8xf32>, vector<8x24xf32>, vector<4x24xf32> -> vector<4x24xf32>
    %24 = vector.extract_strided_slice %22 {offsets = [0, 0], sizes = [4, 16], strides = [1, 1]} : vector<4x24xf32> to vector<4x16xf32>
    %25 = vector.extract_strided_slice %23 {offsets = [0, 0], sizes = [4, 16], strides = [1, 1]} : vector<4x24xf32> to vector<4x16xf32>
    %26 = arith.addf %24, %25 : vector<4x16xf32>
    %27 = vector.broadcast %11 : vector<1x16xf32> to vector<4x16xf32>
    %28 = arith.addf %26, %27 : vector<4x16xf32>
    %29 = arith.negf %28 : vector<4x16xf32>
    %30 = math.exp %29 : vector<4x16xf32>
    %cst_20 = arith.constant 1.000000e+00 : f32
    %31 = vector.broadcast %cst_20 : f32 to vector<4x16xf32>
    %32 = arith.addf %31, %30 : vector<4x16xf32>
    %33 = arith.divf %31, %32 : vector<4x16xf32>
    %34 = vector.extract_strided_slice %33 {offsets = [0, 0], sizes = [4, 8], strides = [1, 1]} : vector<4x16xf32> to vector<4x8xf32>
    %35 = vector.extract_strided_slice %33 {offsets = [0, 8], sizes = [4, 8], strides = [1, 1]} : vector<4x16xf32> to vector<4x8xf32>
    %36 = vector.extract_strided_slice %22 {offsets = [0, 16], sizes = [4, 8], strides = [1, 1]} : vector<4x24xf32> to vector<4x8xf32>
    %37 = vector.broadcast %12 : vector<1x8xf32> to vector<4x8xf32>
    %38 = arith.addf %36, %37 : vector<4x8xf32>
    %39 = vector.extract_strided_slice %23 {offsets = [0, 16], sizes = [4, 8], strides = [1, 1]} : vector<4x24xf32> to vector<4x8xf32>
    %40 = vector.broadcast %13 : vector<1x8xf32> to vector<4x8xf32>
    %41 = arith.addf %39, %40 : vector<4x8xf32>
    %42 = arith.mulf %34, %41 : vector<4x8xf32>
    %43 = arith.addf %38, %42 : vector<4x8xf32>
    %44 = math.tanh %43 : vector<4x8xf32>
    %cst_21 = arith.constant 1.000000e+00 : f32
    %45 = vector.broadcast %cst_21 : f32 to vector<4x8xf32>
    %46 = arith.subf %45, %35 : vector<4x8xf32>
    %47 = arith.mulf %46, %44 : vector<4x8xf32>
    %48 = arith.mulf %35, %19 : vector<4x8xf32>
    %49 = arith.addf %47, %48 : vector<4x8xf32>
    %50 = vector.extract_strided_slice %0 {offsets = [1, 0, 0], sizes = [1, 4, 4], strides = [1, 1, 1]} : vector<8x4x4xf32> to vector<1x4x4xf32>
    %51 = vector.shape_cast %50 : vector<1x4x4xf32> to vector<4x4xf32>
    %cst_22 = arith.constant dense<0.000000e+00> : vector<4x24xf32>
    %52 = tpu.matmul %51, %1, %cst_22 {dimension_numbers = #tpu.dot_dimension_numbers<[1], [0], [0], [1], [0, 0, 1, 1], [], []>} : vector<4x4xf32>, vector<4x24xf32>, vector<4x24xf32> -> vector<4x24xf32>
    %cst_23 = arith.constant dense<0.000000e+00> : vector<4x24xf32>
    %53 = tpu.matmul %49, %2, %cst_23 {dimension_numbers = #tpu.dot_dimension_numbers<[1], [0], [0], [1], [0, 0, 1, 1], [], []>} : vector<4x8xf32>, vector<8x24xf32>, vector<4x24xf32> -> vector<4x24xf32>
    %54 = vector.extract_strided_slice %52 {offsets = [0, 0], sizes = [4, 16], strides = [1, 1]} : vector<4x24xf32> to vector<4x16xf32>
    %55 = vector.extract_strided_slice %53 {offsets = [0, 0], sizes = [4, 16], strides = [1, 1]} : vector<4x24xf32> to vector<4x16xf32>
    %56 = arith.addf %54, %55 : vector<4x16xf32>
    %57 = vector.broadcast %11 : vector<1x16xf32> to vector<4x16xf32>
    %58 = arith.addf %56, %57 : vector<4x16xf32>
    %59 = arith.negf %58 : vector<4x16xf32>
    %60 = math.exp %59 : vector<4x16xf32>
    %cst_24 = arith.constant 1.000000e+00 : f32
    %61 = vector.broadcast %cst_24 : f32 to vector<4x16xf32>
    %62 = arith.addf %61, %60 : vector<4x16xf32>
    %63 = arith.divf %61, %62 : vector<4x16xf32>
    %64 = vector.extract_strided_slice %63 {offsets = [0, 0], sizes = [4, 8], strides = [1, 1]} : vector<4x16xf32> to vector<4x8xf32>
    %65 = vector.extract_strided_slice %63 {offsets = [0, 8], sizes = [4, 8], strides = [1, 1]} : vector<4x16xf32> to vector<4x8xf32>
    %66 = vector.extract_strided_slice %52 {offsets = [0, 16], sizes = [4, 8], strides = [1, 1]} : vector<4x24xf32> to vector<4x8xf32>
    %67 = vector.broadcast %12 : vector<1x8xf32> to vector<4x8xf32>
    %68 = arith.addf %66, %67 : vector<4x8xf32>
    %69 = vector.extract_strided_slice %53 {offsets = [0, 16], sizes = [4, 8], strides = [1, 1]} : vector<4x24xf32> to vector<4x8xf32>
    %70 = vector.broadcast %13 : vector<1x8xf32> to vector<4x8xf32>
    %71 = arith.addf %69, %70 : vector<4x8xf32>
    %72 = arith.mulf %64, %71 : vector<4x8xf32>
    %73 = arith.addf %68, %72 : vector<4x8xf32>
    %74 = math.tanh %73 : vector<4x8xf32>
    %cst_25 = arith.constant 1.000000e+00 : f32
    %75 = vector.broadcast %cst_25 : f32 to vector<4x8xf32>
    %76 = arith.subf %75, %65 : vector<4x8xf32>
    %77 = arith.mulf %76, %74 : vector<4x8xf32>
    %78 = arith.mulf %65, %49 : vector<4x8xf32>
    %79 = arith.addf %77, %78 : vector<4x8xf32>
    %80 = vector.extract_strided_slice %0 {offsets = [2, 0, 0], sizes = [1, 4, 4], strides = [1, 1, 1]} : vector<8x4x4xf32> to vector<1x4x4xf32>
    %81 = vector.shape_cast %80 : vector<1x4x4xf32> to vector<4x4xf32>
    %cst_26 = arith.constant dense<0.000000e+00> : vector<4x24xf32>
    %82 = tpu.matmul %81, %1, %cst_26 {dimension_numbers = #tpu.dot_dimension_numbers<[1], [0], [0], [1], [0, 0, 1, 1], [], []>} : vector<4x4xf32>, vector<4x24xf32>, vector<4x24xf32> -> vector<4x24xf32>
    %cst_27 = arith.constant dense<0.000000e+00> : vector<4x24xf32>
    %83 = tpu.matmul %79, %2, %cst_27 {dimension_numbers = #tpu.dot_dimension_numbers<[1], [0], [0], [1], [0, 0, 1, 1], [], []>} : vector<4x8xf32>, vector<8x24xf32>, vector<4x24xf32> -> vector<4x24xf32>
    %84 = vector.extract_strided_slice %82 {offsets = [0, 0], sizes = [4, 16], strides = [1, 1]} : vector<4x24xf32> to vector<4x16xf32>
    %85 = vector.extract_strided_slice %83 {offsets = [0, 0], sizes = [4, 16], strides = [1, 1]} : vector<4x24xf32> to vector<4x16xf32>
    %86 = arith.addf %84, %85 : vector<4x16xf32>
    %87 = vector.broadcast %11 : vector<1x16xf32> to vector<4x16xf32>
    %88 = arith.addf %86, %87 : vector<4x16xf32>
    %89 = arith.negf %88 : vector<4x16xf32>
    %90 = math.exp %89 : vector<4x16xf32>
    %cst_28 = arith.constant 1.000000e+00 : f32
    %91 = vector.broadcast %cst_28 : f32 to vector<4x16xf32>
    %92 = arith.addf %91, %90 : vector<4x16xf32>
    %93 = arith.divf %91, %92 : vector<4x16xf32>
    %94 = vector.extract_strided_slice %93 {offsets = [0, 0], sizes = [4, 8], strides = [1, 1]} : vector<4x16xf32> to vector<4x8xf32>
    %95 = vector.extract_strided_slice %93 {offsets = [0, 8], sizes = [4, 8], strides = [1, 1]} : vector<4x16xf32> to vector<4x8xf32>
    %96 = vector.extract_strided_slice %82 {offsets = [0, 16], sizes = [4, 8], strides = [1, 1]} : vector<4x24xf32> to vector<4x8xf32>
    %97 = vector.broadcast %12 : vector<1x8xf32> to vector<4x8xf32>
    %98 = arith.addf %96, %97 : vector<4x8xf32>
    %99 = vector.extract_strided_slice %83 {offsets = [0, 16], sizes = [4, 8], strides = [1, 1]} : vector<4x24xf32> to vector<4x8xf32>
    %100 = vector.broadcast %13 : vector<1x8xf32> to vector<4x8xf32>
    %101 = arith.addf %99, %100 : vector<4x8xf32>
    %102 = arith.mulf %94, %101 : vector<4x8xf32>
    %103 = arith.addf %98, %102 : vector<4x8xf32>
    %104 = math.tanh %103 : vector<4x8xf32>
    %cst_29 = arith.constant 1.000000e+00 : f32
    %105 = vector.broadcast %cst_29 : f32 to vector<4x8xf32>
    %106 = arith.subf %105, %95 : vector<4x8xf32>
    %107 = arith.mulf %106, %104 : vector<4x8xf32>
    %108 = arith.mulf %95, %79 : vector<4x8xf32>
    %109 = arith.addf %107, %108 : vector<4x8xf32>
    %110 = vector.extract_strided_slice %0 {offsets = [3, 0, 0], sizes = [1, 4, 4], strides = [1, 1, 1]} : vector<8x4x4xf32> to vector<1x4x4xf32>
    %111 = vector.shape_cast %110 : vector<1x4x4xf32> to vector<4x4xf32>
    %cst_30 = arith.constant dense<0.000000e+00> : vector<4x24xf32>
    %112 = tpu.matmul %111, %1, %cst_30 {dimension_numbers = #tpu.dot_dimension_numbers<[1], [0], [0], [1], [0, 0, 1, 1], [], []>} : vector<4x4xf32>, vector<4x24xf32>, vector<4x24xf32> -> vector<4x24xf32>
    %cst_31 = arith.constant dense<0.000000e+00> : vector<4x24xf32>
    %113 = tpu.matmul %109, %2, %cst_31 {dimension_numbers = #tpu.dot_dimension_numbers<[1], [0], [0], [1], [0, 0, 1, 1], [], []>} : vector<4x8xf32>, vector<8x24xf32>, vector<4x24xf32> -> vector<4x24xf32>
    %114 = vector.extract_strided_slice %112 {offsets = [0, 0], sizes = [4, 16], strides = [1, 1]} : vector<4x24xf32> to vector<4x16xf32>
    %115 = vector.extract_strided_slice %113 {offsets = [0, 0], sizes = [4, 16], strides = [1, 1]} : vector<4x24xf32> to vector<4x16xf32>
    %116 = arith.addf %114, %115 : vector<4x16xf32>
    %117 = vector.broadcast %11 : vector<1x16xf32> to vector<4x16xf32>
    %118 = arith.addf %116, %117 : vector<4x16xf32>
    %119 = arith.negf %118 : vector<4x16xf32>
    %120 = math.exp %119 : vector<4x16xf32>
    %cst_32 = arith.constant 1.000000e+00 : f32
    %121 = vector.broadcast %cst_32 : f32 to vector<4x16xf32>
    %122 = arith.addf %121, %120 : vector<4x16xf32>
    %123 = arith.divf %121, %122 : vector<4x16xf32>
    %124 = vector.extract_strided_slice %123 {offsets = [0, 0], sizes = [4, 8], strides = [1, 1]} : vector<4x16xf32> to vector<4x8xf32>
    %125 = vector.extract_strided_slice %123 {offsets = [0, 8], sizes = [4, 8], strides = [1, 1]} : vector<4x16xf32> to vector<4x8xf32>
    %126 = vector.extract_strided_slice %112 {offsets = [0, 16], sizes = [4, 8], strides = [1, 1]} : vector<4x24xf32> to vector<4x8xf32>
    %127 = vector.broadcast %12 : vector<1x8xf32> to vector<4x8xf32>
    %128 = arith.addf %126, %127 : vector<4x8xf32>
    %129 = vector.extract_strided_slice %113 {offsets = [0, 16], sizes = [4, 8], strides = [1, 1]} : vector<4x24xf32> to vector<4x8xf32>
    %130 = vector.broadcast %13 : vector<1x8xf32> to vector<4x8xf32>
    %131 = arith.addf %129, %130 : vector<4x8xf32>
    %132 = arith.mulf %124, %131 : vector<4x8xf32>
    %133 = arith.addf %128, %132 : vector<4x8xf32>
    %134 = math.tanh %133 : vector<4x8xf32>
    %cst_33 = arith.constant 1.000000e+00 : f32
    %135 = vector.broadcast %cst_33 : f32 to vector<4x8xf32>
    %136 = arith.subf %135, %125 : vector<4x8xf32>
    %137 = arith.mulf %136, %134 : vector<4x8xf32>
    %138 = arith.mulf %125, %109 : vector<4x8xf32>
    %139 = arith.addf %137, %138 : vector<4x8xf32>
    %140 = vector.extract_strided_slice %0 {offsets = [4, 0, 0], sizes = [1, 4, 4], strides = [1, 1, 1]} : vector<8x4x4xf32> to vector<1x4x4xf32>
    %141 = vector.shape_cast %140 : vector<1x4x4xf32> to vector<4x4xf32>
    %cst_34 = arith.constant dense<0.000000e+00> : vector<4x24xf32>
    %142 = tpu.matmul %141, %1, %cst_34 {dimension_numbers = #tpu.dot_dimension_numbers<[1], [0], [0], [1], [0, 0, 1, 1], [], []>} : vector<4x4xf32>, vector<4x24xf32>, vector<4x24xf32> -> vector<4x24xf32>
    %cst_35 = arith.constant dense<0.000000e+00> : vector<4x24xf32>
    %143 = tpu.matmul %139, %2, %cst_35 {dimension_numbers = #tpu.dot_dimension_numbers<[1], [0], [0], [1], [0, 0, 1, 1], [], []>} : vector<4x8xf32>, vector<8x24xf32>, vector<4x24xf32> -> vector<4x24xf32>
    %144 = vector.extract_strided_slice %142 {offsets = [0, 0], sizes = [4, 16], strides = [1, 1]} : vector<4x24xf32> to vector<4x16xf32>
    %145 = vector.extract_strided_slice %143 {offsets = [0, 0], sizes = [4, 16], strides = [1, 1]} : vector<4x24xf32> to vector<4x16xf32>
    %146 = arith.addf %144, %145 : vector<4x16xf32>
    %147 = vector.broadcast %11 : vector<1x16xf32> to vector<4x16xf32>
    %148 = arith.addf %146, %147 : vector<4x16xf32>
    %149 = arith.negf %148 : vector<4x16xf32>
    %150 = math.exp %149 : vector<4x16xf32>
    %cst_36 = arith.constant 1.000000e+00 : f32
    %151 = vector.broadcast %cst_36 : f32 to vector<4x16xf32>
    %152 = arith.addf %151, %150 : vector<4x16xf32>
    %153 = arith.divf %151, %152 : vector<4x16xf32>
    %154 = vector.extract_strided_slice %153 {offsets = [0, 0], sizes = [4, 8], strides = [1, 1]} : vector<4x16xf32> to vector<4x8xf32>
    %155 = vector.extract_strided_slice %153 {offsets = [0, 8], sizes = [4, 8], strides = [1, 1]} : vector<4x16xf32> to vector<4x8xf32>
    %156 = vector.extract_strided_slice %142 {offsets = [0, 16], sizes = [4, 8], strides = [1, 1]} : vector<4x24xf32> to vector<4x8xf32>
    %157 = vector.broadcast %12 : vector<1x8xf32> to vector<4x8xf32>
    %158 = arith.addf %156, %157 : vector<4x8xf32>
    %159 = vector.extract_strided_slice %143 {offsets = [0, 16], sizes = [4, 8], strides = [1, 1]} : vector<4x24xf32> to vector<4x8xf32>
    %160 = vector.broadcast %13 : vector<1x8xf32> to vector<4x8xf32>
    %161 = arith.addf %159, %160 : vector<4x8xf32>
    %162 = arith.mulf %154, %161 : vector<4x8xf32>
    %163 = arith.addf %158, %162 : vector<4x8xf32>
    %164 = math.tanh %163 : vector<4x8xf32>
    %cst_37 = arith.constant 1.000000e+00 : f32
    %165 = vector.broadcast %cst_37 : f32 to vector<4x8xf32>
    %166 = arith.subf %165, %155 : vector<4x8xf32>
    %167 = arith.mulf %166, %164 : vector<4x8xf32>
    %168 = arith.mulf %155, %139 : vector<4x8xf32>
    %169 = arith.addf %167, %168 : vector<4x8xf32>
    %170 = vector.extract_strided_slice %0 {offsets = [5, 0, 0], sizes = [1, 4, 4], strides = [1, 1, 1]} : vector<8x4x4xf32> to vector<1x4x4xf32>
    %171 = vector.shape_cast %170 : vector<1x4x4xf32> to vector<4x4xf32>
    %cst_38 = arith.constant dense<0.000000e+00> : vector<4x24xf32>
    %172 = tpu.matmul %171, %1, %cst_38 {dimension_numbers = #tpu.dot_dimension_numbers<[1], [0], [0], [1], [0, 0, 1, 1], [], []>} : vector<4x4xf32>, vector<4x24xf32>, vector<4x24xf32> -> vector<4x24xf32>
    %cst_39 = arith.constant dense<0.000000e+00> : vector<4x24xf32>
    %173 = tpu.matmul %169, %2, %cst_39 {dimension_numbers = #tpu.dot_dimension_numbers<[1], [0], [0], [1], [0, 0, 1, 1], [], []>} : vector<4x8xf32>, vector<8x24xf32>, vector<4x24xf32> -> vector<4x24xf32>
    %174 = vector.extract_strided_slice %172 {offsets = [0, 0], sizes = [4, 16], strides = [1, 1]} : vector<4x24xf32> to vector<4x16xf32>
    %175 = vector.extract_strided_slice %173 {offsets = [0, 0], sizes = [4, 16], strides = [1, 1]} : vector<4x24xf32> to vector<4x16xf32>
    %176 = arith.addf %174, %175 : vector<4x16xf32>
    %177 = vector.broadcast %11 : vector<1x16xf32> to vector<4x16xf32>
    %178 = arith.addf %176, %177 : vector<4x16xf32>
    %179 = arith.negf %178 : vector<4x16xf32>
    %180 = math.exp %179 : vector<4x16xf32>
    %cst_40 = arith.constant 1.000000e+00 : f32
    %181 = vector.broadcast %cst_40 : f32 to vector<4x16xf32>
    %182 = arith.addf %181, %180 : vector<4x16xf32>
    %183 = arith.divf %181, %182 : vector<4x16xf32>
    %184 = vector.extract_strided_slice %183 {offsets = [0, 0], sizes = [4, 8], strides = [1, 1]} : vector<4x16xf32> to vector<4x8xf32>
    %185 = vector.extract_strided_slice %183 {offsets = [0, 8], sizes = [4, 8], strides = [1, 1]} : vector<4x16xf32> to vector<4x8xf32>
    %186 = vector.extract_strided_slice %172 {offsets = [0, 16], sizes = [4, 8], strides = [1, 1]} : vector<4x24xf32> to vector<4x8xf32>
    %187 = vector.broadcast %12 : vector<1x8xf32> to vector<4x8xf32>
    %188 = arith.addf %186, %187 : vector<4x8xf32>
    %189 = vector.extract_strided_slice %173 {offsets = [0, 16], sizes = [4, 8], strides = [1, 1]} : vector<4x24xf32> to vector<4x8xf32>
    %190 = vector.broadcast %13 : vector<1x8xf32> to vector<4x8xf32>
    %191 = arith.addf %189, %190 : vector<4x8xf32>
    %192 = arith.mulf %184, %191 : vector<4x8xf32>
    %193 = arith.addf %188, %192 : vector<4x8xf32>
    %194 = math.tanh %193 : vector<4x8xf32>
    %cst_41 = arith.constant 1.000000e+00 : f32
    %195 = vector.broadcast %cst_41 : f32 to vector<4x8xf32>
    %196 = arith.subf %195, %185 : vector<4x8xf32>
    %197 = arith.mulf %196, %194 : vector<4x8xf32>
    %198 = arith.mulf %185, %169 : vector<4x8xf32>
    %199 = arith.addf %197, %198 : vector<4x8xf32>
    %200 = vector.extract_strided_slice %0 {offsets = [6, 0, 0], sizes = [1, 4, 4], strides = [1, 1, 1]} : vector<8x4x4xf32> to vector<1x4x4xf32>
    %201 = vector.shape_cast %200 : vector<1x4x4xf32> to vector<4x4xf32>
    %cst_42 = arith.constant dense<0.000000e+00> : vector<4x24xf32>
    %202 = tpu.matmul %201, %1, %cst_42 {dimension_numbers = #tpu.dot_dimension_numbers<[1], [0], [0], [1], [0, 0, 1, 1], [], []>} : vector<4x4xf32>, vector<4x24xf32>, vector<4x24xf32> -> vector<4x24xf32>
    %cst_43 = arith.constant dense<0.000000e+00> : vector<4x24xf32>
    %203 = tpu.matmul %199, %2, %cst_43 {dimension_numbers = #tpu.dot_dimension_numbers<[1], [0], [0], [1], [0, 0, 1, 1], [], []>} : vector<4x8xf32>, vector<8x24xf32>, vector<4x24xf32> -> vector<4x24xf32>
    %204 = vector.extract_strided_slice %202 {offsets = [0, 0], sizes = [4, 16], strides = [1, 1]} : vector<4x24xf32> to vector<4x16xf32>
    %205 = vector.extract_strided_slice %203 {offsets = [0, 0], sizes = [4, 16], strides = [1, 1]} : vector<4x24xf32> to vector<4x16xf32>
    %206 = arith.addf %204, %205 : vector<4x16xf32>
    %207 = vector.broadcast %11 : vector<1x16xf32> to vector<4x16xf32>
    %208 = arith.addf %206, %207 : vector<4x16xf32>
    %209 = arith.negf %208 : vector<4x16xf32>
    %210 = math.exp %209 : vector<4x16xf32>
    %cst_44 = arith.constant 1.000000e+00 : f32
    %211 = vector.broadcast %cst_44 : f32 to vector<4x16xf32>
    %212 = arith.addf %211, %210 : vector<4x16xf32>
    %213 = arith.divf %211, %212 : vector<4x16xf32>
    %214 = vector.extract_strided_slice %213 {offsets = [0, 0], sizes = [4, 8], strides = [1, 1]} : vector<4x16xf32> to vector<4x8xf32>
    %215 = vector.extract_strided_slice %213 {offsets = [0, 8], sizes = [4, 8], strides = [1, 1]} : vector<4x16xf32> to vector<4x8xf32>
    %216 = vector.extract_strided_slice %202 {offsets = [0, 16], sizes = [4, 8], strides = [1, 1]} : vector<4x24xf32> to vector<4x8xf32>
    %217 = vector.broadcast %12 : vector<1x8xf32> to vector<4x8xf32>
    %218 = arith.addf %216, %217 : vector<4x8xf32>
    %219 = vector.extract_strided_slice %203 {offsets = [0, 16], sizes = [4, 8], strides = [1, 1]} : vector<4x24xf32> to vector<4x8xf32>
    %220 = vector.broadcast %13 : vector<1x8xf32> to vector<4x8xf32>
    %221 = arith.addf %219, %220 : vector<4x8xf32>
    %222 = arith.mulf %214, %221 : vector<4x8xf32>
    %223 = arith.addf %218, %222 : vector<4x8xf32>
    %224 = math.tanh %223 : vector<4x8xf32>
    %cst_45 = arith.constant 1.000000e+00 : f32
    %225 = vector.broadcast %cst_45 : f32 to vector<4x8xf32>
    %226 = arith.subf %225, %215 : vector<4x8xf32>
    %227 = arith.mulf %226, %224 : vector<4x8xf32>
    %228 = arith.mulf %215, %199 : vector<4x8xf32>
    %229 = arith.addf %227, %228 : vector<4x8xf32>
    %230 = vector.extract_strided_slice %0 {offsets = [7, 0, 0], sizes = [1, 4, 4], strides = [1, 1, 1]} : vector<8x4x4xf32> to vector<1x4x4xf32>
    %231 = vector.shape_cast %230 : vector<1x4x4xf32> to vector<4x4xf32>
    %cst_46 = arith.constant dense<0.000000e+00> : vector<4x24xf32>
    %232 = tpu.matmul %231, %1, %cst_46 {dimension_numbers = #tpu.dot_dimension_numbers<[1], [0], [0], [1], [0, 0, 1, 1], [], []>} : vector<4x4xf32>, vector<4x24xf32>, vector<4x24xf32> -> vector<4x24xf32>
    %cst_47 = arith.constant dense<0.000000e+00> : vector<4x24xf32>
    %233 = tpu.matmul %229, %2, %cst_47 {dimension_numbers = #tpu.dot_dimension_numbers<[1], [0], [0], [1], [0, 0, 1, 1], [], []>} : vector<4x8xf32>, vector<8x24xf32>, vector<4x24xf32> -> vector<4x24xf32>
    %234 = vector.extract_strided_slice %232 {offsets = [0, 0], sizes = [4, 16], strides = [1, 1]} : vector<4x24xf32> to vector<4x16xf32>
    %235 = vector.extract_strided_slice %233 {offsets = [0, 0], sizes = [4, 16], strides = [1, 1]} : vector<4x24xf32> to vector<4x16xf32>
    %236 = arith.addf %234, %235 : vector<4x16xf32>
    %237 = vector.broadcast %11 : vector<1x16xf32> to vector<4x16xf32>
    %238 = arith.addf %236, %237 : vector<4x16xf32>
    %239 = arith.negf %238 : vector<4x16xf32>
    %240 = math.exp %239 : vector<4x16xf32>
    %cst_48 = arith.constant 1.000000e+00 : f32
    %241 = vector.broadcast %cst_48 : f32 to vector<4x16xf32>
    %242 = arith.addf %241, %240 : vector<4x16xf32>
    %243 = arith.divf %241, %242 : vector<4x16xf32>
    %244 = vector.extract_strided_slice %243 {offsets = [0, 0], sizes = [4, 8], strides = [1, 1]} : vector<4x16xf32> to vector<4x8xf32>
    %245 = vector.extract_strided_slice %243 {offsets = [0, 8], sizes = [4, 8], strides = [1, 1]} : vector<4x16xf32> to vector<4x8xf32>
    %246 = vector.extract_strided_slice %232 {offsets = [0, 16], sizes = [4, 8], strides = [1, 1]} : vector<4x24xf32> to vector<4x8xf32>
    %247 = vector.broadcast %12 : vector<1x8xf32> to vector<4x8xf32>
    %248 = arith.addf %246, %247 : vector<4x8xf32>
    %249 = vector.extract_strided_slice %233 {offsets = [0, 16], sizes = [4, 8], strides = [1, 1]} : vector<4x24xf32> to vector<4x8xf32>
    %250 = vector.broadcast %13 : vector<1x8xf32> to vector<4x8xf32>
    %251 = arith.addf %249, %250 : vector<4x8xf32>
    %252 = arith.mulf %244, %251 : vector<4x8xf32>
    %253 = arith.addf %248, %252 : vector<4x8xf32>
    %254 = math.tanh %253 : vector<4x8xf32>
    %cst_49 = arith.constant 1.000000e+00 : f32
    %255 = vector.broadcast %cst_49 : f32 to vector<4x8xf32>
    %256 = arith.subf %255, %245 : vector<4x8xf32>
    %257 = arith.mulf %256, %254 : vector<4x8xf32>
    %258 = arith.mulf %245, %229 : vector<4x8xf32>
    %259 = arith.addf %257, %258 : vector<4x8xf32>
    %cst_50 = arith.constant 0.000000e+00 : f32
    %260 = vector.broadcast %cst_50 : f32 to vector<4x8xf32>
    %261 = vector.extract_strided_slice %0 {offsets = [7, 0, 0], sizes = [1, 4, 4], strides = [1, 1, 1]} : vector<8x4x4xf32> to vector<1x4x4xf32>
    %262 = vector.shape_cast %261 : vector<1x4x4xf32> to vector<4x4xf32>
    %cst_51 = arith.constant dense<0.000000e+00> : vector<4x24xf32>
    %263 = tpu.matmul %262, %3, %cst_51 {dimension_numbers = #tpu.dot_dimension_numbers<[1], [0], [0], [1], [0, 0, 1, 1], [], []>} : vector<4x4xf32>, vector<4x24xf32>, vector<4x24xf32> -> vector<4x24xf32>
    %cst_52 = arith.constant dense<0.000000e+00> : vector<4x24xf32>
    %264 = tpu.matmul %260, %4, %cst_52 {dimension_numbers = #tpu.dot_dimension_numbers<[1], [0], [0], [1], [0, 0, 1, 1], [], []>} : vector<4x8xf32>, vector<8x24xf32>, vector<4x24xf32> -> vector<4x24xf32>
    %265 = vector.extract_strided_slice %263 {offsets = [0, 0], sizes = [4, 16], strides = [1, 1]} : vector<4x24xf32> to vector<4x16xf32>
    %266 = vector.extract_strided_slice %264 {offsets = [0, 0], sizes = [4, 16], strides = [1, 1]} : vector<4x24xf32> to vector<4x16xf32>
    %267 = arith.addf %265, %266 : vector<4x16xf32>
    %268 = vector.broadcast %16 : vector<1x16xf32> to vector<4x16xf32>
    %269 = arith.addf %267, %268 : vector<4x16xf32>
    %270 = arith.negf %269 : vector<4x16xf32>
    %271 = math.exp %270 : vector<4x16xf32>
    %cst_53 = arith.constant 1.000000e+00 : f32
    %272 = vector.broadcast %cst_53 : f32 to vector<4x16xf32>
    %273 = arith.addf %272, %271 : vector<4x16xf32>
    %274 = arith.divf %272, %273 : vector<4x16xf32>
    %275 = vector.extract_strided_slice %274 {offsets = [0, 0], sizes = [4, 8], strides = [1, 1]} : vector<4x16xf32> to vector<4x8xf32>
    %276 = vector.extract_strided_slice %274 {offsets = [0, 8], sizes = [4, 8], strides = [1, 1]} : vector<4x16xf32> to vector<4x8xf32>
    %277 = vector.extract_strided_slice %263 {offsets = [0, 16], sizes = [4, 8], strides = [1, 1]} : vector<4x24xf32> to vector<4x8xf32>
    %278 = vector.broadcast %17 : vector<1x8xf32> to vector<4x8xf32>
    %279 = arith.addf %277, %278 : vector<4x8xf32>
    %280 = vector.extract_strided_slice %264 {offsets = [0, 16], sizes = [4, 8], strides = [1, 1]} : vector<4x24xf32> to vector<4x8xf32>
    %281 = vector.broadcast %18 : vector<1x8xf32> to vector<4x8xf32>
    %282 = arith.addf %280, %281 : vector<4x8xf32>
    %283 = arith.mulf %275, %282 : vector<4x8xf32>
    %284 = arith.addf %279, %283 : vector<4x8xf32>
    %285 = math.tanh %284 : vector<4x8xf32>
    %cst_54 = arith.constant 1.000000e+00 : f32
    %286 = vector.broadcast %cst_54 : f32 to vector<4x8xf32>
    %287 = arith.subf %286, %276 : vector<4x8xf32>
    %288 = arith.mulf %287, %285 : vector<4x8xf32>
    %289 = arith.mulf %276, %260 : vector<4x8xf32>
    %290 = arith.addf %288, %289 : vector<4x8xf32>
    %291 = vector.extract_strided_slice %0 {offsets = [6, 0, 0], sizes = [1, 4, 4], strides = [1, 1, 1]} : vector<8x4x4xf32> to vector<1x4x4xf32>
    %292 = vector.shape_cast %291 : vector<1x4x4xf32> to vector<4x4xf32>
    %cst_55 = arith.constant dense<0.000000e+00> : vector<4x24xf32>
    %293 = tpu.matmul %292, %3, %cst_55 {dimension_numbers = #tpu.dot_dimension_numbers<[1], [0], [0], [1], [0, 0, 1, 1], [], []>} : vector<4x4xf32>, vector<4x24xf32>, vector<4x24xf32> -> vector<4x24xf32>
    %cst_56 = arith.constant dense<0.000000e+00> : vector<4x24xf32>
    %294 = tpu.matmul %290, %4, %cst_56 {dimension_numbers = #tpu.dot_dimension_numbers<[1], [0], [0], [1], [0, 0, 1, 1], [], []>} : vector<4x8xf32>, vector<8x24xf32>, vector<4x24xf32> -> vector<4x24xf32>
    %295 = vector.extract_strided_slice %293 {offsets = [0, 0], sizes = [4, 16], strides = [1, 1]} : vector<4x24xf32> to vector<4x16xf32>
    %296 = vector.extract_strided_slice %294 {offsets = [0, 0], sizes = [4, 16], strides = [1, 1]} : vector<4x24xf32> to vector<4x16xf32>
    %297 = arith.addf %295, %296 : vector<4x16xf32>
    %298 = vector.broadcast %16 : vector<1x16xf32> to vector<4x16xf32>
    %299 = arith.addf %297, %298 : vector<4x16xf32>
    %300 = arith.negf %299 : vector<4x16xf32>
    %301 = math.exp %300 : vector<4x16xf32>
    %cst_57 = arith.constant 1.000000e+00 : f32
    %302 = vector.broadcast %cst_57 : f32 to vector<4x16xf32>
    %303 = arith.addf %302, %301 : vector<4x16xf32>
    %304 = arith.divf %302, %303 : vector<4x16xf32>
    %305 = vector.extract_strided_slice %304 {offsets = [0, 0], sizes = [4, 8], strides = [1, 1]} : vector<4x16xf32> to vector<4x8xf32>
    %306 = vector.extract_strided_slice %304 {offsets = [0, 8], sizes = [4, 8], strides = [1, 1]} : vector<4x16xf32> to vector<4x8xf32>
    %307 = vector.extract_strided_slice %293 {offsets = [0, 16], sizes = [4, 8], strides = [1, 1]} : vector<4x24xf32> to vector<4x8xf32>
    %308 = vector.broadcast %17 : vector<1x8xf32> to vector<4x8xf32>
    %309 = arith.addf %307, %308 : vector<4x8xf32>
    %310 = vector.extract_strided_slice %294 {offsets = [0, 16], sizes = [4, 8], strides = [1, 1]} : vector<4x24xf32> to vector<4x8xf32>
    %311 = vector.broadcast %18 : vector<1x8xf32> to vector<4x8xf32>
    %312 = arith.addf %310, %311 : vector<4x8xf32>
    %313 = arith.mulf %305, %312 : vector<4x8xf32>
    %314 = arith.addf %309, %313 : vector<4x8xf32>
    %315 = math.tanh %314 : vector<4x8xf32>
    %cst_58 = arith.constant 1.000000e+00 : f32
    %316 = vector.broadcast %cst_58 : f32 to vector<4x8xf32>
    %317 = arith.subf %316, %306 : vector<4x8xf32>
    %318 = arith.mulf %317, %315 : vector<4x8xf32>
    %319 = arith.mulf %306, %290 : vector<4x8xf32>
    %320 = arith.addf %318, %319 : vector<4x8xf32>
    %321 = vector.extract_strided_slice %0 {offsets = [5, 0, 0], sizes = [1, 4, 4], strides = [1, 1, 1]} : vector<8x4x4xf32> to vector<1x4x4xf32>
    %322 = vector.shape_cast %321 : vector<1x4x4xf32> to vector<4x4xf32>
    %cst_59 = arith.constant dense<0.000000e+00> : vector<4x24xf32>
    %323 = tpu.matmul %322, %3, %cst_59 {dimension_numbers = #tpu.dot_dimension_numbers<[1], [0], [0], [1], [0, 0, 1, 1], [], []>} : vector<4x4xf32>, vector<4x24xf32>, vector<4x24xf32> -> vector<4x24xf32>
    %cst_60 = arith.constant dense<0.000000e+00> : vector<4x24xf32>
    %324 = tpu.matmul %320, %4, %cst_60 {dimension_numbers = #tpu.dot_dimension_numbers<[1], [0], [0], [1], [0, 0, 1, 1], [], []>} : vector<4x8xf32>, vector<8x24xf32>, vector<4x24xf32> -> vector<4x24xf32>
    %325 = vector.extract_strided_slice %323 {offsets = [0, 0], sizes = [4, 16], strides = [1, 1]} : vector<4x24xf32> to vector<4x16xf32>
    %326 = vector.extract_strided_slice %324 {offsets = [0, 0], sizes = [4, 16], strides = [1, 1]} : vector<4x24xf32> to vector<4x16xf32>
    %327 = arith.addf %325, %326 : vector<4x16xf32>
    %328 = vector.broadcast %16 : vector<1x16xf32> to vector<4x16xf32>
    %329 = arith.addf %327, %328 : vector<4x16xf32>
    %330 = arith.negf %329 : vector<4x16xf32>
    %331 = math.exp %330 : vector<4x16xf32>
    %cst_61 = arith.constant 1.000000e+00 : f32
    %332 = vector.broadcast %cst_61 : f32 to vector<4x16xf32>
    %333 = arith.addf %332, %331 : vector<4x16xf32>
    %334 = arith.divf %332, %333 : vector<4x16xf32>
    %335 = vector.extract_strided_slice %334 {offsets = [0, 0], sizes = [4, 8], strides = [1, 1]} : vector<4x16xf32> to vector<4x8xf32>
    %336 = vector.extract_strided_slice %334 {offsets = [0, 8], sizes = [4, 8], strides = [1, 1]} : vector<4x16xf32> to vector<4x8xf32>
    %337 = vector.extract_strided_slice %323 {offsets = [0, 16], sizes = [4, 8], strides = [1, 1]} : vector<4x24xf32> to vector<4x8xf32>
    %338 = vector.broadcast %17 : vector<1x8xf32> to vector<4x8xf32>
    %339 = arith.addf %337, %338 : vector<4x8xf32>
    %340 = vector.extract_strided_slice %324 {offsets = [0, 16], sizes = [4, 8], strides = [1, 1]} : vector<4x24xf32> to vector<4x8xf32>
    %341 = vector.broadcast %18 : vector<1x8xf32> to vector<4x8xf32>
    %342 = arith.addf %340, %341 : vector<4x8xf32>
    %343 = arith.mulf %335, %342 : vector<4x8xf32>
    %344 = arith.addf %339, %343 : vector<4x8xf32>
    %345 = math.tanh %344 : vector<4x8xf32>
    %cst_62 = arith.constant 1.000000e+00 : f32
    %346 = vector.broadcast %cst_62 : f32 to vector<4x8xf32>
    %347 = arith.subf %346, %336 : vector<4x8xf32>
    %348 = arith.mulf %347, %345 : vector<4x8xf32>
    %349 = arith.mulf %336, %320 : vector<4x8xf32>
    %350 = arith.addf %348, %349 : vector<4x8xf32>
    %351 = vector.extract_strided_slice %0 {offsets = [4, 0, 0], sizes = [1, 4, 4], strides = [1, 1, 1]} : vector<8x4x4xf32> to vector<1x4x4xf32>
    %352 = vector.shape_cast %351 : vector<1x4x4xf32> to vector<4x4xf32>
    %cst_63 = arith.constant dense<0.000000e+00> : vector<4x24xf32>
    %353 = tpu.matmul %352, %3, %cst_63 {dimension_numbers = #tpu.dot_dimension_numbers<[1], [0], [0], [1], [0, 0, 1, 1], [], []>} : vector<4x4xf32>, vector<4x24xf32>, vector<4x24xf32> -> vector<4x24xf32>
    %cst_64 = arith.constant dense<0.000000e+00> : vector<4x24xf32>
    %354 = tpu.matmul %350, %4, %cst_64 {dimension_numbers = #tpu.dot_dimension_numbers<[1], [0], [0], [1], [0, 0, 1, 1], [], []>} : vector<4x8xf32>, vector<8x24xf32>, vector<4x24xf32> -> vector<4x24xf32>
    %355 = vector.extract_strided_slice %353 {offsets = [0, 0], sizes = [4, 16], strides = [1, 1]} : vector<4x24xf32> to vector<4x16xf32>
    %356 = vector.extract_strided_slice %354 {offsets = [0, 0], sizes = [4, 16], strides = [1, 1]} : vector<4x24xf32> to vector<4x16xf32>
    %357 = arith.addf %355, %356 : vector<4x16xf32>
    %358 = vector.broadcast %16 : vector<1x16xf32> to vector<4x16xf32>
    %359 = arith.addf %357, %358 : vector<4x16xf32>
    %360 = arith.negf %359 : vector<4x16xf32>
    %361 = math.exp %360 : vector<4x16xf32>
    %cst_65 = arith.constant 1.000000e+00 : f32
    %362 = vector.broadcast %cst_65 : f32 to vector<4x16xf32>
    %363 = arith.addf %362, %361 : vector<4x16xf32>
    %364 = arith.divf %362, %363 : vector<4x16xf32>
    %365 = vector.extract_strided_slice %364 {offsets = [0, 0], sizes = [4, 8], strides = [1, 1]} : vector<4x16xf32> to vector<4x8xf32>
    %366 = vector.extract_strided_slice %364 {offsets = [0, 8], sizes = [4, 8], strides = [1, 1]} : vector<4x16xf32> to vector<4x8xf32>
    %367 = vector.extract_strided_slice %353 {offsets = [0, 16], sizes = [4, 8], strides = [1, 1]} : vector<4x24xf32> to vector<4x8xf32>
    %368 = vector.broadcast %17 : vector<1x8xf32> to vector<4x8xf32>
    %369 = arith.addf %367, %368 : vector<4x8xf32>
    %370 = vector.extract_strided_slice %354 {offsets = [0, 16], sizes = [4, 8], strides = [1, 1]} : vector<4x24xf32> to vector<4x8xf32>
    %371 = vector.broadcast %18 : vector<1x8xf32> to vector<4x8xf32>
    %372 = arith.addf %370, %371 : vector<4x8xf32>
    %373 = arith.mulf %365, %372 : vector<4x8xf32>
    %374 = arith.addf %369, %373 : vector<4x8xf32>
    %375 = math.tanh %374 : vector<4x8xf32>
    %cst_66 = arith.constant 1.000000e+00 : f32
    %376 = vector.broadcast %cst_66 : f32 to vector<4x8xf32>
    %377 = arith.subf %376, %366 : vector<4x8xf32>
    %378 = arith.mulf %377, %375 : vector<4x8xf32>
    %379 = arith.mulf %366, %350 : vector<4x8xf32>
    %380 = arith.addf %378, %379 : vector<4x8xf32>
    %381 = vector.extract_strided_slice %0 {offsets = [3, 0, 0], sizes = [1, 4, 4], strides = [1, 1, 1]} : vector<8x4x4xf32> to vector<1x4x4xf32>
    %382 = vector.shape_cast %381 : vector<1x4x4xf32> to vector<4x4xf32>
    %cst_67 = arith.constant dense<0.000000e+00> : vector<4x24xf32>
    %383 = tpu.matmul %382, %3, %cst_67 {dimension_numbers = #tpu.dot_dimension_numbers<[1], [0], [0], [1], [0, 0, 1, 1], [], []>} : vector<4x4xf32>, vector<4x24xf32>, vector<4x24xf32> -> vector<4x24xf32>
    %cst_68 = arith.constant dense<0.000000e+00> : vector<4x24xf32>
    %384 = tpu.matmul %380, %4, %cst_68 {dimension_numbers = #tpu.dot_dimension_numbers<[1], [0], [0], [1], [0, 0, 1, 1], [], []>} : vector<4x8xf32>, vector<8x24xf32>, vector<4x24xf32> -> vector<4x24xf32>
    %385 = vector.extract_strided_slice %383 {offsets = [0, 0], sizes = [4, 16], strides = [1, 1]} : vector<4x24xf32> to vector<4x16xf32>
    %386 = vector.extract_strided_slice %384 {offsets = [0, 0], sizes = [4, 16], strides = [1, 1]} : vector<4x24xf32> to vector<4x16xf32>
    %387 = arith.addf %385, %386 : vector<4x16xf32>
    %388 = vector.broadcast %16 : vector<1x16xf32> to vector<4x16xf32>
    %389 = arith.addf %387, %388 : vector<4x16xf32>
    %390 = arith.negf %389 : vector<4x16xf32>
    %391 = math.exp %390 : vector<4x16xf32>
    %cst_69 = arith.constant 1.000000e+00 : f32
    %392 = vector.broadcast %cst_69 : f32 to vector<4x16xf32>
    %393 = arith.addf %392, %391 : vector<4x16xf32>
    %394 = arith.divf %392, %393 : vector<4x16xf32>
    %395 = vector.extract_strided_slice %394 {offsets = [0, 0], sizes = [4, 8], strides = [1, 1]} : vector<4x16xf32> to vector<4x8xf32>
    %396 = vector.extract_strided_slice %394 {offsets = [0, 8], sizes = [4, 8], strides = [1, 1]} : vector<4x16xf32> to vector<4x8xf32>
    %397 = vector.extract_strided_slice %383 {offsets = [0, 16], sizes = [4, 8], strides = [1, 1]} : vector<4x24xf32> to vector<4x8xf32>
    %398 = vector.broadcast %17 : vector<1x8xf32> to vector<4x8xf32>
    %399 = arith.addf %397, %398 : vector<4x8xf32>
    %400 = vector.extract_strided_slice %384 {offsets = [0, 16], sizes = [4, 8], strides = [1, 1]} : vector<4x24xf32> to vector<4x8xf32>
    %401 = vector.broadcast %18 : vector<1x8xf32> to vector<4x8xf32>
    %402 = arith.addf %400, %401 : vector<4x8xf32>
    %403 = arith.mulf %395, %402 : vector<4x8xf32>
    %404 = arith.addf %399, %403 : vector<4x8xf32>
    %405 = math.tanh %404 : vector<4x8xf32>
    %cst_70 = arith.constant 1.000000e+00 : f32
    %406 = vector.broadcast %cst_70 : f32 to vector<4x8xf32>
    %407 = arith.subf %406, %396 : vector<4x8xf32>
    %408 = arith.mulf %407, %405 : vector<4x8xf32>
    %409 = arith.mulf %396, %380 : vector<4x8xf32>
    %410 = arith.addf %408, %409 : vector<4x8xf32>
    %411 = vector.extract_strided_slice %0 {offsets = [2, 0, 0], sizes = [1, 4, 4], strides = [1, 1, 1]} : vector<8x4x4xf32> to vector<1x4x4xf32>
    %412 = vector.shape_cast %411 : vector<1x4x4xf32> to vector<4x4xf32>
    %cst_71 = arith.constant dense<0.000000e+00> : vector<4x24xf32>
    %413 = tpu.matmul %412, %3, %cst_71 {dimension_numbers = #tpu.dot_dimension_numbers<[1], [0], [0], [1], [0, 0, 1, 1], [], []>} : vector<4x4xf32>, vector<4x24xf32>, vector<4x24xf32> -> vector<4x24xf32>
    %cst_72 = arith.constant dense<0.000000e+00> : vector<4x24xf32>
    %414 = tpu.matmul %410, %4, %cst_72 {dimension_numbers = #tpu.dot_dimension_numbers<[1], [0], [0], [1], [0, 0, 1, 1], [], []>} : vector<4x8xf32>, vector<8x24xf32>, vector<4x24xf32> -> vector<4x24xf32>
    %415 = vector.extract_strided_slice %413 {offsets = [0, 0], sizes = [4, 16], strides = [1, 1]} : vector<4x24xf32> to vector<4x16xf32>
    %416 = vector.extract_strided_slice %414 {offsets = [0, 0], sizes = [4, 16], strides = [1, 1]} : vector<4x24xf32> to vector<4x16xf32>
    %417 = arith.addf %415, %416 : vector<4x16xf32>
    %418 = vector.broadcast %16 : vector<1x16xf32> to vector<4x16xf32>
    %419 = arith.addf %417, %418 : vector<4x16xf32>
    %420 = arith.negf %419 : vector<4x16xf32>
    %421 = math.exp %420 : vector<4x16xf32>
    %cst_73 = arith.constant 1.000000e+00 : f32
    %422 = vector.broadcast %cst_73 : f32 to vector<4x16xf32>
    %423 = arith.addf %422, %421 : vector<4x16xf32>
    %424 = arith.divf %422, %423 : vector<4x16xf32>
    %425 = vector.extract_strided_slice %424 {offsets = [0, 0], sizes = [4, 8], strides = [1, 1]} : vector<4x16xf32> to vector<4x8xf32>
    %426 = vector.extract_strided_slice %424 {offsets = [0, 8], sizes = [4, 8], strides = [1, 1]} : vector<4x16xf32> to vector<4x8xf32>
    %427 = vector.extract_strided_slice %413 {offsets = [0, 16], sizes = [4, 8], strides = [1, 1]} : vector<4x24xf32> to vector<4x8xf32>
    %428 = vector.broadcast %17 : vector<1x8xf32> to vector<4x8xf32>
    %429 = arith.addf %427, %428 : vector<4x8xf32>
    %430 = vector.extract_strided_slice %414 {offsets = [0, 16], sizes = [4, 8], strides = [1, 1]} : vector<4x24xf32> to vector<4x8xf32>
    %431 = vector.broadcast %18 : vector<1x8xf32> to vector<4x8xf32>
    %432 = arith.addf %430, %431 : vector<4x8xf32>
    %433 = arith.mulf %425, %432 : vector<4x8xf32>
    %434 = arith.addf %429, %433 : vector<4x8xf32>
    %435 = math.tanh %434 : vector<4x8xf32>
    %cst_74 = arith.constant 1.000000e+00 : f32
    %436 = vector.broadcast %cst_74 : f32 to vector<4x8xf32>
    %437 = arith.subf %436, %426 : vector<4x8xf32>
    %438 = arith.mulf %437, %435 : vector<4x8xf32>
    %439 = arith.mulf %426, %410 : vector<4x8xf32>
    %440 = arith.addf %438, %439 : vector<4x8xf32>
    %441 = vector.extract_strided_slice %0 {offsets = [1, 0, 0], sizes = [1, 4, 4], strides = [1, 1, 1]} : vector<8x4x4xf32> to vector<1x4x4xf32>
    %442 = vector.shape_cast %441 : vector<1x4x4xf32> to vector<4x4xf32>
    %cst_75 = arith.constant dense<0.000000e+00> : vector<4x24xf32>
    %443 = tpu.matmul %442, %3, %cst_75 {dimension_numbers = #tpu.dot_dimension_numbers<[1], [0], [0], [1], [0, 0, 1, 1], [], []>} : vector<4x4xf32>, vector<4x24xf32>, vector<4x24xf32> -> vector<4x24xf32>
    %cst_76 = arith.constant dense<0.000000e+00> : vector<4x24xf32>
    %444 = tpu.matmul %440, %4, %cst_76 {dimension_numbers = #tpu.dot_dimension_numbers<[1], [0], [0], [1], [0, 0, 1, 1], [], []>} : vector<4x8xf32>, vector<8x24xf32>, vector<4x24xf32> -> vector<4x24xf32>
    %445 = vector.extract_strided_slice %443 {offsets = [0, 0], sizes = [4, 16], strides = [1, 1]} : vector<4x24xf32> to vector<4x16xf32>
    %446 = vector.extract_strided_slice %444 {offsets = [0, 0], sizes = [4, 16], strides = [1, 1]} : vector<4x24xf32> to vector<4x16xf32>
    %447 = arith.addf %445, %446 : vector<4x16xf32>
    %448 = vector.broadcast %16 : vector<1x16xf32> to vector<4x16xf32>
    %449 = arith.addf %447, %448 : vector<4x16xf32>
    %450 = arith.negf %449 : vector<4x16xf32>
    %451 = math.exp %450 : vector<4x16xf32>
    %cst_77 = arith.constant 1.000000e+00 : f32
    %452 = vector.broadcast %cst_77 : f32 to vector<4x16xf32>
    %453 = arith.addf %452, %451 : vector<4x16xf32>
    %454 = arith.divf %452, %453 : vector<4x16xf32>
    %455 = vector.extract_strided_slice %454 {offsets = [0, 0], sizes = [4, 8], strides = [1, 1]} : vector<4x16xf32> to vector<4x8xf32>
    %456 = vector.extract_strided_slice %454 {offsets = [0, 8], sizes = [4, 8], strides = [1, 1]} : vector<4x16xf32> to vector<4x8xf32>
    %457 = vector.extract_strided_slice %443 {offsets = [0, 16], sizes = [4, 8], strides = [1, 1]} : vector<4x24xf32> to vector<4x8xf32>
    %458 = vector.broadcast %17 : vector<1x8xf32> to vector<4x8xf32>
    %459 = arith.addf %457, %458 : vector<4x8xf32>
    %460 = vector.extract_strided_slice %444 {offsets = [0, 16], sizes = [4, 8], strides = [1, 1]} : vector<4x24xf32> to vector<4x8xf32>
    %461 = vector.broadcast %18 : vector<1x8xf32> to vector<4x8xf32>
    %462 = arith.addf %460, %461 : vector<4x8xf32>
    %463 = arith.mulf %455, %462 : vector<4x8xf32>
    %464 = arith.addf %459, %463 : vector<4x8xf32>
    %465 = math.tanh %464 : vector<4x8xf32>
    %cst_78 = arith.constant 1.000000e+00 : f32
    %466 = vector.broadcast %cst_78 : f32 to vector<4x8xf32>
    %467 = arith.subf %466, %456 : vector<4x8xf32>
    %468 = arith.mulf %467, %465 : vector<4x8xf32>
    %469 = arith.mulf %456, %440 : vector<4x8xf32>
    %470 = arith.addf %468, %469 : vector<4x8xf32>
    %471 = vector.extract_strided_slice %0 {offsets = [0, 0, 0], sizes = [1, 4, 4], strides = [1, 1, 1]} : vector<8x4x4xf32> to vector<1x4x4xf32>
    %472 = vector.shape_cast %471 : vector<1x4x4xf32> to vector<4x4xf32>
    %cst_79 = arith.constant dense<0.000000e+00> : vector<4x24xf32>
    %473 = tpu.matmul %472, %3, %cst_79 {dimension_numbers = #tpu.dot_dimension_numbers<[1], [0], [0], [1], [0, 0, 1, 1], [], []>} : vector<4x4xf32>, vector<4x24xf32>, vector<4x24xf32> -> vector<4x24xf32>
    %cst_80 = arith.constant dense<0.000000e+00> : vector<4x24xf32>
    %474 = tpu.matmul %470, %4, %cst_80 {dimension_numbers = #tpu.dot_dimension_numbers<[1], [0], [0], [1], [0, 0, 1, 1], [], []>} : vector<4x8xf32>, vector<8x24xf32>, vector<4x24xf32> -> vector<4x24xf32>
    %475 = vector.extract_strided_slice %473 {offsets = [0, 0], sizes = [4, 16], strides = [1, 1]} : vector<4x24xf32> to vector<4x16xf32>
    %476 = vector.extract_strided_slice %474 {offsets = [0, 0], sizes = [4, 16], strides = [1, 1]} : vector<4x24xf32> to vector<4x16xf32>
    %477 = arith.addf %475, %476 : vector<4x16xf32>
    %478 = vector.broadcast %16 : vector<1x16xf32> to vector<4x16xf32>
    %479 = arith.addf %477, %478 : vector<4x16xf32>
    %480 = arith.negf %479 : vector<4x16xf32>
    %481 = math.exp %480 : vector<4x16xf32>
    %cst_81 = arith.constant 1.000000e+00 : f32
    %482 = vector.broadcast %cst_81 : f32 to vector<4x16xf32>
    %483 = arith.addf %482, %481 : vector<4x16xf32>
    %484 = arith.divf %482, %483 : vector<4x16xf32>
    %485 = vector.extract_strided_slice %484 {offsets = [0, 0], sizes = [4, 8], strides = [1, 1]} : vector<4x16xf32> to vector<4x8xf32>
    %486 = vector.extract_strided_slice %484 {offsets = [0, 8], sizes = [4, 8], strides = [1, 1]} : vector<4x16xf32> to vector<4x8xf32>
    %487 = vector.extract_strided_slice %473 {offsets = [0, 16], sizes = [4, 8], strides = [1, 1]} : vector<4x24xf32> to vector<4x8xf32>
    %488 = vector.broadcast %17 : vector<1x8xf32> to vector<4x8xf32>
    %489 = arith.addf %487, %488 : vector<4x8xf32>
    %490 = vector.extract_strided_slice %474 {offsets = [0, 16], sizes = [4, 8], strides = [1, 1]} : vector<4x24xf32> to vector<4x8xf32>
    %491 = vector.broadcast %18 : vector<1x8xf32> to vector<4x8xf32>
    %492 = arith.addf %490, %491 : vector<4x8xf32>
    %493 = arith.mulf %485, %492 : vector<4x8xf32>
    %494 = arith.addf %489, %493 : vector<4x8xf32>
    %495 = math.tanh %494 : vector<4x8xf32>
    %cst_82 = arith.constant 1.000000e+00 : f32
    %496 = vector.broadcast %cst_82 : f32 to vector<4x8xf32>
    %497 = arith.subf %496, %486 : vector<4x8xf32>
    %498 = arith.mulf %497, %495 : vector<4x8xf32>
    %499 = arith.mulf %486, %470 : vector<4x8xf32>
    %500 = arith.addf %498, %499 : vector<4x8xf32>
    %c0_83 = arith.constant 0 : index
    %c0_84 = arith.constant 0 : index
    %501 = vector.load %arg10[%c0_83, %c0_84] : memref<16x32xf32, #tpu.memory_space<vmem>>, vector<16x32xf32>
    %502 = vector.extract_strided_slice %501 {offsets = [0, 0], sizes = [8, 32], strides = [1, 1]} : vector<16x32xf32> to vector<8x32xf32>
    %cst_85 = arith.constant dense<0.000000e+00> : vector<4x32xf32>
    %503 = tpu.matmul %259, %502, %cst_85 {dimension_numbers = #tpu.dot_dimension_numbers<[1], [0], [0], [1], [0, 0, 1, 1], [], []>} : vector<4x8xf32>, vector<8x32xf32>, vector<4x32xf32> -> vector<4x32xf32>
    %504 = vector.extract_strided_slice %501 {offsets = [8, 0], sizes = [8, 32], strides = [1, 1]} : vector<16x32xf32> to vector<8x32xf32>
    %cst_86 = arith.constant dense<0.000000e+00> : vector<4x32xf32>
    %505 = tpu.matmul %500, %504, %cst_86 {dimension_numbers = #tpu.dot_dimension_numbers<[1], [0], [0], [1], [0, 0, 1, 1], [], []>} : vector<4x8xf32>, vector<8x32xf32>, vector<4x32xf32> -> vector<4x32xf32>
    %506 = arith.addf %503, %505 : vector<4x32xf32>
    %c0_87 = arith.constant 0 : index
    %c0_88 = arith.constant 0 : index
    %507 = vector.load %arg11[%c0_87, %c0_88] : memref<1x32xf32, #tpu.memory_space<vmem>>, vector<1x32xf32>
    %508 = vector.broadcast %507 : vector<1x32xf32> to vector<4x32xf32>
    %509 = arith.addf %506, %508 : vector<4x32xf32>
    %510 = vector.extract_strided_slice %509 {offsets = [0, 0], sizes = [4, 16], strides = [1, 1]} : vector<4x32xf32> to vector<4x16xf32>
    %511 = vector.extract_strided_slice %509 {offsets = [0, 16], sizes = [4, 16], strides = [1, 1]} : vector<4x32xf32> to vector<4x16xf32>
    %cst_89 = arith.constant 0.000000e+00 : f32
    %512 = vector.broadcast %cst_89 : f32 to vector<4x16xf32>
    %513 = arith.subf %512, %511 : vector<4x16xf32>
    %514 = math.exp %513 : vector<4x16xf32>
    %515 = arith.addf %511, %514 : vector<4x16xf32>
    %516 = arith.mulf %510, %510 : vector<4x16xf32>
    %517 = arith.mulf %516, %514 : vector<4x16xf32>
    %518 = arith.addf %515, %517 : vector<4x16xf32>
    %cst_90 = arith.constant 1.000000e+00 : f32
    %519 = vector.broadcast %cst_90 : f32 to vector<4x16xf32>
    %520 = arith.addf %518, %519 : vector<4x16xf32>
    %cst_91 = arith.constant 5.000000e-01 : f32
    %521 = vector.broadcast %cst_91 : f32 to vector<4x16xf32>
    %522 = arith.mulf %521, %520 : vector<4x16xf32>
    %c0_92 = arith.constant 0 : index
    %c0_93 = arith.constant 0 : index
    %523 = vector.load %arg22[%c0_92, %c0_93] : memref<4x16xf32, #tpu.memory_space<vmem>>, vector<4x16xf32>
    tpu.vector_store %arg22[%c0_92, %c0_93], %522 {strides = array<i32>} : memref<4x16xf32, #tpu.memory_space<vmem>>, vector<4x16xf32>,
    %cst_94 = arith.constant 5.000000e-01 : f32
    %524 = vector.broadcast %cst_94 : f32 to vector<4x16xf32>
    %525 = arith.mulf %524, %511 : vector<4x16xf32>
    %526 = math.exp %525 : vector<4x16xf32>
    %c0_95 = arith.constant 0 : index
    %c0_96 = arith.constant 0 : index
    %527 = vector.load %arg1[%c0_95, %c0_96] : memref<4x16xf32, #tpu.memory_space<vmem>>, vector<4x16xf32>
    %528 = arith.mulf %526, %527 : vector<4x16xf32>
    %529 = arith.addf %528, %510 : vector<4x16xf32>
    %c0_97 = arith.constant 0 : index
    %c0_98 = arith.constant 0 : index
    %530 = vector.load %arg21[%c0_97, %c0_98] : memref<4x16xf32, #tpu.memory_space<vmem>>, vector<4x16xf32>
    tpu.vector_store %arg21[%c0_97, %c0_98], %529 {strides = array<i32>} : memref<4x16xf32, #tpu.memory_space<vmem>>, vector<4x16xf32>,
    %c0_99 = arith.constant 0 : index
    %c0_100 = arith.constant 0 : index
    %531 = vector.load %arg12[%c0_99, %c0_100] : memref<16x48xf32, #tpu.memory_space<vmem>>, vector<16x48xf32>
    %c0_101 = arith.constant 0 : index
    %c0_102 = arith.constant 0 : index
    %532 = vector.load %arg13[%c0_101, %c0_102] : memref<1x48xf32, #tpu.memory_space<vmem>>, vector<1x48xf32>
    %c0_103 = arith.constant 0 : index
    %c0_104 = arith.constant 0 : index
    %533 = vector.load %arg14[%c0_103, %c0_104] : memref<1x48xf32, #tpu.memory_space<vmem>>, vector<1x48xf32>
    %534 = vector.extract_strided_slice %532 {offsets = [0, 0], sizes = [1, 32], strides = [1, 1]} : vector<1x48xf32> to vector<1x32xf32>
    %535 = vector.extract_strided_slice %533 {offsets = [0, 0], sizes = [1, 32], strides = [1, 1]} : vector<1x48xf32> to vector<1x32xf32>
    %536 = arith.addf %534, %535 : vector<1x32xf32>
    %537 = vector.extract_strided_slice %532 {offsets = [0, 32], sizes = [1, 16], strides = [1, 1]} : vector<1x48xf32> to vector<1x16xf32>
    %538 = vector.extract_strided_slice %533 {offsets = [0, 32], sizes = [1, 16], strides = [1, 1]} : vector<1x48xf32> to vector<1x16xf32>
    %cst_105 = arith.constant dense<0.000000e+00> : vector<4x48xf32>
    %539 = tpu.matmul %529, %531, %cst_105 {dimension_numbers = #tpu.dot_dimension_numbers<[1], [0], [0], [1], [0, 0, 1, 1], [], []>} : vector<4x16xf32>, vector<16x48xf32>, vector<4x48xf32> -> vector<4x48xf32>
    %540 = vector.extract_strided_slice %539 {offsets = [0, 0], sizes = [4, 32], strides = [1, 1]} : vector<4x48xf32> to vector<4x32xf32>
    %541 = vector.broadcast %536 : vector<1x32xf32> to vector<4x32xf32>
    %542 = arith.addf %540, %541 : vector<4x32xf32>
    %543 = arith.negf %542 : vector<4x32xf32>
    %544 = math.exp %543 : vector<4x32xf32>
    %cst_106 = arith.constant 1.000000e+00 : f32
    %545 = vector.broadcast %cst_106 : f32 to vector<4x32xf32>
    %546 = arith.addf %545, %544 : vector<4x32xf32>
    %547 = arith.divf %545, %546 : vector<4x32xf32>
    %548 = vector.extract_strided_slice %547 {offsets = [0, 0], sizes = [4, 16], strides = [1, 1]} : vector<4x32xf32> to vector<4x16xf32>
    %549 = vector.extract_strided_slice %547 {offsets = [0, 16], sizes = [4, 16], strides = [1, 1]} : vector<4x32xf32> to vector<4x16xf32>
    %550 = vector.extract_strided_slice %539 {offsets = [0, 32], sizes = [4, 16], strides = [1, 1]} : vector<4x48xf32> to vector<4x16xf32>
    %551 = vector.broadcast %538 : vector<1x16xf32> to vector<4x16xf32>
    %552 = arith.addf %550, %551 : vector<4x16xf32>
    %553 = arith.mulf %548, %552 : vector<4x16xf32>
    %554 = vector.broadcast %537 : vector<1x16xf32> to vector<4x16xf32>
    %555 = arith.addf %554, %553 : vector<4x16xf32>
    %556 = math.tanh %555 : vector<4x16xf32>
    %cst_107 = arith.constant 1.000000e+00 : f32
    %557 = vector.broadcast %cst_107 : f32 to vector<4x16xf32>
    %558 = arith.subf %557, %549 : vector<4x16xf32>
    %559 = arith.mulf %558, %556 : vector<4x16xf32>
    %560 = arith.mulf %549, %529 : vector<4x16xf32>
    %561 = arith.addf %559, %560 : vector<4x16xf32>
    %c0_108 = arith.constant 0 : index
    %c0_109 = arith.constant 0 : index
    %c0_110 = arith.constant 0 : index
    %562 = vector.load %arg20[%c0_108, %c0_109, %c0_110] : memref<8x4x16xf32, #tpu.memory_space<vmem>>, vector<1x4x16xf32>
    %563 = vector.shape_cast %562 : vector<1x4x16xf32> to vector<4x16xf32>
    %564 = vector.shape_cast %561 : vector<4x16xf32> to vector<1x4x16xf32>
    tpu.vector_store %arg20[%c0_108, %c0_109, %c0_110], %564 {strides = array<i32>} : memref<8x4x16xf32, #tpu.memory_space<vmem>>, vector<1x4x16xf32>,
    %cst_111 = arith.constant dense<0.000000e+00> : vector<4x48xf32>
    %565 = tpu.matmul %561, %531, %cst_111 {dimension_numbers = #tpu.dot_dimension_numbers<[1], [0], [0], [1], [0, 0, 1, 1], [], []>} : vector<4x16xf32>, vector<16x48xf32>, vector<4x48xf32> -> vector<4x48xf32>
    %566 = vector.extract_strided_slice %565 {offsets = [0, 0], sizes = [4, 32], strides = [1, 1]} : vector<4x48xf32> to vector<4x32xf32>
    %567 = vector.broadcast %536 : vector<1x32xf32> to vector<4x32xf32>
    %568 = arith.addf %566, %567 : vector<4x32xf32>
    %569 = arith.negf %568 : vector<4x32xf32>
    %570 = math.exp %569 : vector<4x32xf32>
    %cst_112 = arith.constant 1.000000e+00 : f32
    %571 = vector.broadcast %cst_112 : f32 to vector<4x32xf32>
    %572 = arith.addf %571, %570 : vector<4x32xf32>
    %573 = arith.divf %571, %572 : vector<4x32xf32>
    %574 = vector.extract_strided_slice %573 {offsets = [0, 0], sizes = [4, 16], strides = [1, 1]} : vector<4x32xf32> to vector<4x16xf32>
    %575 = vector.extract_strided_slice %573 {offsets = [0, 16], sizes = [4, 16], strides = [1, 1]} : vector<4x32xf32> to vector<4x16xf32>
    %576 = vector.extract_strided_slice %565 {offsets = [0, 32], sizes = [4, 16], strides = [1, 1]} : vector<4x48xf32> to vector<4x16xf32>
    %577 = vector.broadcast %538 : vector<1x16xf32> to vector<4x16xf32>
    %578 = arith.addf %576, %577 : vector<4x16xf32>
    %579 = arith.mulf %574, %578 : vector<4x16xf32>
    %580 = vector.broadcast %537 : vector<1x16xf32> to vector<4x16xf32>
    %581 = arith.addf %580, %579 : vector<4x16xf32>
    %582 = math.tanh %581 : vector<4x16xf32>
    %cst_113 = arith.constant 1.000000e+00 : f32
    %583 = vector.broadcast %cst_113 : f32 to vector<4x16xf32>
    %584 = arith.subf %583, %575 : vector<4x16xf32>
    %585 = arith.mulf %584, %582 : vector<4x16xf32>
    %586 = arith.mulf %575, %561 : vector<4x16xf32>
    %587 = arith.addf %585, %586 : vector<4x16xf32>
    %c1 = arith.constant 1 : index
    %c0_114 = arith.constant 0 : index
    %c0_115 = arith.constant 0 : index
    %588 = vector.load %arg20[%c1, %c0_114, %c0_115] : memref<8x4x16xf32, #tpu.memory_space<vmem>>, vector<1x4x16xf32>
    %589 = vector.shape_cast %588 : vector<1x4x16xf32> to vector<4x16xf32>
    %590 = vector.shape_cast %587 : vector<4x16xf32> to vector<1x4x16xf32>
    tpu.vector_store %arg20[%c1, %c0_114, %c0_115], %590 {strides = array<i32>} : memref<8x4x16xf32, #tpu.memory_space<vmem>>, vector<1x4x16xf32>,
    %cst_116 = arith.constant dense<0.000000e+00> : vector<4x48xf32>
    %591 = tpu.matmul %587, %531, %cst_116 {dimension_numbers = #tpu.dot_dimension_numbers<[1], [0], [0], [1], [0, 0, 1, 1], [], []>} : vector<4x16xf32>, vector<16x48xf32>, vector<4x48xf32> -> vector<4x48xf32>
    %592 = vector.extract_strided_slice %591 {offsets = [0, 0], sizes = [4, 32], strides = [1, 1]} : vector<4x48xf32> to vector<4x32xf32>
    %593 = vector.broadcast %536 : vector<1x32xf32> to vector<4x32xf32>
    %594 = arith.addf %592, %593 : vector<4x32xf32>
    %595 = arith.negf %594 : vector<4x32xf32>
    %596 = math.exp %595 : vector<4x32xf32>
    %cst_117 = arith.constant 1.000000e+00 : f32
    %597 = vector.broadcast %cst_117 : f32 to vector<4x32xf32>
    %598 = arith.addf %597, %596 : vector<4x32xf32>
    %599 = arith.divf %597, %598 : vector<4x32xf32>
    %600 = vector.extract_strided_slice %599 {offsets = [0, 0], sizes = [4, 16], strides = [1, 1]} : vector<4x32xf32> to vector<4x16xf32>
    %601 = vector.extract_strided_slice %599 {offsets = [0, 16], sizes = [4, 16], strides = [1, 1]} : vector<4x32xf32> to vector<4x16xf32>
    %602 = vector.extract_strided_slice %591 {offsets = [0, 32], sizes = [4, 16], strides = [1, 1]} : vector<4x48xf32> to vector<4x16xf32>
    %603 = vector.broadcast %538 : vector<1x16xf32> to vector<4x16xf32>
    %604 = arith.addf %602, %603 : vector<4x16xf32>
    %605 = arith.mulf %600, %604 : vector<4x16xf32>
    %606 = vector.broadcast %537 : vector<1x16xf32> to vector<4x16xf32>
    %607 = arith.addf %606, %605 : vector<4x16xf32>
    %608 = math.tanh %607 : vector<4x16xf32>
    %cst_118 = arith.constant 1.000000e+00 : f32
    %609 = vector.broadcast %cst_118 : f32 to vector<4x16xf32>
    %610 = arith.subf %609, %601 : vector<4x16xf32>
    %611 = arith.mulf %610, %608 : vector<4x16xf32>
    %612 = arith.mulf %601, %587 : vector<4x16xf32>
    %613 = arith.addf %611, %612 : vector<4x16xf32>
    %c2 = arith.constant 2 : index
    %c0_119 = arith.constant 0 : index
    %c0_120 = arith.constant 0 : index
    %614 = vector.load %arg20[%c2, %c0_119, %c0_120] : memref<8x4x16xf32, #tpu.memory_space<vmem>>, vector<1x4x16xf32>
    %615 = vector.shape_cast %614 : vector<1x4x16xf32> to vector<4x16xf32>
    %616 = vector.shape_cast %613 : vector<4x16xf32> to vector<1x4x16xf32>
    tpu.vector_store %arg20[%c2, %c0_119, %c0_120], %616 {strides = array<i32>} : memref<8x4x16xf32, #tpu.memory_space<vmem>>, vector<1x4x16xf32>,
    %cst_121 = arith.constant dense<0.000000e+00> : vector<4x48xf32>
    %617 = tpu.matmul %613, %531, %cst_121 {dimension_numbers = #tpu.dot_dimension_numbers<[1], [0], [0], [1], [0, 0, 1, 1], [], []>} : vector<4x16xf32>, vector<16x48xf32>, vector<4x48xf32> -> vector<4x48xf32>
    %618 = vector.extract_strided_slice %617 {offsets = [0, 0], sizes = [4, 32], strides = [1, 1]} : vector<4x48xf32> to vector<4x32xf32>
    %619 = vector.broadcast %536 : vector<1x32xf32> to vector<4x32xf32>
    %620 = arith.addf %618, %619 : vector<4x32xf32>
    %621 = arith.negf %620 : vector<4x32xf32>
    %622 = math.exp %621 : vector<4x32xf32>
    %cst_122 = arith.constant 1.000000e+00 : f32
    %623 = vector.broadcast %cst_122 : f32 to vector<4x32xf32>
    %624 = arith.addf %623, %622 : vector<4x32xf32>
    %625 = arith.divf %623, %624 : vector<4x32xf32>
    %626 = vector.extract_strided_slice %625 {offsets = [0, 0], sizes = [4, 16], strides = [1, 1]} : vector<4x32xf32> to vector<4x16xf32>
    %627 = vector.extract_strided_slice %625 {offsets = [0, 16], sizes = [4, 16], strides = [1, 1]} : vector<4x32xf32> to vector<4x16xf32>
    %628 = vector.extract_strided_slice %617 {offsets = [0, 32], sizes = [4, 16], strides = [1, 1]} : vector<4x48xf32> to vector<4x16xf32>
    %629 = vector.broadcast %538 : vector<1x16xf32> to vector<4x16xf32>
    %630 = arith.addf %628, %629 : vector<4x16xf32>
    %631 = arith.mulf %626, %630 : vector<4x16xf32>
    %632 = vector.broadcast %537 : vector<1x16xf32> to vector<4x16xf32>
    %633 = arith.addf %632, %631 : vector<4x16xf32>
    %634 = math.tanh %633 : vector<4x16xf32>
    %cst_123 = arith.constant 1.000000e+00 : f32
    %635 = vector.broadcast %cst_123 : f32 to vector<4x16xf32>
    %636 = arith.subf %635, %627 : vector<4x16xf32>
    %637 = arith.mulf %636, %634 : vector<4x16xf32>
    %638 = arith.mulf %627, %613 : vector<4x16xf32>
    %639 = arith.addf %637, %638 : vector<4x16xf32>
    %c3 = arith.constant 3 : index
    %c0_124 = arith.constant 0 : index
    %c0_125 = arith.constant 0 : index
    %640 = vector.load %arg20[%c3, %c0_124, %c0_125] : memref<8x4x16xf32, #tpu.memory_space<vmem>>, vector<1x4x16xf32>
    %641 = vector.shape_cast %640 : vector<1x4x16xf32> to vector<4x16xf32>
    %642 = vector.shape_cast %639 : vector<4x16xf32> to vector<1x4x16xf32>
    tpu.vector_store %arg20[%c3, %c0_124, %c0_125], %642 {strides = array<i32>} : memref<8x4x16xf32, #tpu.memory_space<vmem>>, vector<1x4x16xf32>,
    %cst_126 = arith.constant dense<0.000000e+00> : vector<4x48xf32>
    %643 = tpu.matmul %639, %531, %cst_126 {dimension_numbers = #tpu.dot_dimension_numbers<[1], [0], [0], [1], [0, 0, 1, 1], [], []>} : vector<4x16xf32>, vector<16x48xf32>, vector<4x48xf32> -> vector<4x48xf32>
    %644 = vector.extract_strided_slice %643 {offsets = [0, 0], sizes = [4, 32], strides = [1, 1]} : vector<4x48xf32> to vector<4x32xf32>
    %645 = vector.broadcast %536 : vector<1x32xf32> to vector<4x32xf32>
    %646 = arith.addf %644, %645 : vector<4x32xf32>
    %647 = arith.negf %646 : vector<4x32xf32>
    %648 = math.exp %647 : vector<4x32xf32>
    %cst_127 = arith.constant 1.000000e+00 : f32
    %649 = vector.broadcast %cst_127 : f32 to vector<4x32xf32>
    %650 = arith.addf %649, %648 : vector<4x32xf32>
    %651 = arith.divf %649, %650 : vector<4x32xf32>
    %652 = vector.extract_strided_slice %651 {offsets = [0, 0], sizes = [4, 16], strides = [1, 1]} : vector<4x32xf32> to vector<4x16xf32>
    %653 = vector.extract_strided_slice %651 {offsets = [0, 16], sizes = [4, 16], strides = [1, 1]} : vector<4x32xf32> to vector<4x16xf32>
    %654 = vector.extract_strided_slice %643 {offsets = [0, 32], sizes = [4, 16], strides = [1, 1]} : vector<4x48xf32> to vector<4x16xf32>
    %655 = vector.broadcast %538 : vector<1x16xf32> to vector<4x16xf32>
    %656 = arith.addf %654, %655 : vector<4x16xf32>
    %657 = arith.mulf %652, %656 : vector<4x16xf32>
    %658 = vector.broadcast %537 : vector<1x16xf32> to vector<4x16xf32>
    %659 = arith.addf %658, %657 : vector<4x16xf32>
    %660 = math.tanh %659 : vector<4x16xf32>
    %cst_128 = arith.constant 1.000000e+00 : f32
    %661 = vector.broadcast %cst_128 : f32 to vector<4x16xf32>
    %662 = arith.subf %661, %653 : vector<4x16xf32>
    %663 = arith.mulf %662, %660 : vector<4x16xf32>
    %664 = arith.mulf %653, %639 : vector<4x16xf32>
    %665 = arith.addf %663, %664 : vector<4x16xf32>
    %c4 = arith.constant 4 : index
    %c0_129 = arith.constant 0 : index
    %c0_130 = arith.constant 0 : index
    %666 = vector.load %arg20[%c4, %c0_129, %c0_130] : memref<8x4x16xf32, #tpu.memory_space<vmem>>, vector<1x4x16xf32>
    %667 = vector.shape_cast %666 : vector<1x4x16xf32> to vector<4x16xf32>
    %668 = vector.shape_cast %665 : vector<4x16xf32> to vector<1x4x16xf32>
    tpu.vector_store %arg20[%c4, %c0_129, %c0_130], %668 {strides = array<i32>} : memref<8x4x16xf32, #tpu.memory_space<vmem>>, vector<1x4x16xf32>,
    %cst_131 = arith.constant dense<0.000000e+00> : vector<4x48xf32>
    %669 = tpu.matmul %665, %531, %cst_131 {dimension_numbers = #tpu.dot_dimension_numbers<[1], [0], [0], [1], [0, 0, 1, 1], [], []>} : vector<4x16xf32>, vector<16x48xf32>, vector<4x48xf32> -> vector<4x48xf32>
    %670 = vector.extract_strided_slice %669 {offsets = [0, 0], sizes = [4, 32], strides = [1, 1]} : vector<4x48xf32> to vector<4x32xf32>
    %671 = vector.broadcast %536 : vector<1x32xf32> to vector<4x32xf32>
    %672 = arith.addf %670, %671 : vector<4x32xf32>
    %673 = arith.negf %672 : vector<4x32xf32>
    %674 = math.exp %673 : vector<4x32xf32>
    %cst_132 = arith.constant 1.000000e+00 : f32
    %675 = vector.broadcast %cst_132 : f32 to vector<4x32xf32>
    %676 = arith.addf %675, %674 : vector<4x32xf32>
    %677 = arith.divf %675, %676 : vector<4x32xf32>
    %678 = vector.extract_strided_slice %677 {offsets = [0, 0], sizes = [4, 16], strides = [1, 1]} : vector<4x32xf32> to vector<4x16xf32>
    %679 = vector.extract_strided_slice %677 {offsets = [0, 16], sizes = [4, 16], strides = [1, 1]} : vector<4x32xf32> to vector<4x16xf32>
    %680 = vector.extract_strided_slice %669 {offsets = [0, 32], sizes = [4, 16], strides = [1, 1]} : vector<4x48xf32> to vector<4x16xf32>
    %681 = vector.broadcast %538 : vector<1x16xf32> to vector<4x16xf32>
    %682 = arith.addf %680, %681 : vector<4x16xf32>
    %683 = arith.mulf %678, %682 : vector<4x16xf32>
    %684 = vector.broadcast %537 : vector<1x16xf32> to vector<4x16xf32>
    %685 = arith.addf %684, %683 : vector<4x16xf32>
    %686 = math.tanh %685 : vector<4x16xf32>
    %cst_133 = arith.constant 1.000000e+00 : f32
    %687 = vector.broadcast %cst_133 : f32 to vector<4x16xf32>
    %688 = arith.subf %687, %679 : vector<4x16xf32>
    %689 = arith.mulf %688, %686 : vector<4x16xf32>
    %690 = arith.mulf %679, %665 : vector<4x16xf32>
    %691 = arith.addf %689, %690 : vector<4x16xf32>
    %c5 = arith.constant 5 : index
    %c0_134 = arith.constant 0 : index
    %c0_135 = arith.constant 0 : index
    %692 = vector.load %arg20[%c5, %c0_134, %c0_135] : memref<8x4x16xf32, #tpu.memory_space<vmem>>, vector<1x4x16xf32>
    %693 = vector.shape_cast %692 : vector<1x4x16xf32> to vector<4x16xf32>
    %694 = vector.shape_cast %691 : vector<4x16xf32> to vector<1x4x16xf32>
    tpu.vector_store %arg20[%c5, %c0_134, %c0_135], %694 {strides = array<i32>} : memref<8x4x16xf32, #tpu.memory_space<vmem>>, vector<1x4x16xf32>,
    %cst_136 = arith.constant dense<0.000000e+00> : vector<4x48xf32>
    %695 = tpu.matmul %691, %531, %cst_136 {dimension_numbers = #tpu.dot_dimension_numbers<[1], [0], [0], [1], [0, 0, 1, 1], [], []>} : vector<4x16xf32>, vector<16x48xf32>, vector<4x48xf32> -> vector<4x48xf32>
    %696 = vector.extract_strided_slice %695 {offsets = [0, 0], sizes = [4, 32], strides = [1, 1]} : vector<4x48xf32> to vector<4x32xf32>
    %697 = vector.broadcast %536 : vector<1x32xf32> to vector<4x32xf32>
    %698 = arith.addf %696, %697 : vector<4x32xf32>
    %699 = arith.negf %698 : vector<4x32xf32>
    %700 = math.exp %699 : vector<4x32xf32>
    %cst_137 = arith.constant 1.000000e+00 : f32
    %701 = vector.broadcast %cst_137 : f32 to vector<4x32xf32>
    %702 = arith.addf %701, %700 : vector<4x32xf32>
    %703 = arith.divf %701, %702 : vector<4x32xf32>
    %704 = vector.extract_strided_slice %703 {offsets = [0, 0], sizes = [4, 16], strides = [1, 1]} : vector<4x32xf32> to vector<4x16xf32>
    %705 = vector.extract_strided_slice %703 {offsets = [0, 16], sizes = [4, 16], strides = [1, 1]} : vector<4x32xf32> to vector<4x16xf32>
    %706 = vector.extract_strided_slice %695 {offsets = [0, 32], sizes = [4, 16], strides = [1, 1]} : vector<4x48xf32> to vector<4x16xf32>
    %707 = vector.broadcast %538 : vector<1x16xf32> to vector<4x16xf32>
    %708 = arith.addf %706, %707 : vector<4x16xf32>
    %709 = arith.mulf %704, %708 : vector<4x16xf32>
    %710 = vector.broadcast %537 : vector<1x16xf32> to vector<4x16xf32>
    %711 = arith.addf %710, %709 : vector<4x16xf32>
    %712 = math.tanh %711 : vector<4x16xf32>
    %cst_138 = arith.constant 1.000000e+00 : f32
    %713 = vector.broadcast %cst_138 : f32 to vector<4x16xf32>
    %714 = arith.subf %713, %705 : vector<4x16xf32>
    %715 = arith.mulf %714, %712 : vector<4x16xf32>
    %716 = arith.mulf %705, %691 : vector<4x16xf32>
    %717 = arith.addf %715, %716 : vector<4x16xf32>
    %c6 = arith.constant 6 : index
    %c0_139 = arith.constant 0 : index
    %c0_140 = arith.constant 0 : index
    %718 = vector.load %arg20[%c6, %c0_139, %c0_140] : memref<8x4x16xf32, #tpu.memory_space<vmem>>, vector<1x4x16xf32>
    %719 = vector.shape_cast %718 : vector<1x4x16xf32> to vector<4x16xf32>
    %720 = vector.shape_cast %717 : vector<4x16xf32> to vector<1x4x16xf32>
    tpu.vector_store %arg20[%c6, %c0_139, %c0_140], %720 {strides = array<i32>} : memref<8x4x16xf32, #tpu.memory_space<vmem>>, vector<1x4x16xf32>,
    %cst_141 = arith.constant dense<0.000000e+00> : vector<4x48xf32>
    %721 = tpu.matmul %717, %531, %cst_141 {dimension_numbers = #tpu.dot_dimension_numbers<[1], [0], [0], [1], [0, 0, 1, 1], [], []>} : vector<4x16xf32>, vector<16x48xf32>, vector<4x48xf32> -> vector<4x48xf32>
    %722 = vector.extract_strided_slice %721 {offsets = [0, 0], sizes = [4, 32], strides = [1, 1]} : vector<4x48xf32> to vector<4x32xf32>
    %723 = vector.broadcast %536 : vector<1x32xf32> to vector<4x32xf32>
    %724 = arith.addf %722, %723 : vector<4x32xf32>
    %725 = arith.negf %724 : vector<4x32xf32>
    %726 = math.exp %725 : vector<4x32xf32>
    %cst_142 = arith.constant 1.000000e+00 : f32
    %727 = vector.broadcast %cst_142 : f32 to vector<4x32xf32>
    %728 = arith.addf %727, %726 : vector<4x32xf32>
    %729 = arith.divf %727, %728 : vector<4x32xf32>
    %730 = vector.extract_strided_slice %729 {offsets = [0, 0], sizes = [4, 16], strides = [1, 1]} : vector<4x32xf32> to vector<4x16xf32>
    %731 = vector.extract_strided_slice %729 {offsets = [0, 16], sizes = [4, 16], strides = [1, 1]} : vector<4x32xf32> to vector<4x16xf32>
    %732 = vector.extract_strided_slice %721 {offsets = [0, 32], sizes = [4, 16], strides = [1, 1]} : vector<4x48xf32> to vector<4x16xf32>
    %733 = vector.broadcast %538 : vector<1x16xf32> to vector<4x16xf32>
    %734 = arith.addf %732, %733 : vector<4x16xf32>
    %735 = arith.mulf %730, %734 : vector<4x16xf32>
    %736 = vector.broadcast %537 : vector<1x16xf32> to vector<4x16xf32>
    %737 = arith.addf %736, %735 : vector<4x16xf32>
    %738 = math.tanh %737 : vector<4x16xf32>
    %cst_143 = arith.constant 1.000000e+00 : f32
    %739 = vector.broadcast %cst_143 : f32 to vector<4x16xf32>
    %740 = arith.subf %739, %731 : vector<4x16xf32>
    %741 = arith.mulf %740, %738 : vector<4x16xf32>
    %742 = arith.mulf %731, %717 : vector<4x16xf32>
    %743 = arith.addf %741, %742 : vector<4x16xf32>
    %c7 = arith.constant 7 : index
    %c0_144 = arith.constant 0 : index
    %c0_145 = arith.constant 0 : index
    %744 = vector.load %arg20[%c7, %c0_144, %c0_145] : memref<8x4x16xf32, #tpu.memory_space<vmem>>, vector<1x4x16xf32>
    %745 = vector.shape_cast %744 : vector<1x4x16xf32> to vector<4x16xf32>
    %746 = vector.shape_cast %743 : vector<4x16xf32> to vector<1x4x16xf32>
    tpu.vector_store %arg20[%c7, %c0_144, %c0_145], %746 {strides = array<i32>} : memref<8x4x16xf32, #tpu.memory_space<vmem>>, vector<1x4x16xf32>,
    %c0_146 = arith.constant 0 : index
    %c0_147 = arith.constant 0 : index
    %c0_148 = arith.constant 0 : index
    %747 = vector.load %arg20[%c0_146, %c0_147, %c0_148] : memref<8x4x16xf32, #tpu.memory_space<vmem>>, vector<8x4x16xf32>
    %748 = vector.shape_cast %747 : vector<8x4x16xf32> to vector<32x16xf32>
    %c0_149 = arith.constant 0 : index
    %c0_150 = arith.constant 0 : index
    %749 = vector.load %arg15[%c0_149, %c0_150] : memref<16x4xf32, #tpu.memory_space<vmem>>, vector<16x4xf32>
    %cst_151 = arith.constant dense<0.000000e+00> : vector<32x4xf32>
    %750 = tpu.matmul %748, %749, %cst_151 {dimension_numbers = #tpu.dot_dimension_numbers<[1], [0], [0], [1], [0, 0, 1, 1], [], []>} : vector<32x16xf32>, vector<16x4xf32>, vector<32x4xf32> -> vector<32x4xf32>
    %c0_152 = arith.constant 0 : index
    %c0_153 = arith.constant 0 : index
    %751 = vector.load %arg16[%c0_152, %c0_153] : memref<1x4xf32, #tpu.memory_space<vmem>>, vector<1x4xf32>
    %752 = vector.broadcast %751 : vector<1x4xf32> to vector<32x4xf32>
    %753 = arith.addf %750, %752 : vector<32x4xf32>
    %754 = vector.shape_cast %753 : vector<32x4xf32> to vector<8x4x4xf32>
    %c0_154 = arith.constant 0 : index
    %c0_155 = arith.constant 0 : index
    %c0_156 = arith.constant 0 : index
    %755 = vector.load %arg19[%c0_154, %c0_155, %c0_156] : memref<8x4x4xf32, #tpu.memory_space<vmem>>, vector<8x4x4xf32>
    tpu.vector_store %arg19[%c0_154, %c0_155, %c0_156], %754 {strides = array<i32>} : memref<8x4x4xf32, #tpu.memory_space<vmem>>, vector<8x4x4xf32>,
    %cst_157 = arith.constant 0.000000e+00 : f32
    %756 = vector.broadcast %cst_157 : f32 to vector<16x4xf32>
    %757 = vector.extract_strided_slice %747 {offsets = [0, 0, 0], sizes = [8, 2, 16], strides = [1, 1, 1]} : vector<8x4x16xf32> to vector<8x2x16xf32>
    %758 = vector.shape_cast %757 : vector<8x2x16xf32> to vector<16x16xf32>
    %c0_158 = arith.constant 0 : index
    %c0_159 = arith.constant 0 : index
    %c0_160 = arith.constant 0 : index
    %759 = vector.load %arg17[%c0_158, %c0_159, %c0_160] : memref<2x16x4xf32, #tpu.memory_space<vmem>>, vector<1x16x4xf32>
    %760 = vector.shape_cast %759 : vector<1x16x4xf32> to vector<16x4xf32>
    %cst_161 = arith.constant dense<0.000000e+00> : vector<16x4xf32>
    %761 = tpu.matmul %758, %760, %cst_161 {dimension_numbers = #tpu.dot_dimension_numbers<[1], [0], [0], [1], [0, 0, 1, 1], [], []>} : vector<16x16xf32>, vector<16x4xf32>, vector<16x4xf32> -> vector<16x4xf32>
    %762 = arith.addf %756, %761 : vector<16x4xf32>
    %763 = vector.extract_strided_slice %747 {offsets = [0, 2, 0], sizes = [8, 2, 16], strides = [1, 1, 1]} : vector<8x4x16xf32> to vector<8x2x16xf32>
    %764 = vector.shape_cast %763 : vector<8x2x16xf32> to vector<16x16xf32>
    %c1_162 = arith.constant 1 : index
    %c0_163 = arith.constant 0 : index
    %c0_164 = arith.constant 0 : index
    %765 = vector.load %arg17[%c1_162, %c0_163, %c0_164] : memref<2x16x4xf32, #tpu.memory_space<vmem>>, vector<1x16x4xf32>
    %766 = vector.shape_cast %765 : vector<1x16x4xf32> to vector<16x4xf32>
    %cst_165 = arith.constant dense<0.000000e+00> : vector<16x4xf32>
    %767 = tpu.matmul %764, %766, %cst_165 {dimension_numbers = #tpu.dot_dimension_numbers<[1], [0], [0], [1], [0, 0, 1, 1], [], []>} : vector<16x16xf32>, vector<16x4xf32>, vector<16x4xf32> -> vector<16x4xf32>
    %768 = arith.addf %762, %767 : vector<16x4xf32>
    %c0_166 = arith.constant 0 : index
    %c0_167 = arith.constant 0 : index
    %769 = vector.load %arg18[%c0_166, %c0_167] : memref<1x4xf32, #tpu.memory_space<vmem>>, vector<1x4xf32>
    %770 = vector.broadcast %769 : vector<1x4xf32> to vector<16x4xf32>
    %771 = arith.addf %768, %770 : vector<16x4xf32>
    %772 = vector.shape_cast %771 : vector<16x4xf32> to vector<8x2x4xf32>
    %c0_168 = arith.constant 0 : index
    %c0_169 = arith.constant 0 : index
    %c0_170 = arith.constant 0 : index
    %773 = vector.load %arg23[%c0_168, %c0_169, %c0_170] : memref<8x2x4xf32, #tpu.memory_space<vmem>>, vector<8x2x4xf32>
    tpu.vector_store %arg23[%c0_168, %c0_169, %c0_170], %772 {strides = array<i32>} : memref<8x2x4xf32, #tpu.memory_space<vmem>>, vector<8x2x4xf32>,
    return
  }
}

</mosaic_0001>

<llo_original>
// kernel: tpu_custom_call.1
$region0: #{tpu_custom_call.1}
  #allocation0 [shape = 'u32[]', space=smem, size = 0x4, offset = 0x4, fixed_abs, tag = 'smem constant byte address 0x4 - core index']
  #allocation1 [shape = 'u32[72,128]{1,0:T(1,128)}', space=vmem, size = 0x9000, scoped, tag = 'internal scratch']
  %s0 = inlined_call_operand.vmem [shape: f32[8,4,4], index: 0, kind: input, shape index: {}]
  %s1 = inlined_call_operand.vmem [shape: f32[4,16], index: 1, kind: input, shape index: {}]
  %s2 = inlined_call_operand.vmem [shape: f32[4,24], index: 2, kind: input, shape index: {}]
  %s3 = inlined_call_operand.vmem [shape: f32[8,24], index: 3, kind: input, shape index: {}]
  %s4 = inlined_call_operand.vmem [shape: f32[1,24], index: 4, kind: input, shape index: {}]
  %s5 = inlined_call_operand.vmem [shape: f32[1,24], index: 5, kind: input, shape index: {}]
  %s6 = inlined_call_operand.vmem [shape: f32[4,24], index: 6, kind: input, shape index: {}]
  %s7 = inlined_call_operand.vmem [shape: f32[8,24], index: 7, kind: input, shape index: {}]
  %s8 = inlined_call_operand.vmem [shape: f32[1,24], index: 8, kind: input, shape index: {}]
  %s9 = inlined_call_operand.vmem [shape: f32[1,24], index: 9, kind: input, shape index: {}]
  %s10 = inlined_call_operand.vmem [shape: f32[16,32], index: 10, kind: input, shape index: {}]
  %s11 = inlined_call_operand.vmem [shape: f32[1,32], index: 11, kind: input, shape index: {}]
  %s12 = inlined_call_operand.vmem [shape: f32[16,48], index: 12, kind: input, shape index: {}]
  %s13 = inlined_call_operand.vmem [shape: f32[1,48], index: 13, kind: input, shape index: {}]
  %s14 = inlined_call_operand.vmem [shape: f32[1,48], index: 14, kind: input, shape index: {}]
  %s15 = inlined_call_operand.vmem [shape: f32[16,4], index: 15, kind: input, shape index: {}]
  %s16 = inlined_call_operand.vmem [shape: f32[1,4], index: 16, kind: input, shape index: {}]
  %s17 = inlined_call_operand.vmem [shape: f32[2,16,4], index: 17, kind: input, shape index: {}]
  %s18 = inlined_call_operand.vmem [shape: f32[1,4], index: 18, kind: input, shape index: {}]
  %s19 = inlined_call_operand.vmem [shape: f32[8,4,4], index: 19, kind: output, shape index: {0}]
  %s20 = inlined_call_operand.hbm [shape: f32[8,4,16], index: 20, kind: output, shape index: {1}]
  %s21 = inlined_call_operand.hbm [shape: f32[4,16], index: 21, kind: output, shape index: {2}]
  %s22 = inlined_call_operand.hbm [shape: f32[4,16], index: 22, kind: output, shape index: {3}]
  %s23 = inlined_call_operand.vmem [shape: f32[8,2,4], index: 23, kind: output, shape index: {4}]
  %24 = xla_tuple %s19, %s20, %s21, %s22, %s23
  %s25 = sld [smem:[#allocation0]]
  $region118: #{tpu_custom_call.1} parent=0
    _
  %s27 = ssub.s32 1, %s25
  %s28 = scalar_select 0, %s27, %s25
  $region1: #{tpu_custom_call.1} parent=0
    #allocation2 [shape = 'u8[16384]{0}', space=vmem, size = 0x4000, scoped, tag = 'output window, operand 1, single buffered']
    #allocation3 [shape = 's32[1]{0}', space=sflag, size = 0x4, scoped, tag = 'scoped memory for tpu_custom_call.1']
    #allocation4 [shape = 'u8[2048]{0}', space=vmem, size = 0x800, scoped, tag = 'output window, operand 2, single buffered']
    #allocation5 [shape = 's32[1]{0}', space=sflag, size = 0x4, scoped, tag = 'scoped memory for tpu_custom_call.1']
    #allocation6 [shape = 'u8[2048]{0}', space=vmem, size = 0x800, scoped, tag = 'output window, operand 3, single buffered']
    %29 = vsyncpa [#allocation3], 0
    %30 = vsyncpa [#allocation5], 0
    // Predicated region
    $region2: #{tpu_custom_call.1} parent=1 // pred_check
      _
    $region3: #{tpu_custom_call.1} parent=1 // pred_check_branch
      %32 = sbr.rel (0) target = $region5
    $region4: #{tpu_custom_call.1} parent=1 // pred_region
      _
    $region5: #{tpu_custom_call.1} parent=1 // pred_fallthru
      _
    // Predicated region
    $region6: #{tpu_custom_call.1} parent=1 // pred_check
      _
    $region7: #{tpu_custom_call.1} parent=1 // pred_check_branch
      %34 = sbr.rel (0) target = $region9
    $region8: #{tpu_custom_call.1} parent=1 // pred_region
      _
    $region9: #{tpu_custom_call.1} parent=1 // pred_fallthru
      _
    // Predicated region
    $region10: #{tpu_custom_call.1} parent=1 // pred_check
      _
    $region11: #{tpu_custom_call.1} parent=1 // pred_check_branch
      %36 = sbr.rel (0) target = $region13
    $region12: #{tpu_custom_call.1} parent=1 // pred_region
      _
    $region13: #{tpu_custom_call.1} parent=1 // pred_fallthru
      _
    // Predicated region
    $region14: #{tpu_custom_call.1} parent=1 // pred_check
      _
    $region15: #{tpu_custom_call.1} parent=1 // pred_check_branch
      %38 = sbr.rel (0) target = $region17
    $region16: #{tpu_custom_call.1} parent=1 // pred_region
      _
    $region17: #{tpu_custom_call.1} parent=1 // pred_fallthru
      _
    // Predicated region
    $region18: #{tpu_custom_call.1} parent=1 // pred_check
      _
    $region19: #{tpu_custom_call.1} parent=1 // pred_check_branch
      %40 = sbr.rel (0) target = $region21
    $region20: #{tpu_custom_call.1} parent=1 // pred_region
      _
    $region21: #{tpu_custom_call.1} parent=1 // pred_fallthru
      _
    // Predicated region
    $region22: #{tpu_custom_call.1} parent=1 // pred_check
      _
    $region23: #{tpu_custom_call.1} parent=1 // pred_check_branch
      %42 = sbr.rel (0) target = $region25
    $region24: #{tpu_custom_call.1} parent=1 // pred_region
      _
    $region25: #{tpu_custom_call.1} parent=1 // pred_fallthru
      _
    // Predicated region
    $region26: #{tpu_custom_call.1} parent=1 // pred_check
      _
    $region27: #{tpu_custom_call.1} parent=1 // pred_check_branch
      %44 = sbr.rel (0) target = $region29
    $region28: #{tpu_custom_call.1} parent=1 // pred_region
      _
    $region29: #{tpu_custom_call.1} parent=1 // pred_fallthru
      _
    // Predicated region
    $region30: #{tpu_custom_call.1} parent=1 // pred_check
      _
    $region31: #{tpu_custom_call.1} parent=1 // pred_check_branch
      %46 = sbr.rel (0) target = $region33
    $region32: #{tpu_custom_call.1} parent=1 // pred_region
      _
    $region33: #{tpu_custom_call.1} parent=1 // pred_fallthru
      _
    // Predicated region
    $region34: #{tpu_custom_call.1} parent=1 // pred_check
      _
    $region35: #{tpu_custom_call.1} parent=1 // pred_check_branch
      %48 = sbr.rel (0) target = $region37
    $region36: #{tpu_custom_call.1} parent=1 // pred_region
      _
    $region37: #{tpu_custom_call.1} parent=1 // pred_fallthru
      _
    // Predicated region
    $region38: #{tpu_custom_call.1} parent=1 // pred_check
      _
    $region39: #{tpu_custom_call.1} parent=1 // pred_check_branch
      %50 = sbr.rel (0) target = $region41
    $region40: #{tpu_custom_call.1} parent=1 // pred_region
      _
    $region41: #{tpu_custom_call.1} parent=1 // pred_fallthru
      _
    // Predicated region
    $region42: #{tpu_custom_call.1} parent=1 // pred_check
      _
    $region43: #{tpu_custom_call.1} parent=1 // pred_check_branch
      %52 = sbr.rel (0) target = $region45
    $region44: #{tpu_custom_call.1} parent=1 // pred_region
      _
    $region45: #{tpu_custom_call.1} parent=1 // pred_fallthru
      _
    // Predicated region
    $region46: #{tpu_custom_call.1} parent=1 // pred_check
      _
    $region47: #{tpu_custom_call.1} parent=1 // pred_check_branch
      %54 = sbr.rel (0) target = $region49
    $region48: #{tpu_custom_call.1} parent=1 // pred_region
      _
    $region49: #{tpu_custom_call.1} parent=1 // pred_fallthru
      _
    // Predicated region
    $region50: #{tpu_custom_call.1} parent=1 // pred_check
      _
    $region51: #{tpu_custom_call.1} parent=1 // pred_check_branch
      %56 = sbr.rel (0) target = $region53
    $region52: #{tpu_custom_call.1} parent=1 // pred_region
      _
    $region53: #{tpu_custom_call.1} parent=1 // pred_fallthru
      _
    // Predicated region
    $region54: #{tpu_custom_call.1} parent=1 // pred_check
      _
    $region55: #{tpu_custom_call.1} parent=1 // pred_check_branch
      %58 = sbr.rel (0) target = $region57
    $region56: #{tpu_custom_call.1} parent=1 // pred_region
      _
    $region57: #{tpu_custom_call.1} parent=1 // pred_fallthru
      _
    // Predicated region
    $region58: #{tpu_custom_call.1} parent=1 // pred_check
      _
    $region59: #{tpu_custom_call.1} parent=1 // pred_check_branch
      %60 = sbr.rel (0) target = $region61
    $region60: #{tpu_custom_call.1} parent=1 // pred_region
      _
    $region61: #{tpu_custom_call.1} parent=1 // pred_fallthru
      _
    // Predicated region
    $region62: #{tpu_custom_call.1} parent=1 // pred_check
      _
    $region63: #{tpu_custom_call.1} parent=1 // pred_check_branch
      %62 = sbr.rel (0) target = $region65
    $region64: #{tpu_custom_call.1} parent=1 // pred_region
      _
    $region65: #{tpu_custom_call.1} parent=1 // pred_fallthru
      _
    // Predicated region
    $region66: #{tpu_custom_call.1} parent=1 // pred_check
      _
    $region67: #{tpu_custom_call.1} parent=1 // pred_check_branch
      %64 = sbr.rel (0) target = $region69
    $region68: #{tpu_custom_call.1} parent=1 // pred_region
      _
    $region69: #{tpu_custom_call.1} parent=1 // pred_fallthru
      _
    // Predicated region
    $region70: #{tpu_custom_call.1} parent=1 // pred_check
      _
    $region71: #{tpu_custom_call.1} parent=1 // pred_check_branch
      %66 = sbr.rel (0) target = $region73
    $region72: #{tpu_custom_call.1} parent=1 // pred_region
      _
    $region73: #{tpu_custom_call.1} parent=1 // pred_fallthru
      _
    // Predicated region
    $region74: #{tpu_custom_call.1} parent=1 // pred_check
      _
    $region75: #{tpu_custom_call.1} parent=1 // pred_check_branch
      %68 = sbr.rel (0) target = $region77
    $region76: #{tpu_custom_call.1} parent=1 // pred_region
      _
    $region77: #{tpu_custom_call.1} parent=1 // pred_fallthru
      _
    %v69 = vld [vmem:[%s0] sm:$0xf]
    %v70 = vld [vmem:[%s0 + $0x4] sm:$0xf]
    %v71 = vld [vmem:[%s0 + $0x8] sm:$0xf]
    %v72 = vld [vmem:[%s0 + $0xc] sm:$0xf]
    %v73 = vld [vmem:[%s0 + $0x10] sm:$0xf]
    %v74 = vld [vmem:[%s0 + $0x14] sm:$0xf]
    %v75 = vld [vmem:[%s0 + $0x18] sm:$0xf]
    %v76 = vld [vmem:[%s0 + $0x1c] sm:$0xf]
    %v77 = vld [vmem:[%s2] sm:$0xf]
    %v78 = vld [vmem:[%s3] sm:$0xff]
    %v79 = vld [vmem:[%s6] sm:$0xf]
    %v80 = vld [vmem:[%s7] sm:$0xff]
    %v81 = vld [vmem:[%s4] sm:$0x1]
    %v82 = vld [vmem:[%s5] sm:$0x1]
    %v83 = vld [vmem:[%s8] sm:$0x1]
    %v84 = vld [vmem:[%s9] sm:$0x1]
    %v85 = vadd.f32 %v81, %v82
    %v86 = vadd.f32 %v83, %v84
    %vm87 = vcmask 31744
    %v89 = vsel %vm87, %v69, 0
    %vm91 = vcmask 1043456
    %v93 = vsel %vm91, %v77, 0
    %95 = vmatpush.msra.mxu0 0.0
    %96 = vmatpush.msra.mxu0 0.0
    %97 = vmatpush.msra.mxu0 0.0
    %98 = vmatpush.msra.mxu0 0.0
    %99 = vmatpush.msra.mxu0 0.0
    %100 = vmatpush.msra.mxu0 0.0
    %101 = vmatpush.msra.mxu0 0.0
    %102 = vmatpush.msra.mxu0 0.0
    %103 = vmatpush.msra.mxu0 0.0
    %104 = vmatpush.msra.mxu0 0.0
    %105 = vmatpush.msra.mxu0 0.0
    %106 = vmatpush.msra.mxu0 0.0
    %107 = vmatpush.msra.mxu0 0.0
    %108 = vmatpush.msra.mxu0 0.0
    %109 = vmatpush.msra.mxu0 0.0
    %110 = vmatpush.msra.mxu0 %v93
    %111 = vmatmul.f32.gmra.mxu0 %v89
    %v112 = vpop.f32.mrf.mxu0
    %v113 = vadd.f32 0.0, %v112
    %114 = vdwg.mxu0
    %vm115 = vcmask 64512
    %v117 = vsel %vm115, 0.0, 0
    %119 = vmatpush.msra.mxu0 0.0
    %120 = vmatpush.msra.mxu0 0.0
    %121 = vmatpush.msra.mxu0 0.0
    %122 = vmatpush.msra.mxu0 0.0
    %123 = vmatpush.msra.mxu0 0.0
    %124 = vmatpush.msra.mxu0 0.0
    %125 = vmatpush.msra.mxu0 0.0
    %126 = vmatpush.msra.mxu0 0.0
    %127 = vmatpush.msra.mxu0 0.0
    %128 = vmatpush.msra.mxu0 0.0
    %129 = vmatpush.msra.mxu0 0.0
    %130 = vmatpush.msra.mxu0 0.0
    %131 = vmatpush.msra.mxu0 0.0
    %132 = vmatpush.msra.mxu0 0.0
    %133 = vmatpush.msra.mxu0 0.0
    %134 = vmatpush.msra.mxu0 %v78
    %135 = vmatmul.f32.gmra.mxu0 %v117
    %v136 = vpop.f32.mrf.mxu0
    %v137 = vadd.f32 0.0, %v136
    %138 = vdwg.mxu0
    %v139 = vadd.f32 %v113, %v137
    %v141 = vperm.slane %v85, 0
    %v143 = vadd.f32 %v139, %v141
    %v144 = vxor.u32 %v143, 2147483648
    %v145 = vmul.f32 %v144, 1.442695
    %v146 = vpow.pop %v145
    %v147 = vadd.f32 %v146, 1.0
    %v148 = vrcp.pop %v147
    %v149 = vmul.f32 %v147, %v148
    %v150 = vsub.f32 1.0, %v149
    %v151 = vmul.f32 %v148, %v150
    %v152 = vadd.f32 %v148, %v151
    %vm153 = vweird.f32 %v147
    %vm154 = vweird.f32 %v148
    %vm155 = vmor %vm153, %vm154
    %v156 = vsel %vm155, %v148, %v152
    %v157 = vand.u32 2147483647, %v147
    %vm158 = vcmp.eq.f32.partialorder %v157, 8.507059e+37
    %v159 = vand.u32 %v147, 2147483648
    %v160 = vor.u32 1.1754944e-38, %v159
    %v161 = vsel %vm158, %v160, %v156
    %v162 = vmul.f32 1.0, %v161
    %v164 = vperm.slane %v81, 0
    %v166 = vadd.f32 %v113, %v164
    %v168 = vperm.slane %v82, 0
    %v170 = vadd.f32 %v137, %v168
    %172 = vrot.lane.b32.xlu0 %v170, 112
    %v173 = vpop.permute.xlu0 %172
    %v175 = vmul.f32 %v162, %v173
    %177 = vrot.lane.b32.xlu0 %v175, 16
    %v178 = vpop.permute.xlu0 %177
    %v180 = vadd.f32 %v166, %v178
    %v181 = vtanh.pop %v180
    %v182 = vsub.f32 1.0, %v162
    %184 = vrot.lane.b32.xlu0 %v181, 120
    %v185 = vpop.permute.xlu0 %184
    %v187 = vmul.f32 %v182, %v185
    %v188 = vmul.f32 %v162, 0.0
    %v189 = vadd.f32 %v187, %v188
    %v191 = vsel %vm87, %v70, 0
    %193 = vmatpush.msra.mxu0 0.0
    %194 = vmatpush.msra.mxu0 0.0
    %195 = vmatpush.msra.mxu0 0.0
    %196 = vmatpush.msra.mxu0 0.0
    %197 = vmatpush.msra.mxu0 0.0
    %198 = vmatpush.msra.mxu0 0.0
    %199 = vmatpush.msra.mxu0 0.0
    %200 = vmatpush.msra.mxu0 0.0
    %201 = vmatpush.msra.mxu0 0.0
    %202 = vmatpush.msra.mxu0 0.0
    %203 = vmatpush.msra.mxu0 0.0
    %204 = vmatpush.msra.mxu0 0.0
    %205 = vmatpush.msra.mxu0 0.0
    %206 = vmatpush.msra.mxu0 0.0
    %207 = vmatpush.msra.mxu0 0.0
    %208 = vmatpush.msra.mxu0 %v93
    %209 = vmatmul.f32.gmra.mxu0 %v191
    %v210 = vpop.f32.mrf.mxu0
    %v211 = vadd.f32 0.0, %v210
    %212 = vdwg.mxu0
    %214 = vrot.lane.b32.xlu0 %v189, 120
    %v215 = vpop.permute.xlu0 %214
    %v216 = vsel %vm115, %v215, 0
    %218 = vmatpush.msra.mxu0 0.0
    %219 = vmatpush.msra.mxu0 0.0
    %220 = vmatpush.msra.mxu0 0.0
    %221 = vmatpush.msra.mxu0 0.0
    %222 = vmatpush.msra.mxu0 0.0
    %223 = vmatpush.msra.mxu0 0.0
    %224 = vmatpush.msra.mxu0 0.0
    %225 = vmatpush.msra.mxu0 0.0
    %226 = vmatpush.msra.mxu0 0.0
    %227 = vmatpush.msra.mxu0 0.0
    %228 = vmatpush.msra.mxu0 0.0
    %229 = vmatpush.msra.mxu0 0.0
    %230 = vmatpush.msra.mxu0 0.0
    %231 = vmatpush.msra.mxu0 0.0
    %232 = vmatpush.msra.mxu0 0.0
    %233 = vmatpush.msra.mxu0 %v78
    %234 = vmatmul.f32.gmra.mxu0 %v216
    %v235 = vpop.f32.mrf.mxu0
    %v236 = vadd.f32 0.0, %v235
    %237 = vdwg.mxu0
    %v238 = vadd.f32 %v211, %v236
    %v239 = vadd.f32 %v238, %v141
    %v240 = vxor.u32 %v239, 2147483648
    %v241 = vmul.f32 %v240, 1.442695
    %v242 = vpow.pop %v241
    %v243 = vadd.f32 %v242, 1.0
    %v244 = vrcp.pop %v243
    %v245 = vmul.f32 %v243, %v244
    %v246 = vsub.f32 1.0, %v245
    %v247 = vmul.f32 %v244, %v246
    %v248 = vadd.f32 %v244, %v247
    %vm249 = vweird.f32 %v243
    %vm250 = vweird.f32 %v244
    %vm251 = vmor %vm249, %vm250
    %v252 = vsel %vm251, %v244, %v248
    %v253 = vand.u32 2147483647, %v243
    %vm254 = vcmp.eq.f32.partialorder %v253, 8.507059e+37
    %v255 = vand.u32 %v243, 2147483648
    %v256 = vor.u32 1.1754944e-38, %v255
    %v257 = vsel %vm254, %v256, %v252
    %v258 = vmul.f32 1.0, %v257
    %v259 = vadd.f32 %v211, %v164
    %v260 = vadd.f32 %v236, %v168
    %262 = vrot.lane.b32.xlu0 %v260, 112
    %v263 = vpop.permute.xlu0 %262
    %v265 = vmul.f32 %v258, %v263
    %267 = vrot.lane.b32.xlu0 %v265, 16
    %v268 = vpop.permute.xlu0 %267
    %v270 = vadd.f32 %v259, %v268
    %v271 = vtanh.pop %v270
    %v272 = vsub.f32 1.0, %v258
    %274 = vrot.lane.b32.xlu0 %v271, 120
    %v275 = vpop.permute.xlu0 %274
    %v277 = vmul.f32 %v272, %v275
    %v278 = vmul.f32 %v258, %v189
    %v279 = vadd.f32 %v277, %v278
    %v281 = vsel %vm87, %v71, 0
    %283 = vmatpush.msra.mxu0 0.0
    %284 = vmatpush.msra.mxu0 0.0
    %285 = vmatpush.msra.mxu0 0.0
    %286 = vmatpush.msra.mxu0 0.0
    %287 = vmatpush.msra.mxu0 0.0
    %288 = vmatpush.msra.mxu0 0.0
    %289 = vmatpush.msra.mxu0 0.0
    %290 = vmatpush.msra.mxu0 0.0
    %291 = vmatpush.msra.mxu0 0.0
    %292 = vmatpush.msra.mxu0 0.0
    %293 = vmatpush.msra.mxu0 0.0
    %294 = vmatpush.msra.mxu0 0.0
    %295 = vmatpush.msra.mxu0 0.0
    %296 = vmatpush.msra.mxu0 0.0
    %297 = vmatpush.msra.mxu0 0.0
    %298 = vmatpush.msra.mxu0 %v93
    %299 = vmatmul.f32.gmra.mxu0 %v281
    %v300 = vpop.f32.mrf.mxu0
    %v301 = vadd.f32 0.0, %v300
    %302 = vdwg.mxu0
    %304 = vrot.lane.b32.xlu0 %v279, 120
    %v305 = vpop.permute.xlu0 %304
    %v306 = vsel %vm115, %v305, 0
    %308 = vmatpush.msra.mxu0 0.0
    %309 = vmatpush.msra.mxu0 0.0
    %310 = vmatpush.msra.mxu0 0.0
    %311 = vmatpush.msra.mxu0 0.0
    %312 = vmatpush.msra.mxu0 0.0
    %313 = vmatpush.msra.mxu0 0.0
    %314 = vmatpush.msra.mxu0 0.0
    %315 = vmatpush.msra.mxu0 0.0
    %316 = vmatpush.msra.mxu0 0.0
    %317 = vmatpush.msra.mxu0 0.0
    %318 = vmatpush.msra.mxu0 0.0
    %319 = vmatpush.msra.mxu0 0.0
    %320 = vmatpush.msra.mxu0 0.0
    %321 = vmatpush.msra.mxu0 0.0
    %322 = vmatpush.msra.mxu0 0.0
    %323 = vmatpush.msra.mxu0 %v78
    %324 = vmatmul.f32.gmra.mxu0 %v306
    %v325 = vpop.f32.mrf.mxu0
    %v326 = vadd.f32 0.0, %v325
    %327 = vdwg.mxu0
    %v328 = vadd.f32 %v301, %v326
    %v329 = vadd.f32 %v328, %v141
    %v330 = vxor.u32 %v329, 2147483648
    %v331 = vmul.f32 %v330, 1.442695
    %v332 = vpow.pop %v331
    %v333 = vadd.f32 %v332, 1.0
    %v334 = vrcp.pop %v333
    %v335 = vmul.f32 %v333, %v334
    %v336 = vsub.f32 1.0, %v335
    %v337 = vmul.f32 %v334, %v336
    %v338 = vadd.f32 %v334, %v337
    %vm339 = vweird.f32 %v333
    %vm340 = vweird.f32 %v334
    %vm341 = vmor %vm339, %vm340
    %v342 = vsel %vm341, %v334, %v338
    %v343 = vand.u32 2147483647, %v333
    %vm344 = vcmp.eq.f32.partialorder %v343, 8.507059e+37
    %v345 = vand.u32 %v333, 2147483648
    %v346 = vor.u32 1.1754944e-38, %v345
    %v347 = vsel %vm344, %v346, %v342
    %v348 = vmul.f32 1.0, %v347
    %v349 = vadd.f32 %v301, %v164
    %v350 = vadd.f32 %v326, %v168
    %352 = vrot.lane.b32.xlu0 %v350, 112
    %v353 = vpop.permute.xlu0 %352
    %v355 = vmul.f32 %v348, %v353
    %357 = vrot.lane.b32.xlu0 %v355, 16
    %v358 = vpop.permute.xlu0 %357
    %v360 = vadd.f32 %v349, %v358
    %v361 = vtanh.pop %v360
    %v362 = vsub.f32 1.0, %v348
    %364 = vrot.lane.b32.xlu0 %v361, 120
    %v365 = vpop.permute.xlu0 %364
    %v367 = vmul.f32 %v362, %v365
    %v368 = vmul.f32 %v348, %v279
    %v369 = vadd.f32 %v367, %v368
    %v371 = vsel %vm87, %v72, 0
    %373 = vmatpush.msra.mxu0 0.0
    %374 = vmatpush.msra.mxu0 0.0
    %375 = vmatpush.msra.mxu0 0.0
    %376 = vmatpush.msra.mxu0 0.0
    %377 = vmatpush.msra.mxu0 0.0
    %378 = vmatpush.msra.mxu0 0.0
    %379 = vmatpush.msra.mxu0 0.0
    %380 = vmatpush.msra.mxu0 0.0
    %381 = vmatpush.msra.mxu0 0.0
    %382 = vmatpush.msra.mxu0 0.0
    %383 = vmatpush.msra.mxu0 0.0
    %384 = vmatpush.msra.mxu0 0.0
    %385 = vmatpush.msra.mxu0 0.0
    %386 = vmatpush.msra.mxu0 0.0
    %387 = vmatpush.msra.mxu0 0.0
    %388 = vmatpush.msra.mxu0 %v93
    %389 = vmatmul.f32.gmra.mxu0 %v371
    %v390 = vpop.f32.mrf.mxu0
    %v391 = vadd.f32 0.0, %v390
    %392 = vdwg.mxu0
    %394 = vrot.lane.b32.xlu0 %v369, 120
    %v395 = vpop.permute.xlu0 %394
    %v396 = vsel %vm115, %v395, 0
    %398 = vmatpush.msra.mxu0 0.0
    %399 = vmatpush.msra.mxu0 0.0
    %400 = vmatpush.msra.mxu0 0.0
    %401 = vmatpush.msra.mxu0 0.0
    %402 = vmatpush.msra.mxu0 0.0
    %403 = vmatpush.msra.mxu0 0.0
    %404 = vmatpush.msra.mxu0 0.0
    %405 = vmatpush.msra.mxu0 0.0
    %406 = vmatpush.msra.mxu0 0.0
    %407 = vmatpush.msra.mxu0 0.0
    %408 = vmatpush.msra.mxu0 0.0
    %409 = vmatpush.msra.mxu0 0.0
    %410 = vmatpush.msra.mxu0 0.0
    %411 = vmatpush.msra.mxu0 0.0
    %412 = vmatpush.msra.mxu0 0.0
    %413 = vmatpush.msra.mxu0 %v78
    %414 = vmatmul.f32.gmra.mxu0 %v396
    %v415 = vpop.f32.mrf.mxu0
    %v416 = vadd.f32 0.0, %v415
    %417 = vdwg.mxu0
    %v418 = vadd.f32 %v391, %v416
    %v419 = vadd.f32 %v418, %v141
    %v420 = vxor.u32 %v419, 2147483648
    %v421 = vmul.f32 %v420, 1.442695
    %v422 = vpow.pop %v421
    %v423 = vadd.f32 %v422, 1.0
    %v424 = vrcp.pop %v423
    %v425 = vmul.f32 %v423, %v424
    %v426 = vsub.f32 1.0, %v425
    %v427 = vmul.f32 %v424, %v426
    %v428 = vadd.f32 %v424, %v427
    %vm429 = vweird.f32 %v423
    %vm430 = vweird.f32 %v424
    %vm431 = vmor %vm429, %vm430
    %v432 = vsel %vm431, %v424, %v428
    %v433 = vand.u32 2147483647, %v423
    %vm434 = vcmp.eq.f32.partialorder %v433, 8.507059e+37
    %v435 = vand.u32 %v423, 2147483648
    %v436 = vor.u32 1.1754944e-38, %v435
    %v437 = vsel %vm434, %v436, %v432
    %v438 = vmul.f32 1.0, %v437
    %v439 = vadd.f32 %v391, %v164
    %v440 = vadd.f32 %v416, %v168
    %442 = vrot.lane.b32.xlu0 %v440, 112
    %v443 = vpop.permute.xlu0 %442
    %v445 = vmul.f32 %v438, %v443
    %447 = vrot.lane.b32.xlu0 %v445, 16
    %v448 = vpop.permute.xlu0 %447
    %v450 = vadd.f32 %v439, %v448
    %v451 = vtanh.pop %v450
    %v452 = vsub.f32 1.0, %v438
    %454 = vrot.lane.b32.xlu0 %v451, 120
    %v455 = vpop.permute.xlu0 %454
    %v457 = vmul.f32 %v452, %v455
    %v458 = vmul.f32 %v438, %v369
    %v459 = vadd.f32 %v457, %v458
    %v461 = vsel %vm87, %v73, 0
    %463 = vmatpush.msra.mxu0 0.0
    %464 = vmatpush.msra.mxu0 0.0
    %465 = vmatpush.msra.mxu0 0.0
    %466 = vmatpush.msra.mxu0 0.0
    %467 = vmatpush.msra.mxu0 0.0
    %468 = vmatpush.msra.mxu0 0.0
    %469 = vmatpush.msra.mxu0 0.0
    %470 = vmatpush.msra.mxu0 0.0
    %471 = vmatpush.msra.mxu0 0.0
    %472 = vmatpush.msra.mxu0 0.0
    %473 = vmatpush.msra.mxu0 0.0
    %474 = vmatpush.msra.mxu0 0.0
    %475 = vmatpush.msra.mxu0 0.0
    %476 = vmatpush.msra.mxu0 0.0
    %477 = vmatpush.msra.mxu0 0.0
    %478 = vmatpush.msra.mxu0 %v93
    %479 = vmatmul.f32.gmra.mxu0 %v461
    %v480 = vpop.f32.mrf.mxu0
    %v481 = vadd.f32 0.0, %v480
    %482 = vdwg.mxu0
    %484 = vrot.lane.b32.xlu0 %v459, 120
    %v485 = vpop.permute.xlu0 %484
    %v486 = vsel %vm115, %v485, 0
    %488 = vmatpush.msra.mxu0 0.0
    %489 = vmatpush.msra.mxu0 0.0
    %490 = vmatpush.msra.mxu0 0.0
    %491 = vmatpush.msra.mxu0 0.0
    %492 = vmatpush.msra.mxu0 0.0
    %493 = vmatpush.msra.mxu0 0.0
    %494 = vmatpush.msra.mxu0 0.0
    %495 = vmatpush.msra.mxu0 0.0
    %496 = vmatpush.msra.mxu0 0.0
    %497 = vmatpush.msra.mxu0 0.0
    %498 = vmatpush.msra.mxu0 0.0
    %499 = vmatpush.msra.mxu0 0.0
    %500 = vmatpush.msra.mxu0 0.0
    %501 = vmatpush.msra.mxu0 0.0
    %502 = vmatpush.msra.mxu0 0.0
    %503 = vmatpush.msra.mxu0 %v78
    %504 = vmatmul.f32.gmra.mxu0 %v486
    %v505 = vpop.f32.mrf.mxu0
    %v506 = vadd.f32 0.0, %v505
    %507 = vdwg.mxu0
    %v508 = vadd.f32 %v481, %v506
    %v509 = vadd.f32 %v508, %v141
    %v510 = vxor.u32 %v509, 2147483648
    %v511 = vmul.f32 %v510, 1.442695
    %v512 = vpow.pop %v511
    %v513 = vadd.f32 %v512, 1.0
    %v514 = vrcp.pop %v513
    %v515 = vmul.f32 %v513, %v514
    %v516 = vsub.f32 1.0, %v515
    %v517 = vmul.f32 %v514, %v516
    %v518 = vadd.f32 %v514, %v517
    %vm519 = vweird.f32 %v513
    %vm520 = vweird.f32 %v514
    %vm521 = vmor %vm519, %vm520
    %v522 = vsel %vm521, %v514, %v518
    %v523 = vand.u32 2147483647, %v513
    %vm524 = vcmp.eq.f32.partialorder %v523, 8.507059e+37
    %v525 = vand.u32 %v513, 2147483648
    %v526 = vor.u32 1.1754944e-38, %v525
    %v527 = vsel %vm524, %v526, %v522
    %v528 = vmul.f32 1.0, %v527
    %v529 = vadd.f32 %v481, %v164
    %v530 = vadd.f32 %v506, %v168
    %532 = vrot.lane.b32.xlu0 %v530, 112
    %v533 = vpop.permute.xlu0 %532
    %v535 = vmul.f32 %v528, %v533
    %537 = vrot.lane.b32.xlu0 %v535, 16
    %v538 = vpop.permute.xlu0 %537
    %v540 = vadd.f32 %v529, %v538
    %v541 = vtanh.pop %v540
    %v542 = vsub.f32 1.0, %v528
    %544 = vrot.lane.b32.xlu0 %v541, 120
    %v545 = vpop.permute.xlu0 %544
    %v547 = vmul.f32 %v542, %v545
    %v548 = vmul.f32 %v528, %v459
    %v549 = vadd.f32 %v547, %v548
    %v551 = vsel %vm87, %v74, 0
    %553 = vmatpush.msra.mxu0 0.0
    %554 = vmatpush.msra.mxu0 0.0
    %555 = vmatpush.msra.mxu0 0.0
    %556 = vmatpush.msra.mxu0 0.0
    %557 = vmatpush.msra.mxu0 0.0
    %558 = vmatpush.msra.mxu0 0.0
    %559 = vmatpush.msra.mxu0 0.0
    %560 = vmatpush.msra.mxu0 0.0
    %561 = vmatpush.msra.mxu0 0.0
    %562 = vmatpush.msra.mxu0 0.0
    %563 = vmatpush.msra.mxu0 0.0
    %564 = vmatpush.msra.mxu0 0.0
    %565 = vmatpush.msra.mxu0 0.0
    %566 = vmatpush.msra.mxu0 0.0
    %567 = vmatpush.msra.mxu0 0.0
    %568 = vmatpush.msra.mxu0 %v93
    %569 = vmatmul.f32.gmra.mxu0 %v551
    %v570 = vpop.f32.mrf.mxu0
    %v571 = vadd.f32 0.0, %v570
    %572 = vdwg.mxu0
    %574 = vrot.lane.b32.xlu0 %v549, 120
    %v575 = vpop.permute.xlu0 %574
    %v576 = vsel %vm115, %v575, 0
    %578 = vmatpush.msra.mxu0 0.0
    %579 = vmatpush.msra.mxu0 0.0
    %580 = vmatpush.msra.mxu0 0.0
    %581 = vmatpush.msra.mxu0 0.0
    %582 = vmatpush.msra.mxu0 0.0
    %583 = vmatpush.msra.mxu0 0.0
    %584 = vmatpush.msra.mxu0 0.0
    %585 = vmatpush.msra.mxu0 0.0
    %586 = vmatpush.msra.mxu0 0.0
    %587 = vmatpush.msra.mxu0 0.0
    %588 = vmatpush.msra.mxu0 0.0
    %589 = vmatpush.msra.mxu0 0.0
    %590 = vmatpush.msra.mxu0 0.0
    %591 = vmatpush.msra.mxu0 0.0
    %592 = vmatpush.msra.mxu0 0.0
    %593 = vmatpush.msra.mxu0 %v78
    %594 = vmatmul.f32.gmra.mxu0 %v576
    %v595 = vpop.f32.mrf.mxu0
    %v596 = vadd.f32 0.0, %v595
    %597 = vdwg.mxu0
    %v598 = vadd.f32 %v571, %v596
    %v599 = vadd.f32 %v598, %v141
    %v600 = vxor.u32 %v599, 2147483648
    %v601 = vmul.f32 %v600, 1.442695
    %v602 = vpow.pop %v601
    %v603 = vadd.f32 %v602, 1.0
    %v604 = vrcp.pop %v603
    %v605 = vmul.f32 %v603, %v604
    %v606 = vsub.f32 1.0, %v605
    %v607 = vmul.f32 %v604, %v606
    %v608 = vadd.f32 %v604, %v607
    %vm609 = vweird.f32 %v603
    %vm610 = vweird.f32 %v604
    %vm611 = vmor %vm609, %vm610
    %v612 = vsel %vm611, %v604, %v608
    %v613 = vand.u32 2147483647, %v603
    %vm614 = vcmp.eq.f32.partialorder %v613, 8.507059e+37
    %v615 = vand.u32 %v603, 2147483648
    %v616 = vor.u32 1.1754944e-38, %v615
    %v617 = vsel %vm614, %v616, %v612
    %v618 = vmul.f32 1.0, %v617
    %v619 = vadd.f32 %v571, %v164
    %v620 = vadd.f32 %v596, %v168
    %622 = vrot.lane.b32.xlu0 %v620, 112
    %v623 = vpop.permute.xlu0 %622
    %v625 = vmul.f32 %v618, %v623
    %627 = vrot.lane.b32.xlu0 %v625, 16
    %v628 = vpop.permute.xlu0 %627
    %v630 = vadd.f32 %v619, %v628
    %v631 = vtanh.pop %v630
    %v632 = vsub.f32 1.0, %v618
    %634 = vrot.lane.b32.xlu0 %v631, 120
    %v635 = vpop.permute.xlu0 %634
    %v637 = vmul.f32 %v632, %v635
    %v638 = vmul.f32 %v618, %v549
    %v639 = vadd.f32 %v637, %v638
    %v641 = vsel %vm87, %v75, 0
    %643 = vmatpush.msra.mxu0 0.0
    %644 = vmatpush.msra.mxu0 0.0
    %645 = vmatpush.msra.mxu0 0.0
    %646 = vmatpush.msra.mxu0 0.0
    %647 = vmatpush.msra.mxu0 0.0
    %648 = vmatpush.msra.mxu0 0.0
    %649 = vmatpush.msra.mxu0 0.0
    %650 = vmatpush.msra.mxu0 0.0
    %651 = vmatpush.msra.mxu0 0.0
    %652 = vmatpush.msra.mxu0 0.0
    %653 = vmatpush.msra.mxu0 0.0
    %654 = vmatpush.msra.mxu0 0.0
    %655 = vmatpush.msra.mxu0 0.0
    %656 = vmatpush.msra.mxu0 0.0
    %657 = vmatpush.msra.mxu0 0.0
    %658 = vmatpush.msra.mxu0 %v93
    %659 = vmatmul.f32.gmra.mxu0 %v641
    %v660 = vpop.f32.mrf.mxu0
    %v661 = vadd.f32 0.0, %v660
    %662 = vdwg.mxu0
    %664 = vrot.lane.b32.xlu0 %v639, 120
    %v665 = vpop.permute.xlu0 %664
    %v666 = vsel %vm115, %v665, 0
    %668 = vmatpush.msra.mxu0 0.0
    %669 = vmatpush.msra.mxu0 0.0
    %670 = vmatpush.msra.mxu0 0.0
    %671 = vmatpush.msra.mxu0 0.0
    %672 = vmatpush.msra.mxu0 0.0
    %673 = vmatpush.msra.mxu0 0.0
    %674 = vmatpush.msra.mxu0 0.0
    %675 = vmatpush.msra.mxu0 0.0
    %676 = vmatpush.msra.mxu0 0.0
    %677 = vmatpush.msra.mxu0 0.0
    %678 = vmatpush.msra.mxu0 0.0
    %679 = vmatpush.msra.mxu0 0.0
    %680 = vmatpush.msra.mxu0 0.0
    %681 = vmatpush.msra.mxu0 0.0
    %682 = vmatpush.msra.mxu0 0.0
    %683 = vmatpush.msra.mxu0 %v78
    %684 = vmatmul.f32.gmra.mxu0 %v666
    %v685 = vpop.f32.mrf.mxu0
    %v686 = vadd.f32 0.0, %v685
    %687 = vdwg.mxu0
    %v688 = vadd.f32 %v661, %v686
    %v689 = vadd.f32 %v688, %v141
    %v690 = vxor.u32 %v689, 2147483648
    %v691 = vmul.f32 %v690, 1.442695
    %v692 = vpow.pop %v691
    %v693 = vadd.f32 %v692, 1.0
    %v694 = vrcp.pop %v693
    %v695 = vmul.f32 %v693, %v694
    %v696 = vsub.f32 1.0, %v695
    %v697 = vmul.f32 %v694, %v696
    %v698 = vadd.f32 %v694, %v697
    %vm699 = vweird.f32 %v693
    %vm700 = vweird.f32 %v694
    %vm701 = vmor %vm699, %vm700
    %v702 = vsel %vm701, %v694, %v698
    %v703 = vand.u32 2147483647, %v693
    %vm704 = vcmp.eq.f32.partialorder %v703, 8.507059e+37
    %v705 = vand.u32 %v693, 2147483648
    %v706 = vor.u32 1.1754944e-38, %v705
    %v707 = vsel %vm704, %v706, %v702
    %v708 = vmul.f32 1.0, %v707
    %v709 = vadd.f32 %v661, %v164
    %v710 = vadd.f32 %v686, %v168
    %712 = vrot.lane.b32.xlu0 %v710, 112
    %v713 = vpop.permute.xlu0 %712
    %v715 = vmul.f32 %v708, %v713
    %717 = vrot.lane.b32.xlu0 %v715, 16
    %v718 = vpop.permute.xlu0 %717
    %v720 = vadd.f32 %v709, %v718
    %v721 = vtanh.pop %v720
    %v722 = vsub.f32 1.0, %v708
    %724 = vrot.lane.b32.xlu0 %v721, 120
    %v725 = vpop.permute.xlu0 %724
    %v727 = vmul.f32 %v722, %v725
    %v728 = vmul.f32 %v708, %v639
    %v729 = vadd.f32 %v727, %v728
    %v731 = vsel %vm87, %v76, 0
    %733 = vmatpush.msra.mxu0 0.0
    %734 = vmatpush.msra.mxu0 0.0
    %735 = vmatpush.msra.mxu0 0.0
    %736 = vmatpush.msra.mxu0 0.0
    %737 = vmatpush.msra.mxu0 0.0
    %738 = vmatpush.msra.mxu0 0.0
    %739 = vmatpush.msra.mxu0 0.0
    %740 = vmatpush.msra.mxu0 0.0
    %741 = vmatpush.msra.mxu0 0.0
    %742 = vmatpush.msra.mxu0 0.0
    %743 = vmatpush.msra.mxu0 0.0
    %744 = vmatpush.msra.mxu0 0.0
    %745 = vmatpush.msra.mxu0 0.0
    %746 = vmatpush.msra.mxu0 0.0
    %747 = vmatpush.msra.mxu0 0.0
    %748 = vmatpush.msra.mxu0 %v93
    %749 = vmatmul.f32.gmra.mxu0 %v731
    %v750 = vpop.f32.mrf.mxu0
    %v751 = vadd.f32 0.0, %v750
    %752 = vdwg.mxu0
    %754 = vrot.lane.b32.xlu0 %v729, 120
    %v755 = vpop.permute.xlu0 %754
    %v756 = vsel %vm115, %v755, 0
    %758 = vmatpush.msra.mxu0 0.0
    %759 = vmatpush.msra.mxu0 0.0
    %760 = vmatpush.msra.mxu0 0.0
    %761 = vmatpush.msra.mxu0 0.0
    %762 = vmatpush.msra.mxu0 0.0
    %763 = vmatpush.msra.mxu0 0.0
    %764 = vmatpush.msra.mxu0 0.0
    %765 = vmatpush.msra.mxu0 0.0
    %766 = vmatpush.msra.mxu0 0.0
    %767 = vmatpush.msra.mxu0 0.0
    %768 = vmatpush.msra.mxu0 0.0
    %769 = vmatpush.msra.mxu0 0.0
    %770 = vmatpush.msra.mxu0 0.0
    %771 = vmatpush.msra.mxu0 0.0
    %772 = vmatpush.msra.mxu0 0.0
    %773 = vmatpush.msra.mxu0 %v78
    %774 = vmatmul.f32.gmra.mxu0 %v756
    %v775 = vpop.f32.mrf.mxu0
    %v776 = vadd.f32 0.0, %v775
    %777 = vdwg.mxu0
    %v778 = vadd.f32 %v751, %v776
    %v779 = vadd.f32 %v778, %v141
    %v780 = vxor.u32 %v779, 2147483648
    %v781 = vmul.f32 %v780, 1.442695
    %v782 = vpow.pop %v781
    %v783 = vadd.f32 %v782, 1.0
    %v784 = vrcp.pop %v783
    %v785 = vmul.f32 %v783, %v784
    %v786 = vsub.f32 1.0, %v785
    %v787 = vmul.f32 %v784, %v786
    %v788 = vadd.f32 %v784, %v787
    %vm789 = vweird.f32 %v783
    %vm790 = vweird.f32 %v784
    %vm791 = vmor %vm789, %vm790
    %v792 = vsel %vm791, %v784, %v788
    %v793 = vand.u32 2147483647, %v783
    %vm794 = vcmp.eq.f32.partialorder %v793, 8.507059e+37
    %v795 = vand.u32 %v783, 2147483648
    %v796 = vor.u32 1.1754944e-38, %v795
    %v797 = vsel %vm794, %v796, %v792
    %v798 = vmul.f32 1.0, %v797
    %v799 = vadd.f32 %v751, %v164
    %v800 = vadd.f32 %v776, %v168
    %802 = vrot.lane.b32.xlu0 %v800, 112
    %v803 = vpop.permute.xlu0 %802
    %v805 = vmul.f32 %v798, %v803
    %807 = vrot.lane.b32.xlu0 %v805, 16
    %v808 = vpop.permute.xlu0 %807
    %v810 = vadd.f32 %v799, %v808
    %v811 = vtanh.pop %v810
    %v812 = vsub.f32 1.0, %v798
    %814 = vrot.lane.b32.xlu0 %v811, 120
    %v815 = vpop.permute.xlu0 %814
    %v817 = vmul.f32 %v812, %v815
    %v818 = vmul.f32 %v798, %v729
    %v819 = vadd.f32 %v817, %v818
    %v821 = vsel %vm91, %v79, 0
    %823 = vmatpush.msra.mxu0 0.0
    %824 = vmatpush.msra.mxu0 0.0
    %825 = vmatpush.msra.mxu0 0.0
    %826 = vmatpush.msra.mxu0 0.0
    %827 = vmatpush.msra.mxu0 0.0
    %828 = vmatpush.msra.mxu0 0.0
    %829 = vmatpush.msra.mxu0 0.0
    %830 = vmatpush.msra.mxu0 0.0
    %831 = vmatpush.msra.mxu0 0.0
    %832 = vmatpush.msra.mxu0 0.0
    %833 = vmatpush.msra.mxu0 0.0
    %834 = vmatpush.msra.mxu0 0.0
    %835 = vmatpush.msra.mxu0 0.0
    %836 = vmatpush.msra.mxu0 0.0
    %837 = vmatpush.msra.mxu0 0.0
    %838 = vmatpush.msra.mxu0 %v821
    %839 = vmatmul.f32.gmra.mxu0 %v731
    %v840 = vpop.f32.mrf.mxu0
    %v841 = vadd.f32 0.0, %v840
    %842 = vdwg.mxu0
    %843 = vmatpush.msra.mxu0 0.0
    %844 = vmatpush.msra.mxu0 0.0
    %845 = vmatpush.msra.mxu0 0.0
    %846 = vmatpush.msra.mxu0 0.0
    %847 = vmatpush.msra.mxu0 0.0
    %848 = vmatpush.msra.mxu0 0.0
    %849 = vmatpush.msra.mxu0 0.0
    %850 = vmatpush.msra.mxu0 0.0
    %851 = vmatpush.msra.mxu0 0.0
    %852 = vmatpush.msra.mxu0 0.0
    %853 = vmatpush.msra.mxu0 0.0
    %854 = vmatpush.msra.mxu0 0.0
    %855 = vmatpush.msra.mxu0 0.0
    %856 = vmatpush.msra.mxu0 0.0
    %857 = vmatpush.msra.mxu0 0.0
    %858 = vmatpush.msra.mxu0 %v80
    %859 = vmatmul.f32.gmra.mxu0 %v117
    %v860 = vpop.f32.mrf.mxu0
    %v861 = vadd.f32 0.0, %v860
    %862 = vdwg.mxu0
    %v863 = vadd.f32 %v841, %v861
    %v865 = vperm.slane %v86, 0
    %v867 = vadd.f32 %v863, %v865
    %v868 = vxor.u32 %v867, 2147483648
    %v869 = vmul.f32 %v868, 1.442695
    %v870 = vpow.pop %v869
    %v871 = vadd.f32 %v870, 1.0
    %v872 = vrcp.pop %v871
    %v873 = vmul.f32 %v871, %v872
    %v874 = vsub.f32 1.0, %v873
    %v875 = vmul.f32 %v872, %v874
    %v876 = vadd.f32 %v872, %v875
    %vm877 = vweird.f32 %v871
    %vm878 = vweird.f32 %v872
    %vm879 = vmor %vm877, %vm878
    %v880 = vsel %vm879, %v872, %v876
    %v881 = vand.u32 2147483647, %v871
    %vm882 = vcmp.eq.f32.partialorder %v881, 8.507059e+37
    %v883 = vand.u32 %v871, 2147483648
    %v884 = vor.u32 1.1754944e-38, %v883
    %v885 = vsel %vm882, %v884, %v880
    %v886 = vmul.f32 1.0, %v885
    %v888 = vperm.slane %v83, 0
    %v890 = vadd.f32 %v841, %v888
    %v892 = vperm.slane %v84, 0
    %v894 = vadd.f32 %v861, %v892
    %896 = vrot.lane.b32.xlu0 %v894, 112
    %v897 = vpop.permute.xlu0 %896
    %v899 = vmul.f32 %v886, %v897
    %901 = vrot.lane.b32.xlu0 %v899, 16
    %v902 = vpop.permute.xlu0 %901
    %v904 = vadd.f32 %v890, %v902
    %v905 = vtanh.pop %v904
    %v906 = vsub.f32 1.0, %v886
    %908 = vrot.lane.b32.xlu0 %v905, 120
    %v909 = vpop.permute.xlu0 %908
    %v911 = vmul.f32 %v906, %v909
    %v912 = vmul.f32 %v886, 0.0
    %v913 = vadd.f32 %v911, %v912
    %914 = vmatpush.msra.mxu0 0.0
    %915 = vmatpush.msra.mxu0 0.0
    %916 = vmatpush.msra.mxu0 0.0
    %917 = vmatpush.msra.mxu0 0.0
    %918 = vmatpush.msra.mxu0 0.0
    %919 = vmatpush.msra.mxu0 0.0
    %920 = vmatpush.msra.mxu0 0.0
    %921 = vmatpush.msra.mxu0 0.0
    %922 = vmatpush.msra.mxu0 0.0
    %923 = vmatpush.msra.mxu0 0.0
    %924 = vmatpush.msra.mxu0 0.0
    %925 = vmatpush.msra.mxu0 0.0
    %926 = vmatpush.msra.mxu0 0.0
    %927 = vmatpush.msra.mxu0 0.0
    %928 = vmatpush.msra.mxu0 0.0
    %929 = vmatpush.msra.mxu0 %v821
    %930 = vmatmul.f32.gmra.mxu0 %v641
    %v931 = vpop.f32.mrf.mxu0
    %v932 = vadd.f32 0.0, %v931
    %933 = vdwg.mxu0
    %935 = vrot.lane.b32.xlu0 %v913, 120
    %v936 = vpop.permute.xlu0 %935
    %v937 = vsel %vm115, %v936, 0
    %939 = vmatpush.msra.mxu0 0.0
    %940 = vmatpush.msra.mxu0 0.0
    %941 = vmatpush.msra.mxu0 0.0
    %942 = vmatpush.msra.mxu0 0.0
    %943 = vmatpush.msra.mxu0 0.0
    %944 = vmatpush.msra.mxu0 0.0
    %945 = vmatpush.msra.mxu0 0.0
    %946 = vmatpush.msra.mxu0 0.0
    %947 = vmatpush.msra.mxu0 0.0
    %948 = vmatpush.msra.mxu0 0.0
    %949 = vmatpush.msra.mxu0 0.0
    %950 = vmatpush.msra.mxu0 0.0
    %951 = vmatpush.msra.mxu0 0.0
    %952 = vmatpush.msra.mxu0 0.0
    %953 = vmatpush.msra.mxu0 0.0
    %954 = vmatpush.msra.mxu0 %v80
    %955 = vmatmul.f32.gmra.mxu0 %v937
    %v956 = vpop.f32.mrf.mxu0
    %v957 = vadd.f32 0.0, %v956
    %958 = vdwg.mxu0
    %v959 = vadd.f32 %v932, %v957
    %v960 = vadd.f32 %v959, %v865
    %v961 = vxor.u32 %v960, 2147483648
    %v962 = vmul.f32 %v961, 1.442695
    %v963 = vpow.pop %v962
    %v964 = vadd.f32 %v963, 1.0
    %v965 = vrcp.pop %v964
    %v966 = vmul.f32 %v964, %v965
    %v967 = vsub.f32 1.0, %v966
    %v968 = vmul.f32 %v965, %v967
    %v969 = vadd.f32 %v965, %v968
    %vm970 = vweird.f32 %v964
    %vm971 = vweird.f32 %v965
    %vm972 = vmor %vm970, %vm971
    %v973 = vsel %vm972, %v965, %v969
    %v974 = vand.u32 2147483647, %v964
    %vm975 = vcmp.eq.f32.partialorder %v974, 8.507059e+37
    %v976 = vand.u32 %v964, 2147483648
    %v977 = vor.u32 1.1754944e-38, %v976
    %v978 = vsel %vm975, %v977, %v973
    %v979 = vmul.f32 1.0, %v978
    %v980 = vadd.f32 %v932, %v888
    %v981 = vadd.f32 %v957, %v892
    %983 = vrot.lane.b32.xlu0 %v981, 112
    %v984 = vpop.permute.xlu0 %983
    %v986 = vmul.f32 %v979, %v984
    %988 = vrot.lane.b32.xlu0 %v986, 16
    %v989 = vpop.permute.xlu0 %988
    %v991 = vadd.f32 %v980, %v989
    %v992 = vtanh.pop %v991
    %v993 = vsub.f32 1.0, %v979
    %995 = vrot.lane.b32.xlu0 %v992, 120
    %v996 = vpop.permute.xlu0 %995
    %v998 = vmul.f32 %v993, %v996
    %v999 = vmul.f32 %v979, %v913
    %v1000 = vadd.f32 %v998, %v999
    %1001 = vmatpush.msra.mxu0 0.0
    %1002 = vmatpush.msra.mxu0 0.0
    %1003 = vmatpush.msra.mxu0 0.0
    %1004 = vmatpush.msra.mxu0 0.0
    %1005 = vmatpush.msra.mxu0 0.0
    %1006 = vmatpush.msra.mxu0 0.0
    %1007 = vmatpush.msra.mxu0 0.0
    %1008 = vmatpush.msra.mxu0 0.0
    %1009 = vmatpush.msra.mxu0 0.0
    %1010 = vmatpush.msra.mxu0 0.0
    %1011 = vmatpush.msra.mxu0 0.0
    %1012 = vmatpush.msra.mxu0 0.0
    %1013 = vmatpush.msra.mxu0 0.0
    %1014 = vmatpush.msra.mxu0 0.0
    %1015 = vmatpush.msra.mxu0 0.0
    %1016 = vmatpush.msra.mxu0 %v821
    %1017 = vmatmul.f32.gmra.mxu0 %v551
    %v1018 = vpop.f32.mrf.mxu0
    %v1019 = vadd.f32 0.0, %v1018
    %1020 = vdwg.mxu0
    %1022 = vrot.lane.b32.xlu0 %v1000, 120
    %v1023 = vpop.permute.xlu0 %1022
    %v1024 = vsel %vm115, %v1023, 0
    %1026 = vmatpush.msra.mxu0 0.0
    %1027 = vmatpush.msra.mxu0 0.0
    %1028 = vmatpush.msra.mxu0 0.0
    %1029 = vmatpush.msra.mxu0 0.0
    %1030 = vmatpush.msra.mxu0 0.0
    %1031 = vmatpush.msra.mxu0 0.0
    %1032 = vmatpush.msra.mxu0 0.0
    %1033 = vmatpush.msra.mxu0 0.0
    %1034 = vmatpush.msra.mxu0 0.0
    %1035 = vmatpush.msra.mxu0 0.0
    %1036 = vmatpush.msra.mxu0 0.0
    %1037 = vmatpush.msra.mxu0 0.0
    %1038 = vmatpush.msra.mxu0 0.0
    %1039 = vmatpush.msra.mxu0 0.0
    %1040 = vmatpush.msra.mxu0 0.0
    %1041 = vmatpush.msra.mxu0 %v80
    %1042 = vmatmul.f32.gmra.mxu0 %v1024
    %v1043 = vpop.f32.mrf.mxu0
    %v1044 = vadd.f32 0.0, %v1043
    %1045 = vdwg.mxu0
    %v1046 = vadd.f32 %v1019, %v1044
    %v1047 = vadd.f32 %v1046, %v865
    %v1048 = vxor.u32 %v1047, 2147483648
    %v1049 = vmul.f32 %v1048, 1.442695
    %v1050 = vpow.pop %v1049
    %v1051 = vadd.f32 %v1050, 1.0
    %v1052 = vrcp.pop %v1051
    %v1053 = vmul.f32 %v1051, %v1052
    %v1054 = vsub.f32 1.0, %v1053
    %v1055 = vmul.f32 %v1052, %v1054
    %v1056 = vadd.f32 %v1052, %v1055
    %vm1057 = vweird.f32 %v1051
    %vm1058 = vweird.f32 %v1052
    %vm1059 = vmor %vm1057, %vm1058
    %v1060 = vsel %vm1059, %v1052, %v1056
    %v1061 = vand.u32 2147483647, %v1051
    %vm1062 = vcmp.eq.f32.partialorder %v1061, 8.507059e+37
    %v1063 = vand.u32 %v1051, 2147483648
    %v1064 = vor.u32 1.1754944e-38, %v1063
    %v1065 = vsel %vm1062, %v1064, %v1060
    %v1066 = vmul.f32 1.0, %v1065
    %v1067 = vadd.f32 %v1019, %v888
    %v1068 = vadd.f32 %v1044, %v892
    %1070 = vrot.lane.b32.xlu0 %v1068, 112
    %v1071 = vpop.permute.xlu0 %1070
    %v1073 = vmul.f32 %v1066, %v1071
    %1075 = vrot.lane.b32.xlu0 %v1073, 16
    %v1076 = vpop.permute.xlu0 %1075
    %v1078 = vadd.f32 %v1067, %v1076
    %v1079 = vtanh.pop %v1078
    %v1080 = vsub.f32 1.0, %v1066
    %1082 = vrot.lane.b32.xlu0 %v1079, 120
    %v1083 = vpop.permute.xlu0 %1082
    %v1085 = vmul.f32 %v1080, %v1083
    %v1086 = vmul.f32 %v1066, %v1000
    %v1087 = vadd.f32 %v1085, %v1086
    %1088 = vmatpush.msra.mxu0 0.0
    %1089 = vmatpush.msra.mxu0 0.0
    %1090 = vmatpush.msra.mxu0 0.0
    %1091 = vmatpush.msra.mxu0 0.0
    %1092 = vmatpush.msra.mxu0 0.0
    %1093 = vmatpush.msra.mxu0 0.0
    %1094 = vmatpush.msra.mxu0 0.0
    %1095 = vmatpush.msra.mxu0 0.0
    %1096 = vmatpush.msra.mxu0 0.0
    %1097 = vmatpush.msra.mxu0 0.0
    %1098 = vmatpush.msra.mxu0 0.0
    %1099 = vmatpush.msra.mxu0 0.0
    %1100 = vmatpush.msra.mxu0 0.0
    %1101 = vmatpush.msra.mxu0 0.0
    %1102 = vmatpush.msra.mxu0 0.0
    %1103 = vmatpush.msra.mxu0 %v821
    %1104 = vmatmul.f32.gmra.mxu0 %v461
    %v1105 = vpop.f32.mrf.mxu0
    %v1106 = vadd.f32 0.0, %v1105
    %1107 = vdwg.mxu0
    %1109 = vrot.lane.b32.xlu0 %v1087, 120
    %v1110 = vpop.permute.xlu0 %1109
    %v1111 = vsel %vm115, %v1110, 0
    %1113 = vmatpush.msra.mxu0 0.0
    %1114 = vmatpush.msra.mxu0 0.0
    %1115 = vmatpush.msra.mxu0 0.0
    %1116 = vmatpush.msra.mxu0 0.0
    %1117 = vmatpush.msra.mxu0 0.0
    %1118 = vmatpush.msra.mxu0 0.0
    %1119 = vmatpush.msra.mxu0 0.0
    %1120 = vmatpush.msra.mxu0 0.0
    %1121 = vmatpush.msra.mxu0 0.0
    %1122 = vmatpush.msra.mxu0 0.0
    %1123 = vmatpush.msra.mxu0 0.0
    %1124 = vmatpush.msra.mxu0 0.0
    %1125 = vmatpush.msra.mxu0 0.0
    %1126 = vmatpush.msra.mxu0 0.0
    %1127 = vmatpush.msra.mxu0 0.0
    %1128 = vmatpush.msra.mxu0 %v80
    %1129 = vmatmul.f32.gmra.mxu0 %v1111
    %v1130 = vpop.f32.mrf.mxu0
    %v1131 = vadd.f32 0.0, %v1130
    %1132 = vdwg.mxu0
    %v1133 = vadd.f32 %v1106, %v1131
    %v1134 = vadd.f32 %v1133, %v865
    %v1135 = vxor.u32 %v1134, 2147483648
    %v1136 = vmul.f32 %v1135, 1.442695
    %v1137 = vpow.pop %v1136
    %v1138 = vadd.f32 %v1137, 1.0
    %v1139 = vrcp.pop %v1138
    %v1140 = vmul.f32 %v1138, %v1139
    %v1141 = vsub.f32 1.0, %v1140
    %v1142 = vmul.f32 %v1139, %v1141
    %v1143 = vadd.f32 %v1139, %v1142
    %vm1144 = vweird.f32 %v1138
    %vm1145 = vweird.f32 %v1139
    %vm1146 = vmor %vm1144, %vm1145
    %v1147 = vsel %vm1146, %v1139, %v1143
    %v1148 = vand.u32 2147483647, %v1138
    %vm1149 = vcmp.eq.f32.partialorder %v1148, 8.507059e+37
    %v1150 = vand.u32 %v1138, 2147483648
    %v1151 = vor.u32 1.1754944e-38, %v1150
    %v1152 = vsel %vm1149, %v1151, %v1147
    %v1153 = vmul.f32 1.0, %v1152
    %v1154 = vadd.f32 %v1106, %v888
    %v1155 = vadd.f32 %v1131, %v892
    %1157 = vrot.lane.b32.xlu0 %v1155, 112
    %v1158 = vpop.permute.xlu0 %1157
    %v1160 = vmul.f32 %v1153, %v1158
    %1162 = vrot.lane.b32.xlu0 %v1160, 16
    %v1163 = vpop.permute.xlu0 %1162
    %v1165 = vadd.f32 %v1154, %v1163
    %v1166 = vtanh.pop %v1165
    %v1167 = vsub.f32 1.0, %v1153
    %1169 = vrot.lane.b32.xlu0 %v1166, 120
    %v1170 = vpop.permute.xlu0 %1169
    %v1172 = vmul.f32 %v1167, %v1170
    %v1173 = vmul.f32 %v1153, %v1087
    %v1174 = vadd.f32 %v1172, %v1173
    %1175 = vmatpush.msra.mxu0 0.0
    %1176 = vmatpush.msra.mxu0 0.0
    %1177 = vmatpush.msra.mxu0 0.0
    %1178 = vmatpush.msra.mxu0 0.0
    %1179 = vmatpush.msra.mxu0 0.0
    %1180 = vmatpush.msra.mxu0 0.0
    %1181 = vmatpush.msra.mxu0 0.0
    %1182 = vmatpush.msra.mxu0 0.0
    %1183 = vmatpush.msra.mxu0 0.0
    %1184 = vmatpush.msra.mxu0 0.0
    %1185 = vmatpush.msra.mxu0 0.0
    %1186 = vmatpush.msra.mxu0 0.0
    %1187 = vmatpush.msra.mxu0 0.0
    %1188 = vmatpush.msra.mxu0 0.0
    %1189 = vmatpush.msra.mxu0 0.0
    %1190 = vmatpush.msra.mxu0 %v821
    %1191 = vmatmul.f32.gmra.mxu0 %v371
    %v1192 = vpop.f32.mrf.mxu0
    %v1193 = vadd.f32 0.0, %v1192
    %1194 = vdwg.mxu0
    %1196 = vrot.lane.b32.xlu0 %v1174, 120
    %v1197 = vpop.permute.xlu0 %1196
    %v1198 = vsel %vm115, %v1197, 0
    %1200 = vmatpush.msra.mxu0 0.0
    %1201 = vmatpush.msra.mxu0 0.0
    %1202 = vmatpush.msra.mxu0 0.0
    %1203 = vmatpush.msra.mxu0 0.0
    %1204 = vmatpush.msra.mxu0 0.0
    %1205 = vmatpush.msra.mxu0 0.0
    %1206 = vmatpush.msra.mxu0 0.0
    %1207 = vmatpush.msra.mxu0 0.0
    %1208 = vmatpush.msra.mxu0 0.0
    %1209 = vmatpush.msra.mxu0 0.0
    %1210 = vmatpush.msra.mxu0 0.0
    %1211 = vmatpush.msra.mxu0 0.0
    %1212 = vmatpush.msra.mxu0 0.0
    %1213 = vmatpush.msra.mxu0 0.0
    %1214 = vmatpush.msra.mxu0 0.0
    %1215 = vmatpush.msra.mxu0 %v80
    %1216 = vmatmul.f32.gmra.mxu0 %v1198
    %v1217 = vpop.f32.mrf.mxu0
    %v1218 = vadd.f32 0.0, %v1217
    %1219 = vdwg.mxu0
    %v1220 = vadd.f32 %v1193, %v1218
    %v1221 = vadd.f32 %v1220, %v865
    %v1222 = vxor.u32 %v1221, 2147483648
    %v1223 = vmul.f32 %v1222, 1.442695
    %v1224 = vpow.pop %v1223
    %v1225 = vadd.f32 %v1224, 1.0
    %v1226 = vrcp.pop %v1225
    %v1227 = vmul.f32 %v1225, %v1226
    %v1228 = vsub.f32 1.0, %v1227
    %v1229 = vmul.f32 %v1226, %v1228
    %v1230 = vadd.f32 %v1226, %v1229
    %vm1231 = vweird.f32 %v1225
    %vm1232 = vweird.f32 %v1226
    %vm1233 = vmor %vm1231, %vm1232
    %v1234 = vsel %vm1233, %v1226, %v1230
    %v1235 = vand.u32 2147483647, %v1225
    %vm1236 = vcmp.eq.f32.partialorder %v1235, 8.507059e+37
    %v1237 = vand.u32 %v1225, 2147483648
    %v1238 = vor.u32 1.1754944e-38, %v1237
    %v1239 = vsel %vm1236, %v1238, %v1234
    %v1240 = vmul.f32 1.0, %v1239
    %v1241 = vadd.f32 %v1193, %v888
    %v1242 = vadd.f32 %v1218, %v892
    %1244 = vrot.lane.b32.xlu0 %v1242, 112
    %v1245 = vpop.permute.xlu0 %1244
    %v1247 = vmul.f32 %v1240, %v1245
    %1249 = vrot.lane.b32.xlu0 %v1247, 16
    %v1250 = vpop.permute.xlu0 %1249
    %v1252 = vadd.f32 %v1241, %v1250
    %v1253 = vtanh.pop %v1252
    %v1254 = vsub.f32 1.0, %v1240
    %1256 = vrot.lane.b32.xlu0 %v1253, 120
    %v1257 = vpop.permute.xlu0 %1256
    %v1259 = vmul.f32 %v1254, %v1257
    %v1260 = vmul.f32 %v1240, %v1174
    %v1261 = vadd.f32 %v1259, %v1260
    %1262 = vmatpush.msra.mxu0 0.0
    %1263 = vmatpush.msra.mxu0 0.0
    %1264 = vmatpush.msra.mxu0 0.0
    %1265 = vmatpush.msra.mxu0 0.0
    %1266 = vmatpush.msra.mxu0 0.0
    %1267 = vmatpush.msra.mxu0 0.0
    %1268 = vmatpush.msra.mxu0 0.0
    %1269 = vmatpush.msra.mxu0 0.0
    %1270 = vmatpush.msra.mxu0 0.0
    %1271 = vmatpush.msra.mxu0 0.0
    %1272 = vmatpush.msra.mxu0 0.0
    %1273 = vmatpush.msra.mxu0 0.0
    %1274 = vmatpush.msra.mxu0 0.0
    %1275 = vmatpush.msra.mxu0 0.0
    %1276 = vmatpush.msra.mxu0 0.0
    %1277 = vmatpush.msra.mxu0 %v821
    %1278 = vmatmul.f32.gmra.mxu0 %v281
    %v1279 = vpop.f32.mrf.mxu0
    %v1280 = vadd.f32 0.0, %v1279
    %1281 = vdwg.mxu0
    %1283 = vrot.lane.b32.xlu0 %v1261, 120
    %v1284 = vpop.permute.xlu0 %1283
    %v1285 = vsel %vm115, %v1284, 0
    %1287 = vmatpush.msra.mxu0 0.0
    %1288 = vmatpush.msra.mxu0 0.0
    %1289 = vmatpush.msra.mxu0 0.0
    %1290 = vmatpush.msra.mxu0 0.0
    %1291 = vmatpush.msra.mxu0 0.0
    %1292 = vmatpush.msra.mxu0 0.0
    %1293 = vmatpush.msra.mxu0 0.0
    %1294 = vmatpush.msra.mxu0 0.0
    %1295 = vmatpush.msra.mxu0 0.0
    %1296 = vmatpush.msra.mxu0 0.0
    %1297 = vmatpush.msra.mxu0 0.0
    %1298 = vmatpush.msra.mxu0 0.0
    %1299 = vmatpush.msra.mxu0 0.0
    %1300 = vmatpush.msra.mxu0 0.0
    %1301 = vmatpush.msra.mxu0 0.0
    %1302 = vmatpush.msra.mxu0 %v80
    %1303 = vmatmul.f32.gmra.mxu0 %v1285
    %v1304 = vpop.f32.mrf.mxu0
    %v1305 = vadd.f32 0.0, %v1304
    %1306 = vdwg.mxu0
    %v1307 = vadd.f32 %v1280, %v1305
    %v1308 = vadd.f32 %v1307, %v865
    %v1309 = vxor.u32 %v1308, 2147483648
    %v1310 = vmul.f32 %v1309, 1.442695
    %v1311 = vpow.pop %v1310
    %v1312 = vadd.f32 %v1311, 1.0
    %v1313 = vrcp.pop %v1312
    %v1314 = vmul.f32 %v1312, %v1313
    %v1315 = vsub.f32 1.0, %v1314
    %v1316 = vmul.f32 %v1313, %v1315
    %v1317 = vadd.f32 %v1313, %v1316
    %vm1318 = vweird.f32 %v1312
    %vm1319 = vweird.f32 %v1313
    %vm1320 = vmor %vm1318, %vm1319
    %v1321 = vsel %vm1320, %v1313, %v1317
    %v1322 = vand.u32 2147483647, %v1312
    %vm1323 = vcmp.eq.f32.partialorder %v1322, 8.507059e+37
    %v1324 = vand.u32 %v1312, 2147483648
    %v1325 = vor.u32 1.1754944e-38, %v1324
    %v1326 = vsel %vm1323, %v1325, %v1321
    %v1327 = vmul.f32 1.0, %v1326
    %v1328 = vadd.f32 %v1280, %v888
    %v1329 = vadd.f32 %v1305, %v892
    %1331 = vrot.lane.b32.xlu0 %v1329, 112
    %v1332 = vpop.permute.xlu0 %1331
    %v1334 = vmul.f32 %v1327, %v1332
    %1336 = vrot.lane.b32.xlu0 %v1334, 16
    %v1337 = vpop.permute.xlu0 %1336
    %v1339 = vadd.f32 %v1328, %v1337
    %v1340 = vtanh.pop %v1339
    %v1341 = vsub.f32 1.0, %v1327
    %1343 = vrot.lane.b32.xlu0 %v1340, 120
    %v1344 = vpop.permute.xlu0 %1343
    %v1346 = vmul.f32 %v1341, %v1344
    %v1347 = vmul.f32 %v1327, %v1261
    %v1348 = vadd.f32 %v1346, %v1347
    %1349 = vmatpush.msra.mxu0 0.0
    %1350 = vmatpush.msra.mxu0 0.0
    %1351 = vmatpush.msra.mxu0 0.0
    %1352 = vmatpush.msra.mxu0 0.0
    %1353 = vmatpush.msra.mxu0 0.0
    %1354 = vmatpush.msra.mxu0 0.0
    %1355 = vmatpush.msra.mxu0 0.0
    %1356 = vmatpush.msra.mxu0 0.0
    %1357 = vmatpush.msra.mxu0 0.0
    %1358 = vmatpush.msra.mxu0 0.0
    %1359 = vmatpush.msra.mxu0 0.0
    %1360 = vmatpush.msra.mxu0 0.0
    %1361 = vmatpush.msra.mxu0 0.0
    %1362 = vmatpush.msra.mxu0 0.0
    %1363 = vmatpush.msra.mxu0 0.0
    %1364 = vmatpush.msra.mxu0 %v821
    %1365 = vmatmul.f32.gmra.mxu0 %v191
    %v1366 = vpop.f32.mrf.mxu0
    %v1367 = vadd.f32 0.0, %v1366
    %1368 = vdwg.mxu0
    %1370 = vrot.lane.b32.xlu0 %v1348, 120
    %v1371 = vpop.permute.xlu0 %1370
    %v1372 = vsel %vm115, %v1371, 0
    %1374 = vmatpush.msra.mxu0 0.0
    %1375 = vmatpush.msra.mxu0 0.0
    %1376 = vmatpush.msra.mxu0 0.0
    %1377 = vmatpush.msra.mxu0 0.0
    %1378 = vmatpush.msra.mxu0 0.0
    %1379 = vmatpush.msra.mxu0 0.0
    %1380 = vmatpush.msra.mxu0 0.0
    %1381 = vmatpush.msra.mxu0 0.0
    %1382 = vmatpush.msra.mxu0 0.0
    %1383 = vmatpush.msra.mxu0 0.0
    %1384 = vmatpush.msra.mxu0 0.0
    %1385 = vmatpush.msra.mxu0 0.0
    %1386 = vmatpush.msra.mxu0 0.0
    %1387 = vmatpush.msra.mxu0 0.0
    %1388 = vmatpush.msra.mxu0 0.0
    %1389 = vmatpush.msra.mxu0 %v80
    %1390 = vmatmul.f32.gmra.mxu0 %v1372
    %v1391 = vpop.f32.mrf.mxu0
    %v1392 = vadd.f32 0.0, %v1391
    %1393 = vdwg.mxu0
    %v1394 = vadd.f32 %v1367, %v1392
    %v1395 = vadd.f32 %v1394, %v865
    %v1396 = vxor.u32 %v1395, 2147483648
    %v1397 = vmul.f32 %v1396, 1.442695
    %v1398 = vpow.pop %v1397
    %v1399 = vadd.f32 %v1398, 1.0
    %v1400 = vrcp.pop %v1399
    %v1401 = vmul.f32 %v1399, %v1400
    %v1402 = vsub.f32 1.0, %v1401
    %v1403 = vmul.f32 %v1400, %v1402
    %v1404 = vadd.f32 %v1400, %v1403
    %vm1405 = vweird.f32 %v1399
    %vm1406 = vweird.f32 %v1400
    %vm1407 = vmor %vm1405, %vm1406
    %v1408 = vsel %vm1407, %v1400, %v1404
    %v1409 = vand.u32 2147483647, %v1399
    %vm1410 = vcmp.eq.f32.partialorder %v1409, 8.507059e+37
    %v1411 = vand.u32 %v1399, 2147483648
    %v1412 = vor.u32 1.1754944e-38, %v1411
    %v1413 = vsel %vm1410, %v1412, %v1408
    %v1414 = vmul.f32 1.0, %v1413
    %v1415 = vadd.f32 %v1367, %v888
    %v1416 = vadd.f32 %v1392, %v892
    %1418 = vrot.lane.b32.xlu0 %v1416, 112
    %v1419 = vpop.permute.xlu0 %1418
    %v1421 = vmul.f32 %v1414, %v1419
    %1423 = vrot.lane.b32.xlu0 %v1421, 16
    %v1424 = vpop.permute.xlu0 %1423
    %v1426 = vadd.f32 %v1415, %v1424
    %v1427 = vtanh.pop %v1426
    %v1428 = vsub.f32 1.0, %v1414
    %1430 = vrot.lane.b32.xlu0 %v1427, 120
    %v1431 = vpop.permute.xlu0 %1430
    %v1433 = vmul.f32 %v1428, %v1431
    %v1434 = vmul.f32 %v1414, %v1348
    %v1435 = vadd.f32 %v1433, %v1434
    %1436 = vmatpush.msra.mxu0 0.0
    %1437 = vmatpush.msra.mxu0 0.0
    %1438 = vmatpush.msra.mxu0 0.0
    %1439 = vmatpush.msra.mxu0 0.0
    %1440 = vmatpush.msra.mxu0 0.0
    %1441 = vmatpush.msra.mxu0 0.0
    %1442 = vmatpush.msra.mxu0 0.0
    %1443 = vmatpush.msra.mxu0 0.0
    %1444 = vmatpush.msra.mxu0 0.0
    %1445 = vmatpush.msra.mxu0 0.0
    %1446 = vmatpush.msra.mxu0 0.0
    %1447 = vmatpush.msra.mxu0 0.0
    %1448 = vmatpush.msra.mxu0 0.0
    %1449 = vmatpush.msra.mxu0 0.0
    %1450 = vmatpush.msra.mxu0 0.0
    %1451 = vmatpush.msra.mxu0 %v821
    %1452 = vmatmul.f32.gmra.mxu0 %v89
    %v1453 = vpop.f32.mrf.mxu0
    %v1454 = vadd.f32 0.0, %v1453
    %1455 = vdwg.mxu0
    %1457 = vrot.lane.b32.xlu0 %v1435, 120
    %v1458 = vpop.permute.xlu0 %1457
    %v1459 = vsel %vm115, %v1458, 0
    %1461 = vmatpush.msra.mxu0 0.0
    %1462 = vmatpush.msra.mxu0 0.0
    %1463 = vmatpush.msra.mxu0 0.0
    %1464 = vmatpush.msra.mxu0 0.0
    %1465 = vmatpush.msra.mxu0 0.0
    %1466 = vmatpush.msra.mxu0 0.0
    %1467 = vmatpush.msra.mxu0 0.0
    %1468 = vmatpush.msra.mxu0 0.0
    %1469 = vmatpush.msra.mxu0 0.0
    %1470 = vmatpush.msra.mxu0 0.0
    %1471 = vmatpush.msra.mxu0 0.0
    %1472 = vmatpush.msra.mxu0 0.0
    %1473 = vmatpush.msra.mxu0 0.0
    %1474 = vmatpush.msra.mxu0 0.0
    %1475 = vmatpush.msra.mxu0 0.0
    %1476 = vmatpush.msra.mxu0 %v80
    %1477 = vmatmul.f32.gmra.mxu0 %v1459
    %v1478 = vpop.f32.mrf.mxu0
    %v1479 = vadd.f32 0.0, %v1478
    %1480 = vdwg.mxu0
    %v1481 = vadd.f32 %v1454, %v1479
    %v1482 = vadd.f32 %v1481, %v865
    %v1483 = vxor.u32 %v1482, 2147483648
    %v1484 = vmul.f32 %v1483, 1.442695
    %v1485 = vpow.pop %v1484
    %v1486 = vadd.f32 %v1485, 1.0
    %v1487 = vrcp.pop %v1486
    %v1488 = vmul.f32 %v1486, %v1487
    %v1489 = vsub.f32 1.0, %v1488
    %v1490 = vmul.f32 %v1487, %v1489
    %v1491 = vadd.f32 %v1487, %v1490
    %vm1492 = vweird.f32 %v1486
    %vm1493 = vweird.f32 %v1487
    %vm1494 = vmor %vm1492, %vm1493
    %v1495 = vsel %vm1494, %v1487, %v1491
    %v1496 = vand.u32 2147483647, %v1486
    %vm1497 = vcmp.eq.f32.partialorder %v1496, 8.507059e+37
    %v1498 = vand.u32 %v1486, 2147483648
    %v1499 = vor.u32 1.1754944e-38, %v1498
    %v1500 = vsel %vm1497, %v1499, %v1495
    %v1501 = vmul.f32 1.0, %v1500
    %v1502 = vadd.f32 %v1454, %v888
    %v1503 = vadd.f32 %v1479, %v892
    %1505 = vrot.lane.b32.xlu0 %v1503, 112
    %v1506 = vpop.permute.xlu0 %1505
    %v1508 = vmul.f32 %v1501, %v1506
    %1510 = vrot.lane.b32.xlu0 %v1508, 16
    %v1511 = vpop.permute.xlu0 %1510
    %v1513 = vadd.f32 %v1502, %v1511
    %v1514 = vtanh.pop %v1513
    %v1515 = vsub.f32 1.0, %v1501
    %1517 = vrot.lane.b32.xlu0 %v1514, 120
    %v1518 = vpop.permute.xlu0 %1517
    %v1520 = vmul.f32 %v1515, %v1518
    %v1521 = vmul.f32 %v1501, %v1435
    %v1522 = vadd.f32 %v1520, %v1521
    %v1523 = vld [vmem:[%s10] sm:$0xff]
    %v1524 = vld [vmem:[%s10 + $0x8] sm:$0xff]
    %1526 = vrot.lane.b32.xlu0 %v1522, 120
    %v1527 = vpop.permute.xlu0 %1526
    %v1528 = vsel %vm115, %v1527, 0
    %1530 = vmatpush.msra.mxu0 0.0
    %1531 = vmatpush.msra.mxu0 0.0
    %1532 = vmatpush.msra.mxu0 0.0
    %1533 = vmatpush.msra.mxu0 0.0
    %1534 = vmatpush.msra.mxu0 0.0
    %1535 = vmatpush.msra.mxu0 0.0
    %1536 = vmatpush.msra.mxu0 0.0
    %1537 = vmatpush.msra.mxu0 0.0
    %1538 = vmatpush.msra.mxu0 0.0
    %1539 = vmatpush.msra.mxu0 0.0
    %1540 = vmatpush.msra.mxu0 0.0
    %1541 = vmatpush.msra.mxu0 0.0
    %1542 = vmatpush.msra.mxu0 0.0
    %1543 = vmatpush.msra.mxu0 0.0
    %1544 = vmatpush.msra.mxu0 0.0
    %1545 = vmatpush.msra.mxu0 %v1524
    %1546 = vmatmul.f32.gmra.mxu0 %v1528
    %v1547 = vpop.f32.mrf.mxu0
    %v1548 = vadd.f32 0.0, %v1547
    %1549 = vdwg.mxu0
    %1551 = vrot.lane.b32.xlu0 %v819, 120
    %v1552 = vpop.permute.xlu0 %1551
    %v1553 = vsel %vm115, %v1552, 0
    %1555 = vmatpush.msra.mxu0 0.0
    %1556 = vmatpush.msra.mxu0 0.0
    %1557 = vmatpush.msra.mxu0 0.0
    %1558 = vmatpush.msra.mxu0 0.0
    %1559 = vmatpush.msra.mxu0 0.0
    %1560 = vmatpush.msra.mxu0 0.0
    %1561 = vmatpush.msra.mxu0 0.0
    %1562 = vmatpush.msra.mxu0 0.0
    %1563 = vmatpush.msra.mxu0 0.0
    %1564 = vmatpush.msra.mxu0 0.0
    %1565 = vmatpush.msra.mxu0 0.0
    %1566 = vmatpush.msra.mxu0 0.0
    %1567 = vmatpush.msra.mxu0 0.0
    %1568 = vmatpush.msra.mxu0 0.0
    %1569 = vmatpush.msra.mxu0 0.0
    %1570 = vmatpush.msra.mxu0 %v1523
    %1571 = vmatmul.f32.gmra.mxu0 %v1553
    %v1572 = vpop.f32.mrf.mxu0
    %v1573 = vadd.f32 %v1548, %v1572
    %1574 = vdwg.mxu0
    %v1575 = vld [vmem:[%s11] sm:$0x1]
    %v1577 = vperm.slane %v1575, 0
    %v1579 = vadd.f32 %v1573, %v1577
    %v1580 = vsub.f32 0.0, %v1579
    %v1581 = vmul.f32 %v1580, 1.442695
    %v1582 = vpow.pop %v1581
    %v1583 = vadd.f32 %v1579, %v1582
    %v1584 = vmul.f32 %v1579, %v1579
    %1586 = vrot.lane.b32.xlu0 %v1582, 112
    %v1587 = vpop.permute.xlu0 %1586
    %v1589 = vmul.f32 %v1584, %v1587
    %1591 = vrot.lane.b32.xlu0 %v1589, 16
    %v1592 = vpop.permute.xlu0 %1591
    %v1594 = vadd.f32 %v1583, %v1592
    %v1595 = vadd.f32 %v1594, 1.0
    %v1596 = vmul.f32 %v1595, 0.5
    %1598 = vrot.lane.b32.xlu0 %v1596, 112
    %v1599 = vpop.permute.xlu0 %1598
    %vm1601 = vcmask 125952
    %1602 = vst.msk [vmem:[#allocation6] sm:$0xf] %vm1601, %v1599
    %v1603 = vmul.f32 %v1579, 0.5
    %v1604 = vmul.f32 %v1603, 1.442695
    %v1605 = vpow.pop %v1604
    %v1606 = vld [vmem:[%s1] sm:$0xf]
    %1608 = vrot.lane.b32.xlu0 %v1606, 16
    %v1609 = vpop.permute.xlu0 %1608
    %v1611 = vmul.f32 %v1605, %v1609
    %1613 = vrot.lane.b32.xlu0 %v1579, 16
    %v1614 = vpop.permute.xlu0 %1613
    %v1616 = vadd.f32 %v1611, %v1614
    %1618 = vrot.lane.b32.xlu0 %v1616, 112
    %v1619 = vpop.permute.xlu0 %1618
    %1621 = vst.msk [vmem:[#allocation4] sm:$0xf] %vm1601, %v1619
    %v1622 = vld [vmem:[%s12] sm:$0xff]
    %v1623 = vld [vmem:[%s12 + $0x8] sm:$0xff]
    %v1624 = vld [vmem:[%s13] sm:$0x1]
    %v1625 = vld [vmem:[%s14] sm:$0x1]
    %v1626 = vadd.f32 %v1624, %v1625
    %vm1627 = vcmask 130048
    %v1628 = vsel %vm1627, %v1619, 0
    %1630 = vmatpush.msra.mxu0 0.0
    %1631 = vmatpush.msra.mxu0 0.0
    %1632 = vmatpush.msra.mxu0 0.0
    %1633 = vmatpush.msra.mxu0 0.0
    %1634 = vmatpush.msra.mxu0 0.0
    %1635 = vmatpush.msra.mxu0 0.0
    %1636 = vmatpush.msra.mxu0 0.0
    %1637 = vmatpush.msra.mxu0 0.0
    %1638 = vmatpush.msra.mxu0 0.0
    %1639 = vmatpush.msra.mxu0 0.0
    %1640 = vmatpush.msra.mxu0 0.0
    %1641 = vmatpush.msra.mxu0 0.0
    %1642 = vmatpush.msra.mxu0 0.0
    %1643 = vmatpush.msra.mxu0 0.0
    %1644 = vmatpush.msra.mxu0 %v1623
    %1645 = vmatpush.msra.mxu0 %v1622
    %1646 = vmatmul.f32.gmra.mxu0 %v1628
    %v1647 = vpop.f32.mrf.mxu0
    %v1648 = vadd.f32 0.0, %v1647
    %1649 = vdwg.mxu0
    %v1651 = vperm.slane %v1626, 0
    %v1653 = vadd.f32 %v1648, %v1651
    %v1654 = vxor.u32 %v1653, 2147483648
    %v1655 = vmul.f32 %v1654, 1.442695
    %v1656 = vpow.pop %v1655
    %v1657 = vadd.f32 %v1656, 1.0
    %v1658 = vrcp.pop %v1657
    %v1659 = vmul.f32 %v1657, %v1658
    %v1660 = vsub.f32 1.0, %v1659
    %v1661 = vmul.f32 %v1658, %v1660
    %v1662 = vadd.f32 %v1658, %v1661
    %vm1663 = vweird.f32 %v1657
    %vm1664 = vweird.f32 %v1658
    %vm1665 = vmor %vm1663, %vm1664
    %v1666 = vsel %vm1665, %v1658, %v1662
    %v1667 = vand.u32 2147483647, %v1657
    %vm1668 = vcmp.eq.f32.partialorder %v1667, 8.507059e+37
    %v1669 = vand.u32 %v1657, 2147483648
    %v1670 = vor.u32 1.1754944e-38, %v1669
    %v1671 = vsel %vm1668, %v1670, %v1666
    %v1672 = vmul.f32 1.0, %v1671
    %v1674 = vperm.slane %v1625, 0
    %v1676 = vadd.f32 %v1648, %v1674
    %1678 = vrot.lane.b32.xlu0 %v1676, 96
    %v1679 = vpop.permute.xlu0 %1678
    %v1681 = vmul.f32 %v1672, %v1679
    %v1683 = vperm.slane %v1624, 0
    %1686 = vrot.lane.b32.xlu0 %v1681, 32
    %v1687 = vpop.permute.xlu0 %1686
    %v1689 = vadd.f32 %v1683, %v1687
    %v1690 = vtanh.pop %v1689
    %v1691 = vsub.f32 1.0, %v1672
    %1693 = vrot.lane.b32.xlu0 %v1690, 112
    %v1694 = vpop.permute.xlu0 %1693
    %v1696 = vmul.f32 %v1691, %v1694
    %v1697 = vmul.f32 %v1672, %v1616
    %v1698 = vadd.f32 %v1696, %v1697
    %1700 = vrot.lane.b32.xlu0 %v1698, 112
    %v1701 = vpop.permute.xlu0 %1700
    %1703 = vst.msk [vmem:[#allocation2] sm:$0xf] %vm1601, %v1701
    %v1704 = vsel %vm1627, %v1701, 0
    %1706 = vmatpush.msra.mxu0 0.0
    %1707 = vmatpush.msra.mxu0 0.0
    %1708 = vmatpush.msra.mxu0 0.0
    %1709 = vmatpush.msra.mxu0 0.0
    %1710 = vmatpush.msra.mxu0 0.0
    %1711 = vmatpush.msra.mxu0 0.0
    %1712 = vmatpush.msra.mxu0 0.0
    %1713 = vmatpush.msra.mxu0 0.0
    %1714 = vmatpush.msra.mxu0 0.0
    %1715 = vmatpush.msra.mxu0 0.0
    %1716 = vmatpush.msra.mxu0 0.0
    %1717 = vmatpush.msra.mxu0 0.0
    %1718 = vmatpush.msra.mxu0 0.0
    %1719 = vmatpush.msra.mxu0 0.0
    %1720 = vmatpush.msra.mxu0 %v1623
    %1721 = vmatpush.msra.mxu0 %v1622
    %1722 = vmatmul.f32.gmra.mxu0 %v1704
    %v1723 = vpop.f32.mrf.mxu0
    %v1724 = vadd.f32 0.0, %v1723
    %1725 = vdwg.mxu0
    %v1726 = vadd.f32 %v1724, %v1651
    %v1727 = vxor.u32 %v1726, 2147483648
    %v1728 = vmul.f32 %v1727, 1.442695
    %v1729 = vpow.pop %v1728
    %v1730 = vadd.f32 %v1729, 1.0
    %v1731 = vrcp.pop %v1730
    %v1732 = vmul.f32 %v1730, %v1731
    %v1733 = vsub.f32 1.0, %v1732
    %v1734 = vmul.f32 %v1731, %v1733
    %v1735 = vadd.f32 %v1731, %v1734
    %vm1736 = vweird.f32 %v1730
    %vm1737 = vweird.f32 %v1731
    %vm1738 = vmor %vm1736, %vm1737
    %v1739 = vsel %vm1738, %v1731, %v1735
    %v1740 = vand.u32 2147483647, %v1730
    %vm1741 = vcmp.eq.f32.partialorder %v1740, 8.507059e+37
    %v1742 = vand.u32 %v1730, 2147483648
    %v1743 = vor.u32 1.1754944e-38, %v1742
    %v1744 = vsel %vm1741, %v1743, %v1739
    %v1745 = vmul.f32 1.0, %v1744
    %v1746 = vadd.f32 %v1724, %v1674
    %1748 = vrot.lane.b32.xlu0 %v1746, 96
    %v1749 = vpop.permute.xlu0 %1748
    %v1751 = vmul.f32 %v1745, %v1749
    %1753 = vrot.lane.b32.xlu0 %v1751, 32
    %v1754 = vpop.permute.xlu0 %1753
    %v1756 = vadd.f32 %v1683, %v1754
    %v1757 = vtanh.pop %v1756
    %v1758 = vsub.f32 1.0, %v1745
    %1760 = vrot.lane.b32.xlu0 %v1757, 112
    %v1761 = vpop.permute.xlu0 %1760
    %v1763 = vmul.f32 %v1758, %v1761
    %v1764 = vmul.f32 %v1745, %v1698
    %v1765 = vadd.f32 %v1763, %v1764
    %1767 = vrot.lane.b32.xlu0 %v1765, 112
    %v1768 = vpop.permute.xlu0 %1767
    %s1770 = scalar_lea.vmem [#allocation2], 4
    %1771 = vst.msk [vmem:[%s1770] sm:$0xf] %vm1601, %v1768
    %v1772 = vsel %vm1627, %v1768, 0
    %1774 = vmatpush.msra.mxu0 0.0
    %1775 = vmatpush.msra.mxu0 0.0
    %1776 = vmatpush.msra.mxu0 0.0
    %1777 = vmatpush.msra.mxu0 0.0
    %1778 = vmatpush.msra.mxu0 0.0
    %1779 = vmatpush.msra.mxu0 0.0
    %1780 = vmatpush.msra.mxu0 0.0
    %1781 = vmatpush.msra.mxu0 0.0
    %1782 = vmatpush.msra.mxu0 0.0
    %1783 = vmatpush.msra.mxu0 0.0
    %1784 = vmatpush.msra.mxu0 0.0
    %1785 = vmatpush.msra.mxu0 0.0
    %1786 = vmatpush.msra.mxu0 0.0
    %1787 = vmatpush.msra.mxu0 0.0
    %1788 = vmatpush.msra.mxu0 %v1623
    %1789 = vmatpush.msra.mxu0 %v1622
    %1790 = vmatmul.f32.gmra.mxu0 %v1772
    %v1791 = vpop.f32.mrf.mxu0
    %v1792 = vadd.f32 0.0, %v1791
    %1793 = vdwg.mxu0
    %v1794 = vadd.f32 %v1792, %v1651
    %v1795 = vxor.u32 %v1794, 2147483648
    %v1796 = vmul.f32 %v1795, 1.442695
    %v1797 = vpow.pop %v1796
    %v1798 = vadd.f32 %v1797, 1.0
    %v1799 = vrcp.pop %v1798
    %v1800 = vmul.f32 %v1798, %v1799
    %v1801 = vsub.f32 1.0, %v1800
    %v1802 = vmul.f32 %v1799, %v1801
    %v1803 = vadd.f32 %v1799, %v1802
    %vm1804 = vweird.f32 %v1798
    %vm1805 = vweird.f32 %v1799
    %vm1806 = vmor %vm1804, %vm1805
    %v1807 = vsel %vm1806, %v1799, %v1803
    %v1808 = vand.u32 2147483647, %v1798
    %vm1809 = vcmp.eq.f32.partialorder %v1808, 8.507059e+37
    %v1810 = vand.u32 %v1798, 2147483648
    %v1811 = vor.u32 1.1754944e-38, %v1810
    %v1812 = vsel %vm1809, %v1811, %v1807
    %v1813 = vmul.f32 1.0, %v1812
    %v1814 = vadd.f32 %v1792, %v1674
    %1816 = vrot.lane.b32.xlu0 %v1814, 96
    %v1817 = vpop.permute.xlu0 %1816
    %v1819 = vmul.f32 %v1813, %v1817
    %1821 = vrot.lane.b32.xlu0 %v1819, 32
    %v1822 = vpop.permute.xlu0 %1821
    %v1824 = vadd.f32 %v1683, %v1822
    %v1825 = vtanh.pop %v1824
    %v1826 = vsub.f32 1.0, %v1813
    %1828 = vrot.lane.b32.xlu0 %v1825, 112
    %v1829 = vpop.permute.xlu0 %1828
    %v1831 = vmul.f32 %v1826, %v1829
    %v1832 = vmul.f32 %v1813, %v1765
    %v1833 = vadd.f32 %v1831, %v1832
    %1835 = vrot.lane.b32.xlu0 %v1833, 112
    %v1836 = vpop.permute.xlu0 %1835
    %s1838 = scalar_lea.vmem [#allocation2], 8
    %1839 = vst.msk [vmem:[%s1838] sm:$0xf] %vm1601, %v1836
    %v1840 = vsel %vm1627, %v1836, 0
    %1842 = vmatpush.msra.mxu0 0.0
    %1843 = vmatpush.msra.mxu0 0.0
    %1844 = vmatpush.msra.mxu0 0.0
    %1845 = vmatpush.msra.mxu0 0.0
    %1846 = vmatpush.msra.mxu0 0.0
    %1847 = vmatpush.msra.mxu0 0.0
    %1848 = vmatpush.msra.mxu0 0.0
    %1849 = vmatpush.msra.mxu0 0.0
    %1850 = vmatpush.msra.mxu0 0.0
    %1851 = vmatpush.msra.mxu0 0.0
    %1852 = vmatpush.msra.mxu0 0.0
    %1853 = vmatpush.msra.mxu0 0.0
    %1854 = vmatpush.msra.mxu0 0.0
    %1855 = vmatpush.msra.mxu0 0.0
    %1856 = vmatpush.msra.mxu0 %v1623
    %1857 = vmatpush.msra.mxu0 %v1622
    %1858 = vmatmul.f32.gmra.mxu0 %v1840
    %v1859 = vpop.f32.mrf.mxu0
    %v1860 = vadd.f32 0.0, %v1859
    %1861 = vdwg.mxu0
    %v1862 = vadd.f32 %v1860, %v1651
    %v1863 = vxor.u32 %v1862, 2147483648
    %v1864 = vmul.f32 %v1863, 1.442695
    %v1865 = vpow.pop %v1864
    %v1866 = vadd.f32 %v1865, 1.0
    %v1867 = vrcp.pop %v1866
    %v1868 = vmul.f32 %v1866, %v1867
    %v1869 = vsub.f32 1.0, %v1868
    %v1870 = vmul.f32 %v1867, %v1869
    %v1871 = vadd.f32 %v1867, %v1870
    %vm1872 = vweird.f32 %v1866
    %vm1873 = vweird.f32 %v1867
    %vm1874 = vmor %vm1872, %vm1873
    %v1875 = vsel %vm1874, %v1867, %v1871
    %v1876 = vand.u32 2147483647, %v1866
    %vm1877 = vcmp.eq.f32.partialorder %v1876, 8.507059e+37
    %v1878 = vand.u32 %v1866, 2147483648
    %v1879 = vor.u32 1.1754944e-38, %v1878
    %v1880 = vsel %vm1877, %v1879, %v1875
    %v1881 = vmul.f32 1.0, %v1880
    %v1882 = vadd.f32 %v1860, %v1674
    %1884 = vrot.lane.b32.xlu0 %v1882, 96
    %v1885 = vpop.permute.xlu0 %1884
    %v1887 = vmul.f32 %v1881, %v1885
    %1889 = vrot.lane.b32.xlu0 %v1887, 32
    %v1890 = vpop.permute.xlu0 %1889
    %v1892 = vadd.f32 %v1683, %v1890
    %v1893 = vtanh.pop %v1892
    %v1894 = vsub.f32 1.0, %v1881
    %1896 = vrot.lane.b32.xlu0 %v1893, 112
    %v1897 = vpop.permute.xlu0 %1896
    %v1899 = vmul.f32 %v1894, %v1897
    %v1900 = vmul.f32 %v1881, %v1833
    %v1901 = vadd.f32 %v1899, %v1900
    %1903 = vrot.lane.b32.xlu0 %v1901, 112
    %v1904 = vpop.permute.xlu0 %1903
    %s1906 = scalar_lea.vmem [#allocation2], 12
    %1907 = vst.msk [vmem:[%s1906] sm:$0xf] %vm1601, %v1904
    %v1908 = vsel %vm1627, %v1904, 0
    %1910 = vmatpush.msra.mxu0 0.0
    %1911 = vmatpush.msra.mxu0 0.0
    %1912 = vmatpush.msra.mxu0 0.0
    %1913 = vmatpush.msra.mxu0 0.0
    %1914 = vmatpush.msra.mxu0 0.0
    %1915 = vmatpush.msra.mxu0 0.0
    %1916 = vmatpush.msra.mxu0 0.0
    %1917 = vmatpush.msra.mxu0 0.0
    %1918 = vmatpush.msra.mxu0 0.0
    %1919 = vmatpush.msra.mxu0 0.0
    %1920 = vmatpush.msra.mxu0 0.0
    %1921 = vmatpush.msra.mxu0 0.0
    %1922 = vmatpush.msra.mxu0 0.0
    %1923 = vmatpush.msra.mxu0 0.0
    %1924 = vmatpush.msra.mxu0 %v1623
    %1925 = vmatpush.msra.mxu0 %v1622
    %1926 = vmatmul.f32.gmra.mxu0 %v1908
    %v1927 = vpop.f32.mrf.mxu0
    %v1928 = vadd.f32 0.0, %v1927
    %1929 = vdwg.mxu0
    %v1930 = vadd.f32 %v1928, %v1651
    %v1931 = vxor.u32 %v1930, 2147483648
    %v1932 = vmul.f32 %v1931, 1.442695
    %v1933 = vpow.pop %v1932
    %v1934 = vadd.f32 %v1933, 1.0
    %v1935 = vrcp.pop %v1934
    %v1936 = vmul.f32 %v1934, %v1935
    %v1937 = vsub.f32 1.0, %v1936
    %v1938 = vmul.f32 %v1935, %v1937
    %v1939 = vadd.f32 %v1935, %v1938
    %vm1940 = vweird.f32 %v1934
    %vm1941 = vweird.f32 %v1935
    %vm1942 = vmor %vm1940, %vm1941
    %v1943 = vsel %vm1942, %v1935, %v1939
    %v1944 = vand.u32 2147483647, %v1934
    %vm1945 = vcmp.eq.f32.partialorder %v1944, 8.507059e+37
    %v1946 = vand.u32 %v1934, 2147483648
    %v1947 = vor.u32 1.1754944e-38, %v1946
    %v1948 = vsel %vm1945, %v1947, %v1943
    %v1949 = vmul.f32 1.0, %v1948
    %v1950 = vadd.f32 %v1928, %v1674
    %1952 = vrot.lane.b32.xlu0 %v1950, 96
    %v1953 = vpop.permute.xlu0 %1952
    %v1955 = vmul.f32 %v1949, %v1953
    %1957 = vrot.lane.b32.xlu0 %v1955, 32
    %v1958 = vpop.permute.xlu0 %1957
    %v1960 = vadd.f32 %v1683, %v1958
    %v1961 = vtanh.pop %v1960
    %v1962 = vsub.f32 1.0, %v1949
    %1964 = vrot.lane.b32.xlu0 %v1961, 112
    %v1965 = vpop.permute.xlu0 %1964
    %v1967 = vmul.f32 %v1962, %v1965
    %v1968 = vmul.f32 %v1949, %v1901
    %v1969 = vadd.f32 %v1967, %v1968
    %1971 = vrot.lane.b32.xlu0 %v1969, 112
    %v1972 = vpop.permute.xlu0 %1971
    %s1974 = scalar_lea.vmem [#allocation2], 16
    %1975 = vst.msk [vmem:[%s1974] sm:$0xf] %vm1601, %v1972
    %v1976 = vsel %vm1627, %v1972, 0
    %1978 = vmatpush.msra.mxu0 0.0
    %1979 = vmatpush.msra.mxu0 0.0
    %1980 = vmatpush.msra.mxu0 0.0
    %1981 = vmatpush.msra.mxu0 0.0
    %1982 = vmatpush.msra.mxu0 0.0
    %1983 = vmatpush.msra.mxu0 0.0
    %1984 = vmatpush.msra.mxu0 0.0
    %1985 = vmatpush.msra.mxu0 0.0
    %1986 = vmatpush.msra.mxu0 0.0
    %1987 = vmatpush.msra.mxu0 0.0
    %1988 = vmatpush.msra.mxu0 0.0
    %1989 = vmatpush.msra.mxu0 0.0
    %1990 = vmatpush.msra.mxu0 0.0
    %1991 = vmatpush.msra.mxu0 0.0
    %1992 = vmatpush.msra.mxu0 %v1623
    %1993 = vmatpush.msra.mxu0 %v1622
    %1994 = vmatmul.f32.gmra.mxu0 %v1976
    %v1995 = vpop.f32.mrf.mxu0
    %v1996 = vadd.f32 0.0, %v1995
    %1997 = vdwg.mxu0
    %v1998 = vadd.f32 %v1996, %v1651
    %v1999 = vxor.u32 %v1998, 2147483648
    %v2000 = vmul.f32 %v1999, 1.442695
    %v2001 = vpow.pop %v2000
    %v2002 = vadd.f32 %v2001, 1.0
    %v2003 = vrcp.pop %v2002
    %v2004 = vmul.f32 %v2002, %v2003
    %v2005 = vsub.f32 1.0, %v2004
    %v2006 = vmul.f32 %v2003, %v2005
    %v2007 = vadd.f32 %v2003, %v2006
    %vm2008 = vweird.f32 %v2002
    %vm2009 = vweird.f32 %v2003
    %vm2010 = vmor %vm2008, %vm2009
    %v2011 = vsel %vm2010, %v2003, %v2007
    %v2012 = vand.u32 2147483647, %v2002
    %vm2013 = vcmp.eq.f32.partialorder %v2012, 8.507059e+37
    %v2014 = vand.u32 %v2002, 2147483648
    %v2015 = vor.u32 1.1754944e-38, %v2014
    %v2016 = vsel %vm2013, %v2015, %v2011
    %v2017 = vmul.f32 1.0, %v2016
    %v2018 = vadd.f32 %v1996, %v1674
    %2020 = vrot.lane.b32.xlu0 %v2018, 96
    %v2021 = vpop.permute.xlu0 %2020
    %v2023 = vmul.f32 %v2017, %v2021
    %2025 = vrot.lane.b32.xlu0 %v2023, 32
    %v2026 = vpop.permute.xlu0 %2025
    %v2028 = vadd.f32 %v1683, %v2026
    %v2029 = vtanh.pop %v2028
    %v2030 = vsub.f32 1.0, %v2017
    %2032 = vrot.lane.b32.xlu0 %v2029, 112
    %v2033 = vpop.permute.xlu0 %2032
    %v2035 = vmul.f32 %v2030, %v2033
    %v2036 = vmul.f32 %v2017, %v1969
    %v2037 = vadd.f32 %v2035, %v2036
    %2039 = vrot.lane.b32.xlu0 %v2037, 112
    %v2040 = vpop.permute.xlu0 %2039
    %s2042 = scalar_lea.vmem [#allocation2], 20
    %2043 = vst.msk [vmem:[%s2042] sm:$0xf] %vm1601, %v2040
    %v2044 = vsel %vm1627, %v2040, 0
    %2046 = vmatpush.msra.mxu0 0.0
    %2047 = vmatpush.msra.mxu0 0.0
    %2048 = vmatpush.msra.mxu0 0.0
    %2049 = vmatpush.msra.mxu0 0.0
    %2050 = vmatpush.msra.mxu0 0.0
    %2051 = vmatpush.msra.mxu0 0.0
    %2052 = vmatpush.msra.mxu0 0.0
    %2053 = vmatpush.msra.mxu0 0.0
    %2054 = vmatpush.msra.mxu0 0.0
    %2055 = vmatpush.msra.mxu0 0.0
    %2056 = vmatpush.msra.mxu0 0.0
    %2057 = vmatpush.msra.mxu0 0.0
    %2058 = vmatpush.msra.mxu0 0.0
    %2059 = vmatpush.msra.mxu0 0.0
    %2060 = vmatpush.msra.mxu0 %v1623
    %2061 = vmatpush.msra.mxu0 %v1622
    %2062 = vmatmul.f32.gmra.mxu0 %v2044
    %v2063 = vpop.f32.mrf.mxu0
    %v2064 = vadd.f32 0.0, %v2063
    %2065 = vdwg.mxu0
    %v2066 = vadd.f32 %v2064, %v1651
    %v2067 = vxor.u32 %v2066, 2147483648
    %v2068 = vmul.f32 %v2067, 1.442695
    %v2069 = vpow.pop %v2068
    %v2070 = vadd.f32 %v2069, 1.0
    %v2071 = vrcp.pop %v2070
    %v2072 = vmul.f32 %v2070, %v2071
    %v2073 = vsub.f32 1.0, %v2072
    %v2074 = vmul.f32 %v2071, %v2073
    %v2075 = vadd.f32 %v2071, %v2074
    %vm2076 = vweird.f32 %v2070
    %vm2077 = vweird.f32 %v2071
    %vm2078 = vmor %vm2076, %vm2077
    %v2079 = vsel %vm2078, %v2071, %v2075
    %v2080 = vand.u32 2147483647, %v2070
    %vm2081 = vcmp.eq.f32.partialorder %v2080, 8.507059e+37
    %v2082 = vand.u32 %v2070, 2147483648
    %v2083 = vor.u32 1.1754944e-38, %v2082
    %v2084 = vsel %vm2081, %v2083, %v2079
    %v2085 = vmul.f32 1.0, %v2084
    %v2086 = vadd.f32 %v2064, %v1674
    %2088 = vrot.lane.b32.xlu0 %v2086, 96
    %v2089 = vpop.permute.xlu0 %2088
    %v2091 = vmul.f32 %v2085, %v2089
    %2093 = vrot.lane.b32.xlu0 %v2091, 32
    %v2094 = vpop.permute.xlu0 %2093
    %v2096 = vadd.f32 %v1683, %v2094
    %v2097 = vtanh.pop %v2096
    %v2098 = vsub.f32 1.0, %v2085
    %2100 = vrot.lane.b32.xlu0 %v2097, 112
    %v2101 = vpop.permute.xlu0 %2100
    %v2103 = vmul.f32 %v2098, %v2101
    %v2104 = vmul.f32 %v2085, %v2037
    %v2105 = vadd.f32 %v2103, %v2104
    %2107 = vrot.lane.b32.xlu0 %v2105, 112
    %v2108 = vpop.permute.xlu0 %2107
    %s2110 = scalar_lea.vmem [#allocation2], 24
    %2111 = vst.msk [vmem:[%s2110] sm:$0xf] %vm1601, %v2108
    %v2112 = vsel %vm1627, %v2108, 0
    %2114 = vmatpush.msra.mxu0 0.0
    %2115 = vmatpush.msra.mxu0 0.0
    %2116 = vmatpush.msra.mxu0 0.0
    %2117 = vmatpush.msra.mxu0 0.0
    %2118 = vmatpush.msra.mxu0 0.0
    %2119 = vmatpush.msra.mxu0 0.0
    %2120 = vmatpush.msra.mxu0 0.0
    %2121 = vmatpush.msra.mxu0 0.0
    %2122 = vmatpush.msra.mxu0 0.0
    %2123 = vmatpush.msra.mxu0 0.0
    %2124 = vmatpush.msra.mxu0 0.0
    %2125 = vmatpush.msra.mxu0 0.0
    %2126 = vmatpush.msra.mxu0 0.0
    %2127 = vmatpush.msra.mxu0 0.0
    %2128 = vmatpush.msra.mxu0 %v1623
    %2129 = vmatpush.msra.mxu0 %v1622
    %2130 = vmatmul.f32.gmra.mxu0 %v2112
    %v2131 = vpop.f32.mrf.mxu0
    %v2132 = vadd.f32 0.0, %v2131
    %2133 = vdwg.mxu0
    %v2134 = vadd.f32 %v2132, %v1651
    %v2135 = vxor.u32 %v2134, 2147483648
    %v2136 = vmul.f32 %v2135, 1.442695
    %v2137 = vpow.pop %v2136
    %v2138 = vadd.f32 %v2137, 1.0
    %v2139 = vrcp.pop %v2138
    %v2140 = vmul.f32 %v2138, %v2139
    %v2141 = vsub.f32 1.0, %v2140
    %v2142 = vmul.f32 %v2139, %v2141
    %v2143 = vadd.f32 %v2139, %v2142
    %vm2144 = vweird.f32 %v2138
    %vm2145 = vweird.f32 %v2139
    %vm2146 = vmor %vm2144, %vm2145
    %v2147 = vsel %vm2146, %v2139, %v2143
    %v2148 = vand.u32 2147483647, %v2138
    %vm2149 = vcmp.eq.f32.partialorder %v2148, 8.507059e+37
    %v2150 = vand.u32 %v2138, 2147483648
    %v2151 = vor.u32 1.1754944e-38, %v2150
    %v2152 = vsel %vm2149, %v2151, %v2147
    %v2153 = vmul.f32 1.0, %v2152
    %v2154 = vadd.f32 %v2132, %v1674
    %2156 = vrot.lane.b32.xlu0 %v2154, 96
    %v2157 = vpop.permute.xlu0 %2156
    %v2159 = vmul.f32 %v2153, %v2157
    %2161 = vrot.lane.b32.xlu0 %v2159, 32
    %v2162 = vpop.permute.xlu0 %2161
    %v2164 = vadd.f32 %v1683, %v2162
    %v2165 = vtanh.pop %v2164
    %v2166 = vsub.f32 1.0, %v2153
    %2168 = vrot.lane.b32.xlu0 %v2165, 112
    %v2169 = vpop.permute.xlu0 %2168
    %v2171 = vmul.f32 %v2166, %v2169
    %v2172 = vmul.f32 %v2153, %v2105
    %v2173 = vadd.f32 %v2171, %v2172
    %2175 = vrot.lane.b32.xlu0 %v2173, 112
    %v2176 = vpop.permute.xlu0 %2175
    %s2178 = scalar_lea.vmem [#allocation2], 28
    %2179 = vst.msk [vmem:[%s2178] sm:$0xf] %vm1601, %v2176
    %v2180 = vld [vmem:[#allocation2] sm:$0xf]
    %v2181 = vld [vmem:[#allocation2 + $0x4] sm:$0xf]
    %v2182 = vld [vmem:[#allocation2 + $0x8] sm:$0xf]
    %v2183 = vld [vmem:[#allocation2 + $0xc] sm:$0xf]
    %v2184 = vld [vmem:[#allocation2 + $0x10] sm:$0xf]
    %v2185 = vld [vmem:[#allocation2 + $0x14] sm:$0xf]
    %v2186 = vld [vmem:[#allocation2 + $0x18] sm:$0xf]
    %v2187 = vld [vmem:[#allocation2 + $0x1c] sm:$0xf]
    %v2188 = vld [vmem:[%s15] sm:$0xff]
    %v2189 = vld [vmem:[%s15 + $0x8] sm:$0xff]
    %v2190 = vld [vmem:[%s16] sm:$0x1]
    %v2192 = vperm.slane %v2190, 0
    %2202 = vst [vmem:[#allocation1] ss:$2 sm:$0xff] %v2180
    %s2203 = scalar_lea.vmem [#allocation1], 1
    %2204 = vst [vmem:[%s2203] ss:$2 sm:$0xff] %v2181
    %s2205 = scalar_lea.vmem [#allocation1], 16
    %2206 = vst [vmem:[%s2205] ss:$2 sm:$0xff] %v2182
    %s2207 = scalar_lea.vmem [#allocation1], 17
    %2208 = vst [vmem:[%s2207] ss:$2 sm:$0xff] %v2183
    %s2209 = scalar_lea.vmem [#allocation1], 32
    %2210 = vst [vmem:[%s2209] ss:$2 sm:$0xff] %v2184
    %s2211 = scalar_lea.vmem [#allocation1], 33
    %2212 = vst [vmem:[%s2211] ss:$2 sm:$0xff] %v2185
    %s2213 = scalar_lea.vmem [#allocation1], 48
    %2214 = vst [vmem:[%s2213] ss:$2 sm:$0xff] %v2186
    %s2215 = scalar_lea.vmem [#allocation1], 49
    %2216 = vst [vmem:[%s2215] ss:$2 sm:$0xff] %v2187
    %v2217 = vld.sshfl [vmem:[#allocation1] sm:$0xff pattern:$0x75316420]
    %v2218 = vld.sshfl [vmem:[#allocation1 + $0x10] sm:$0xff pattern:$0x75316420]
    %v2219 = vld.sshfl [vmem:[#allocation1 + $0x20] sm:$0xff pattern:$0x75316420]
    %v2220 = vld.sshfl [vmem:[#allocation1 + $0x30] sm:$0xff pattern:$0x75316420]
    %v2221 = vsel %vm1627, %v2217, 0
    %v2223 = vsel %vm1627, %v2218, 0
    %v2225 = vsel %vm1627, %v2219, 0
    %v2227 = vsel %vm1627, %v2220, 0
    %2229 = vmatpush.msra.mxu0 0.0
    %2230 = vmatpush.msra.mxu0 0.0
    %2231 = vmatpush.msra.mxu0 0.0
    %2232 = vmatpush.msra.mxu0 0.0
    %2233 = vmatpush.msra.mxu0 0.0
    %2234 = vmatpush.msra.mxu0 0.0
    %2235 = vmatpush.msra.mxu0 0.0
    %2236 = vmatpush.msra.mxu0 0.0
    %2237 = vmatpush.msra.mxu0 0.0
    %2238 = vmatpush.msra.mxu0 0.0
    %2239 = vmatpush.msra.mxu0 0.0
    %2240 = vmatpush.msra.mxu0 0.0
    %2241 = vmatpush.msra.mxu0 0.0
    %2242 = vmatpush.msra.mxu0 0.0
    %2243 = vmatpush.msra.mxu0 %v2189
    %2244 = vmatpush.msra.mxu0 %v2188
    %2245 = vmatmul.f32.gmra.mxu0 %v2221
    %v2246 = vpop.f32.mrf.mxu0
    %v2247 = vadd.f32 %v2192, %v2246
    %2248 = vmatmul.f32.gmra.mxu0 %v2223
    %v2249 = vpop.f32.mrf.mxu0
    %v2250 = vadd.f32 %v2192, %v2249
    %2251 = vmatmul.f32.gmra.mxu0 %v2225
    %v2252 = vpop.f32.mrf.mxu0
    %v2253 = vadd.f32 %v2192, %v2252
    %2254 = vmatmul.f32.gmra.mxu0 %v2227
    %v2255 = vpop.f32.mrf.mxu0
    %v2256 = vadd.f32 %v2192, %v2255
    %2257 = vdwg.mxu0
    %v2262 = vrot.slane %v2247, 4
    %v2263 = vrot.slane %v2250, 4
    %v2264 = vrot.slane %v2253, 4
    %v2265 = vrot.slane %v2256, 4
    %vm2270 = vcmask 27648
    %2271 = vst.msk [vmem:[%s19] sm:$0xf] %vm2270, %v2247
    %2272 = vst.msk [vmem:[%s19 + $0x4] sm:$0xf] %vm2270, %v2262
    %2273 = vst.msk [vmem:[%s19 + $0x8] sm:$0xf] %vm2270, %v2250
    %2274 = vst.msk [vmem:[%s19 + $0xc] sm:$0xf] %vm2270, %v2263
    %2275 = vst.msk [vmem:[%s19 + $0x10] sm:$0xf] %vm2270, %v2253
    %2276 = vst.msk [vmem:[%s19 + $0x14] sm:$0xf] %vm2270, %v2264
    %2277 = vst.msk [vmem:[%s19 + $0x18] sm:$0xf] %vm2270, %v2256
    %2278 = vst.msk [vmem:[%s19 + $0x1c] sm:$0xf] %vm2270, %v2265
    %v2279 = vld [vmem:[%s17] sm:$0xff]
    %v2280 = vld [vmem:[%s17 + $0x8] sm:$0xff]
    %2281 = vst.sshfl [vmem:[#allocation1] sm:$0xff pattern:$0x73625140] %v2180
    %s2282 = scalar_lea.vmem [#allocation1], 1
    %v2283 = vld [vmem:[%s2282] ss:$4 sm:$0xff]
    %2284 = vst.sshfl [vmem:[#allocation1 + $0x20] sm:$0xff pattern:$0x73625140] %v2181
    %s2285 = scalar_lea.vmem [#allocation1], 33
    %v2286 = vld [vmem:[%s2285] ss:$4 sm:$0xff]
    %2287 = vst.sshfl [vmem:[#allocation1] sm:$0xff pattern:$0x73625140] %v2182
    %v2288 = vld [vmem:[%s2282] ss:$4 sm:$0xff]
    %2289 = vst.sshfl [vmem:[#allocation1 + $0x20] sm:$0xff pattern:$0x73625140] %v2183
    %v2290 = vld [vmem:[%s2285] ss:$4 sm:$0xff]
    %2291 = vst.sshfl [vmem:[#allocation1] sm:$0xff pattern:$0x73625140] %v2184
    %v2292 = vld [vmem:[%s2282] ss:$4 sm:$0xff]
    %2293 = vst.sshfl [vmem:[#allocation1 + $0x20] sm:$0xff pattern:$0x73625140] %v2185
    %v2294 = vld [vmem:[%s2285] ss:$4 sm:$0xff]
    %2295 = vst.sshfl [vmem:[#allocation1] sm:$0xff pattern:$0x73625140] %v2186
    %v2296 = vld [vmem:[%s2282] ss:$4 sm:$0xff]
    %2297 = vst.sshfl [vmem:[#allocation1 + $0x20] sm:$0xff pattern:$0x73625140] %v2187
    %v2298 = vld [vmem:[%s2285] ss:$4 sm:$0xff]
    %s2299 = scalar_lea.vmem %s17, 16
    %v2300 = vld [vmem:[%s2299] sm:$0xff]
    %v2301 = vld [vmem:[%s2299 + $0x8] sm:$0xff]
    %2302 = vst [vmem:[#allocation1] ss:$4 sm:$0xff] %v2283
    %s2303 = scalar_lea.vmem [#allocation1], 1
    %2304 = vst [vmem:[%s2303] ss:$4 sm:$0xff] %v2286
    %s2305 = scalar_lea.vmem [#allocation1], 2
    %2306 = vst [vmem:[%s2305] ss:$4 sm:$0xff] %v2288
    %s2307 = scalar_lea.vmem [#allocation1], 3
    %2308 = vst [vmem:[%s2307] ss:$4 sm:$0xff] %v2290
    %s2309 = scalar_lea.vmem [#allocation1], 32
    %2310 = vst [vmem:[%s2309] ss:$4 sm:$0xff] %v2292
    %s2311 = scalar_lea.vmem [#allocation1], 33
    %2312 = vst [vmem:[%s2311] ss:$4 sm:$0xff] %v2294
    %s2313 = scalar_lea.vmem [#allocation1], 34
    %2314 = vst [vmem:[%s2313] ss:$4 sm:$0xff] %v2296
    %s2315 = scalar_lea.vmem [#allocation1], 35
    %2316 = vst [vmem:[%s2315] ss:$4 sm:$0xff] %v2298
    %v2317 = vld.sshfl [vmem:[#allocation1] sm:$0xff pattern:$0x73625140]
    %v2318 = vld.sshfl [vmem:[#allocation1 + $0x20] sm:$0xff pattern:$0x73625140]
    %v2319 = vsel %vm1627, %v2317, 0
    %v2321 = vsel %vm1627, %v2318, 0
    %2323 = vmatpush.msra.mxu0 0.0
    %2324 = vmatpush.msra.mxu0 0.0
    %2325 = vmatpush.msra.mxu0 0.0
    %2326 = vmatpush.msra.mxu0 0.0
    %2327 = vmatpush.msra.mxu0 0.0
    %2328 = vmatpush.msra.mxu0 0.0
    %2329 = vmatpush.msra.mxu0 0.0
    %2330 = vmatpush.msra.mxu0 0.0
    %2331 = vmatpush.msra.mxu0 0.0
    %2332 = vmatpush.msra.mxu0 0.0
    %2333 = vmatpush.msra.mxu0 0.0
    %2334 = vmatpush.msra.mxu0 0.0
    %2335 = vmatpush.msra.mxu0 0.0
    %2336 = vmatpush.msra.mxu0 0.0
    %2337 = vmatpush.msra.mxu0 %v2301
    %2338 = vmatpush.msra.mxu0 %v2300
    %2339 = vmatmul.f32.gmra.mxu0 %v2319
    %v2340 = vpop.f32.mrf.mxu0
    %v2341 = vadd.f32 0.0, %v2340
    %2342 = vmatmul.f32.gmra.mxu0 %v2321
    %v2343 = vpop.f32.mrf.mxu0
    %v2344 = vadd.f32 0.0, %v2343
    %2345 = vdwg.mxu0
    %2346 = vst [vmem:[#allocation1] ss:$4 sm:$0xff] %v2180
    %s2347 = scalar_lea.vmem [#allocation1], 1
    %2348 = vst [vmem:[%s2347] ss:$4 sm:$0xff] %v2181
    %s2349 = scalar_lea.vmem [#allocation1], 2
    %2350 = vst [vmem:[%s2349] ss:$4 sm:$0xff] %v2182
    %s2351 = scalar_lea.vmem [#allocation1], 3
    %2352 = vst [vmem:[%s2351] ss:$4 sm:$0xff] %v2183
    %s2353 = scalar_lea.vmem [#allocation1], 32
    %2354 = vst [vmem:[%s2353] ss:$4 sm:$0xff] %v2184
    %s2355 = scalar_lea.vmem [#allocation1], 33
    %2356 = vst [vmem:[%s2355] ss:$4 sm:$0xff] %v2185
    %s2357 = scalar_lea.vmem [#allocation1], 34
    %2358 = vst [vmem:[%s2357] ss:$4 sm:$0xff] %v2186
    %s2359 = scalar_lea.vmem [#allocation1], 35
    %2360 = vst [vmem:[%s2359] ss:$4 sm:$0xff] %v2187
    %v2361 = vld.sshfl [vmem:[#allocation1] sm:$0xff pattern:$0x73625140]
    %v2362 = vld.sshfl [vmem:[#allocation1 + $0x20] sm:$0xff pattern:$0x73625140]
    %v2363 = vsel %vm1627, %v2361, 0
    %v2365 = vsel %vm1627, %v2362, 0
    %2367 = vmatpush.msra.mxu0 0.0
    %2368 = vmatpush.msra.mxu0 0.0
    %2369 = vmatpush.msra.mxu0 0.0
    %2370 = vmatpush.msra.mxu0 0.0
    %2371 = vmatpush.msra.mxu0 0.0
    %2372 = vmatpush.msra.mxu0 0.0
    %2373 = vmatpush.msra.mxu0 0.0
    %2374 = vmatpush.msra.mxu0 0.0
    %2375 = vmatpush.msra.mxu0 0.0
    %2376 = vmatpush.msra.mxu0 0.0
    %2377 = vmatpush.msra.mxu0 0.0
    %2378 = vmatpush.msra.mxu0 0.0
    %2379 = vmatpush.msra.mxu0 0.0
    %2380 = vmatpush.msra.mxu0 0.0
    %2381 = vmatpush.msra.mxu0 %v2280
    %2382 = vmatpush.msra.mxu0 %v2279
    %2383 = vmatmul.f32.gmra.mxu0 %v2363
    %v2384 = vpop.f32.mrf.mxu0
    %v2385 = vadd.f32 %v2341, %v2384
    %2386 = vmatmul.f32.gmra.mxu0 %v2365
    %v2387 = vpop.f32.mrf.mxu0
    %v2388 = vadd.f32 %v2344, %v2387
    %2389 = vdwg.mxu0
    %v2390 = vld [vmem:[%s18] sm:$0x1]
    %v2392 = vperm.slane %v2390, 0
    %v2394 = vadd.f32 %v2385, %v2392
    %v2395 = vadd.f32 %v2388, %v2392
    %v2398 = vrot.slane %v2394, 2
    %v2399 = vrot.slane %v2394, 4
    %v2400 = vrot.slane %v2394, 6
    %v2401 = vrot.slane %v2395, 2
    %v2402 = vrot.slane %v2395, 4
    %v2403 = vrot.slane %v2395, 6
    %vm2410 = vcmask 25600
    %2411 = vst.msk [vmem:[%s23] sm:$0x3] %vm2410, %v2394
    %2412 = vst.msk [vmem:[%s23 + $0x2] sm:$0x3] %vm2410, %v2398
    %2413 = vst.msk [vmem:[%s23 + $0x4] sm:$0x3] %vm2410, %v2399
    %2414 = vst.msk [vmem:[%s23 + $0x6] sm:$0x3] %vm2410, %v2400
    %2415 = vst.msk [vmem:[%s23 + $0x8] sm:$0x3] %vm2410, %v2395
    %2416 = vst.msk [vmem:[%s23 + $0xa] sm:$0x3] %vm2410, %v2401
    %2417 = vst.msk [vmem:[%s23 + $0xc] sm:$0x3] %vm2410, %v2402
    %2418 = vst.msk [vmem:[%s23 + $0xe] sm:$0x3] %vm2410, %v2403
    // Predicated region
    $region78: #{tpu_custom_call.1} parent=1 // pred_check
      _
    $region79: #{tpu_custom_call.1} parent=1 // pred_check_branch
      %2420 = sbr.rel (0) target = $region81
    $region80: #{tpu_custom_call.1} parent=1 // pred_region
      _
    $region81: #{tpu_custom_call.1} parent=1 // pred_fallthru
      _
    // Predicated region
    $region82: #{tpu_custom_call.1} parent=1 // pred_check
      _
    $region83: #{tpu_custom_call.1} parent=1 // pred_check_branch
      %2422 = sbr.rel (0) target = $region85
    $region84: #{tpu_custom_call.1} parent=1 // pred_region
      %2424 = vsyncadd [#allocation3], 0
      %s2425 = sshll.u32 [#allocation2], 4
      %s2426 = int_to_ptr.vmem [resolvable:$true] %s2425
      %s2427 = sshll.u32 %s20, 4
      %s2428 = int_to_ptr.hbm [resolvable:$true] %s2427
      %2433 = dma.vmem_to_hbm [thread:$0]  %s2426, 512, %s2428, [#allocation3], 64, 64, 4
    $region85: #{tpu_custom_call.1} parent=1 // pred_fallthru
      _
    // Predicated region
    $region86: #{tpu_custom_call.1} parent=1 // pred_check
      _
    $region87: #{tpu_custom_call.1} parent=1 // pred_check_branch
      %2435 = sbr.rel (0) target = $region89
    $region88: #{tpu_custom_call.1} parent=1 // pred_region
      %2437 = vsyncadd [#allocation5], 0
      %s2439 = sshll.u32 [#allocation4], 4
      %s2440 = int_to_ptr.vmem [resolvable:$true] %s2439
      %s2441 = sshll.u32 %s21, 4
      %s2442 = int_to_ptr.hbm [resolvable:$true] %s2441
      %2444 = dma.vmem_to_hbm [thread:$0]  %s2440, 64, %s2442, [#allocation5]
    $region89: #{tpu_custom_call.1} parent=1 // pred_fallthru
      _
    // Predicated region
    $region90: #{tpu_custom_call.1} parent=1 // pred_check
      _
    $region91: #{tpu_custom_call.1} parent=1 // pred_check_branch
      %2446 = sbr.rel (0) target = $region93
    $region92: #{tpu_custom_call.1} parent=1 // pred_region
      %2448 = vsyncadd [#allocation5], 0
      %s2450 = sshll.u32 [#allocation6], 4
      %s2451 = int_to_ptr.vmem [resolvable:$true] %s2450
      %s2452 = sshll.u32 %s22, 4
      %s2453 = int_to_ptr.hbm [resolvable:$true] %s2452
      %2455 = dma.vmem_to_hbm [thread:$0]  %s2451, 64, %s2453, [#allocation5]
    $region93: #{tpu_custom_call.1} parent=1 // pred_fallthru
      _
    // Predicated region
    $region94: #{tpu_custom_call.1} parent=1 // pred_check
      _
    $region95: #{tpu_custom_call.1} parent=1 // pred_check_branch
      %2457 = sbr.rel (0) target = $region97
    $region96: #{tpu_custom_call.1} parent=1 // pred_region
      _
    $region97: #{tpu_custom_call.1} parent=1 // pred_fallthru
      _
    // Predicated region
    $region98: #{tpu_custom_call.1} parent=1 // pred_check
      _
    $region99: #{tpu_custom_call.1} parent=1 // pred_check_branch
      %2459 = sbr.rel (0) target = $region101
    $region100: #{tpu_custom_call.1} parent=1 // pred_region
      _
    $region101: #{tpu_custom_call.1} parent=1 // pred_fallthru
      _
    // Predicated region
    $region102: #{tpu_custom_call.1} parent=1 // pred_check
      _
    $region103: #{tpu_custom_call.1} parent=1 // pred_check_branch
      %2461 = sbr.rel (0) target = $region105
    $region104: #{tpu_custom_call.1} parent=1 // pred_region
      %2463 = dma.done [#allocation3], 512
    $region105: #{tpu_custom_call.1} parent=1 // pred_fallthru
      _
    // Predicated region
    $region106: #{tpu_custom_call.1} parent=1 // pred_check
      _
    $region107: #{tpu_custom_call.1} parent=1 // pred_check_branch
      %2465 = sbr.rel (0) target = $region109
    $region108: #{tpu_custom_call.1} parent=1 // pred_region
      %2467 = dma.done [#allocation5], 64
    $region109: #{tpu_custom_call.1} parent=1 // pred_fallthru
      _
    // Predicated region
    $region110: #{tpu_custom_call.1} parent=1 // pred_check
      _
    $region111: #{tpu_custom_call.1} parent=1 // pred_check_branch
      %2469 = sbr.rel (0) target = $region113
    $region112: #{tpu_custom_call.1} parent=1 // pred_region
      %2471 = dma.done [#allocation5], 64
    $region113: #{tpu_custom_call.1} parent=1 // pred_fallthru
      _
    // Predicated region
    $region114: #{tpu_custom_call.1} parent=1 // pred_check
      _
    $region115: #{tpu_custom_call.1} parent=1 // pred_check_branch
      %2473 = sbr.rel (0) target = $region117
    $region116: #{tpu_custom_call.1} parent=1 // pred_region
      _
    $region117: #{tpu_custom_call.1} parent=1 // pred_fallthru
      _
    %2474 = vsyncpa [#allocation3], 1
    %2475 = vsyncpa [#allocation5], 1

</llo_original>
